<compile_context>
chip_gen: v7x
topology: tpu7x:2x2x1
jax: 0.10.0
libtpu: 0.0.40
codegen_flags: <defaults>
</compile_context>

<pallas_src>
import functools

import jax
import jax.numpy as jnp
from jax.experimental import pallas as pl
from jax.experimental.pallas import tpu as pltpu


SUBLANE = 16                       # bf16 sublane packing for the K dimension
_TM_CAP = 2048                     # max rows per grid block
_TILE_TARGET_BYTES = 2 << 20       # ~2 MiB of (A row + out row) bytes per block
_VMEM_LIMIT = 32 * 1024 * 1024     # explicit scoped-VMEM budget (v7x-safe)


def _round_up(x, m):
    return (x + m - 1) // m * m


# ----------------------------------------------------------------------------
# Pallas kernels: fused matmul + (folded-BN) bias + partial ReLU + residual
# ----------------------------------------------------------------------------
def _apply_relu(z, relu_cols):
    """ReLU on the first `relu_cols` output columns (static), identity on the
    rest.  Used by the fused c1+downsample matmul where only the c1 half is
    activated."""
    if relu_cols is None or relu_cols <= 0:
        return z
    if relu_cols >= z.shape[1]:
        return jnp.maximum(z, 0.0)
    col = jax.lax.broadcasted_iota(jnp.int32, z.shape, 1)
    return jnp.where(col < relu_cols, jnp.maximum(z, 0.0), z)


def _fused_mm_kernel(a_ref, w_ref, b_ref, o_ref, *, relu_cols):
    z = jnp.dot(a_ref[...], w_ref[...], preferred_element_type=jnp.float32)
    z = z + b_ref[...]
    z = _apply_relu(z, relu_cols)
    o_ref[...] = z.astype(o_ref.dtype)


def _fused_mm_res_kernel(a_ref, w_ref, b_ref, r_ref, o_ref, *, relu_cols):
    z = jnp.dot(a_ref[...], w_ref[...], preferred_element_type=jnp.float32)
    z = z + b_ref[...]
    z = _apply_relu(z, relu_cols)
    # ReLU happens BEFORE the residual add: the torch Block is net(x)+identity
    # where net(...) ends in ReLU.  This matches the module exactly.
    z = z + r_ref[...].astype(jnp.float32)
    o_ref[...] = z.astype(o_ref.dtype)


def _choose_m_tiling(M, K, N):
    """(padded M, tile M).  Single block whenever M fits one K/N-aware tile
    (~2 MiB of bf16 A+out rows, cap 2048 rows); otherwise split into tiles that
    keep the pipeline near the HBM roofline.  No forced 2-way split for tiny M
    (pure per-step overhead on single-TC v5e/v6e)."""
    Mp = _round_up(M, 8)
    row_bytes = 2 * (K + N)                      # bf16 A row + bf16 out row
    TM = max(SUBLANE, min(_TM_CAP, _TILE_TARGET_BYTES // row_bytes))
    TM = _round_up(TM, SUBLANE)
    if Mp <= TM:
        return Mp, Mp                            # single grid block
    return _round_up(Mp, TM), TM


def fused_matmul(a, w, bias, *, relu_cols, residual=None):
    """out = [relu_cols-masked relu](a @ w + bias) [+ residual], in Pallas.

    a: (M, K) activations (cast to bf16 for the MXU)
    w: (K, N) weights with the BN scale already folded in (cast to bf16)
    bias: (N,) f32 (conv bias + BN shift folded)
    residual: optional (M, N) added after the (partial) ReLU.
    Output is stored at its TRUE width N (no 128-lane padding / slice-back).
    """
    M, K = a.shape
    N = w.shape[1]
    Mp, TM = _choose_m_tiling(M, K, N)

    a_p = a.astype(jnp.bfloat16)
    if Mp != M:
        a_p = jnp.pad(a_p, ((0, Mp - M), (0, 0)))
    w_p = w.astype(jnp.bfloat16)
    b_p = bias.astype(jnp.float32).reshape(1, N)

    grid = (Mp // TM,)
    a_spec = pl.BlockSpec((TM, K), lambda i: (i, 0))
    w_spec = pl.BlockSpec((K, N), lambda i: (0, 0))     # resident across grid
    b_spec = pl.BlockSpec((1, N), lambda i: (0, 0))     # resident across grid
    o_spec = pl.BlockSpec((TM, N), lambda i: (i, 0))
    out_shape = jax.ShapeDtypeStruct((Mp, N), jnp.bfloat16)
    cparams = pltpu.CompilerParams(
        dimension_semantics=("parallel",),
        vmem_limit_bytes=_VMEM_LIMIT)

    if residual is None:
        out = pl.pallas_call(
            functools.partial(_fused_mm_kernel, relu_cols=relu_cols),
            out_shape=out_shape,
            grid=grid,
            in_specs=[a_spec, w_spec, b_spec],
            out_specs=o_spec,
            compiler_params=cparams,
        )(a_p, w_p, b_p)
    else:
        r_p = residual.astype(jnp.bfloat16)
        if Mp != M:
            r_p = jnp.pad(r_p, ((0, Mp - M), (0, 0)))
        out = pl.pallas_call(
            functools.partial(_fused_mm_res_kernel, relu_cols=relu_cols),
            out_shape=out_shape,
            grid=grid,
            in_specs=[a_spec, w_spec, b_spec, o_spec],
            out_specs=o_spec,
            input_output_aliases={3: 0},    # reuse the residual buffer as out
            compiler_params=cparams,
        )(a_p, w_p, b_p, r_p)
    return out if Mp == M else out[:M]


# ----------------------------------------------------------------------------
# JAX glue: im2col, BN folding, conv wrappers (layout plumbing only)
# ----------------------------------------------------------------------------
def _im2col(x, kh, kw, stride, pad):
    """x: (B, H, W, C) NHWC.  pad = ((top, bot), (left, right)).
    Returns (B*Ho*Wo, Kp) with Kp = kh*kw*C rounded up to a multiple of 16
    (bf16 sublane alignment of the resident weight tile)."""
    x = jnp.pad(x, ((0, 0), pad[0], pad[1], (0, 0)))
    B, Hp, Wp, C = x.shape
    Ho = (Hp - kh) // stride + 1
    Wo = (Wp - kw) // stride + 1
    patches = []
    for di in range(kh):
        for dj in range(kw):
            patches.append(
                x[:, di:di + (Ho - 1) * stride + 1:stride,
                  dj:dj + (Wo - 1) * stride + 1:stride, :])
    K = kh * kw * C
    kpad = _round_up(K, SUBLANE) - K
    if kpad:
        patches.append(jnp.zeros((B, Ho, Wo, kpad), x.dtype))
    cols = jnp.concatenate(patches, axis=-1)             # (B, Ho, Wo, Kp)
    return cols.reshape(B * Ho * Wo, cols.shape[-1]), (B, Ho, Wo)


def _fold_bn_scale_bias(cout, cbias, bn):
    """Fold BN(eval) + conv bias into per-output-channel (scale, shift)."""
    if bn is not None:
        gamma, beta, mean, var = bn
        s = gamma * jax.lax.rsqrt(var + 1e-5)
        b = beta - mean * s
    else:
        s = jnp.ones((cout,), jnp.float32)
        b = jnp.zeros((cout,), jnp.float32)
    if cbias is not None:
        b = b + cbias * s
    return s, b


def conv_bn_act(x, w, cbias, bn, *, stride, pad, relu, residual=None):
    """Conv2d (PyTorch weights (Cout, Cin, kh, kw)) + BN(eval) + opt ReLU +
    opt residual add.  x is NHWC (bf16)."""
    cout, cin, kh, kw = w.shape
    s, b = _fold_bn_scale_bias(cout, cbias, bn)
    wmat = jnp.transpose(w, (2, 3, 1, 0)).reshape(kh * kw * cin, cout)
    wmat = wmat * s[None, :]

    if kh == 1 and kw == 1 and pad == ((0, 0), (0, 0)):
        # 1x1 conv: no im2col, just a (strided) channel matmul.
        xs = x[:, ::stride, ::stride, :]
        B, Ho, Wo, _ = xs.shape
        cols = xs.reshape(B * Ho * Wo, cin)
        kpad = _round_up(cin, SUBLANE) - cin
        if kpad:
            cols = jnp.pad(cols, ((0, 0), (0, kpad)))
    else:
        cols, (B, Ho, Wo) = _im2col(x, kh, kw, stride, pad)
        kpad = cols.shape[1] - kh * kw * cin
    if kpad:
        wmat = jnp.pad(wmat, ((0, kpad), (0, 0)))

    res = None if residual is None else residual.reshape(B * Ho * Wo, cout)
    out = fused_matmul(cols, wmat, b,
                       relu_cols=(cout if relu else None), residual=res)
    return out.reshape(B, Ho, Wo, cout)


def block_c1_down_fused(x, c1_w, bn1, down_w, down_b, down_bn):
    """One Pallas matmul producing
        [ relu(bn1(conv3x3_s2(x)))  |  bn_d(conv1x1_s2(x) + b_d) ].
    The center tap (1,1) of the stride-2/pad-1 3x3 im2col equals the 1x1
    stride-2 downsample's input, so the (BN-folded) 1x1 weights are appended
    as extra output columns placed at that tap's K rows.  ReLU is applied only
    to the first cout columns.  Returns (z, identity), both (B, Ho, Wo, cout).
    """
    cout, cin, kh, kw = c1_w.shape            # 3x3
    s1, b1 = _fold_bn_scale_bias(cout, None, bn1)
    sd, bd = _fold_bn_scale_bias(cout, down_b, down_bn)

    w1 = jnp.transpose(c1_w, (2, 3, 1, 0)).reshape(kh * kw * cin, cout)
    w1 = w1 * s1[None, :]
    wd_small = jnp.transpose(down_w, (2, 3, 1, 0)).reshape(cin, cout)
    wd_small = wd_small * sd[None, :]
    center = (kh // 2) * kw + (kw // 2)       # tap (1,1) -> K rows [4*cin, 5*cin)
    wd = jnp.zeros((kh * kw * cin, cout), jnp.float32)
    wd = wd.at[center * cin:(center + 1) * cin, :].set(wd_small)
    wmat = jnp.concatenate([w1, wd], axis=1)          # (9*cin, 2*cout)
    bias = jnp.concatenate([b1, bd])

    cols, (B, Ho, Wo) = _im2col(x, kh, kw, 2, ((1, 1), (1, 1)))
    kpad = cols.shape[1] - kh * kw * cin
    if kpad:
        wmat = jnp.pad(wmat, ((0, kpad), (0, 0)))

    out = fused_matmul(cols, wmat, bias, relu_cols=cout)   # (M, 2*cout)
    out = out.reshape(B, Ho, Wo, 2 * cout)
    return out[..., :cout], out[..., cout:]


# --- ConvTranspose2d as a single matmul via the sub-pixel decomposition -----
def _phase_offsets(k, p, r):
    """Input-pixel offsets e contributing to output phase r of a stride-2
    transposed conv (output row 2a+r reads input rows a+e)."""
    q = k - 1 - p
    return [(r + di - q) // 2 for di in range(k) if (r + di - q) % 2 == 0]


def _convT_subpixel_weights(w_t, cbias, bn, padding):
    """Build the combined (win*win*Cin, 4*Cout) weight matrix and (4*Cout,)
    bias for a stride-2 ConvTranspose2d + optional BN, where the 4 output
    phases (ra, rb) in {0,1}^2 are extra output-column blocks over a common
    stride-1 im2col window of size win x win."""
    cin, cout, kh, kw = w_t.shape
    assert kh == kw, "square kernels only (true for this model)"
    k, p = kh, padding
    q = k - 1 - p
    # flipped + channel-swapped kernel, indexed [di, dj, cin, cout]
    wf = jnp.transpose(jnp.flip(w_t, axis=(2, 3)), (2, 3, 0, 1))

    offs = [_phase_offsets(k, p, r) for r in (0, 1)]
    e_lo = min(min(o) for o in offs)
    e_hi = max(max(o) for o in offs)
    win = e_hi - e_lo + 1                     # 4 for k=7/p=3, 2 for k=3/p=1

    s, b = _fold_bn_scale_bias(cout, cbias, bn)
    wbig = jnp.zeros((win, win, cin, 4, cout), jnp.float32)
    for ra in (0, 1):
        d0r = (q - ra) % 2
        sub_r = wf[d0r::2]                    # taps di = d0r, d0r+2, ...
        u0 = (ra + d0r - q) // 2 - e_lo
        for rb in (0, 1):
            d0c = (q - rb) % 2
            sub = sub_r[:, d0c::2] * s[None, None, None, :]
            v0 = (rb + d0c - q) // 2 - e_lo
            wbig = wbig.at[u0:u0 + sub.shape[0],
                           v0:v0 + sub.shape[1], :, ra * 2 + rb, :].set(sub)

    wmat = wbig.reshape(win * win * cin, 4 * cout)
    bias4 = jnp.tile(b, 4)
    pad = ((-e_lo, e_hi), (-e_lo, e_hi))
    return wmat, bias4, win, pad, cin, cout


def conv_transpose_bn(x, w_t, cbias, bn, *, stride, padding, out_pad):
    """ConvTranspose2d (PyTorch weights (Cin, Cout, kh, kw), stride 2,
    output_padding 1) + optional BN, as ONE Pallas matmul via the sub-pixel
    decomposition + pixel shuffle.  ~12.25x (7x7) / 9x (3x3) fewer MACs and
    im2col bytes than the dilate+flip formulation, and no zero scatter."""
    assert stride == 2 and out_pad == 1, "only the configuration used by FCN"
    wmat, bias4, win, pad, cin, cout = _convT_subpixel_weights(
        w_t, cbias, bn, padding)

    cols, (B, Hi, Wi) = _im2col(x, win, win, 1, pad)
    kpad = cols.shape[1] - win * win * cin
    if kpad:
        wmat = jnp.pad(wmat, ((0, kpad), (0, 0)))

    out = fused_matmul(cols, wmat, bias4, relu_cols=None)   # (M, 4*cout)
    out = out.reshape(B, Hi, Wi, 2, 2, cout)
    out = jnp.transpose(out, (0, 1, 3, 2, 4, 5))             # pixel shuffle
    return out.reshape(B, 2 * Hi, 2 * Wi, cout)


# ----------------------------------------------------------------------------
# FCN forward (mirrors the PyTorch module's Sequential exactly)
# ----------------------------------------------------------------------------
def fcn_forward(x_nchw, p):
    H, W = x_nchw.shape[2], x_nchw.shape[3]
    # -> NHWC, bf16 activations throughout the network
    h = jnp.transpose(x_nchw, (0, 2, 3, 1)).astype(jnp.bfloat16)

    # stem: Conv(3->64, k7, s2, p3, no bias) + BN + ReLU
    h = conv_bn_act(h, p['conv0_w'], None, p['bn0'],
                    stride=2, pad=((3, 3), (3, 3)), relu=True)

    # residual Blocks: out = relu(bn2(conv2(relu(bn1(conv1(x)))))) + down(x)
    # (conv1 and the 1x1 downsample share ONE fused Pallas matmul)
    for blk in p['blocks']:
        z, identity = block_c1_down_fused(h, blk['c1_w'], blk['bn1'],
                                          blk['down_w'], blk['down_b'],
                                          blk['down_bn'])
        h = conv_bn_act(z, blk['c2_w'], None, blk['bn2'],
                        stride=1, pad=((1, 1), (1, 1)), relu=True,
                        residual=identity)

    # 1x1 conv head (with bias) + BN
    h = conv_bn_act(h, p['head_w'], p['head_b'], p['head_bn'],
                    stride=1, pad=((0, 0), (0, 0)), relu=False)

    # up-convolutions (sub-pixel decomposition, one matmul each)
    h = conv_transpose_bn(h, p['up1_w'], p['up1_b'], p['up1_bn'],
                          stride=2, padding=3, out_pad=1)
    h = conv_transpose_bn(h, p['up2_w'], p['up2_b'], p['up2_bn'],
                          stride=2, padding=1, out_pad=1)
    h = conv_transpose_bn(h, p['up3_w'], p['up3_b'], None,
                          stride=2, padding=1, out_pad=1)

    h = h[:, :H, :W, :]                                   # z = z[:, :, :H, :W]
    return jnp.transpose(h, (0, 3, 1, 2)).astype(jnp.float32)   # back to NCHW


# ----------------------------------------------------------------------------
# Deterministic parameter construction (same shapes as the torch module)
# ----------------------------------------------------------------------------
def make_params(key, layers=(64, 128), n_in=3, n_out=5):
    keys = iter(jax.random.split(key, 128))

    def nrm(shape, scale=0.1):
        return scale * jax.random.normal(next(keys), shape, dtype=jnp.float32)

    def bn(c):
        gamma = 1.0 + nrm((c,))
        beta = nrm((c,))
        mean = nrm((c,))
        var = 1.0 + 0.1 * jnp.abs(jax.random.normal(next(keys), (c,),
                                                    dtype=jnp.float32))
        return (gamma, beta, mean, var)

    p = {}
    p['conv0_w'] = nrm((layers[0], n_in, 7, 7))
    p['bn0'] = bn(layers[0])

    blocks = []
    c = layers[0]
    for l in layers:
        blocks.append(dict(
            c1_w=nrm((l, c, 3, 3)), bn1=bn(l),
            c2_w=nrm((l, l, 3, 3)), bn2=bn(l),
            down_w=nrm((l, c, 1, 1)), down_b=nrm((l,)), down_bn=bn(l),
        ))
        c = l
    p['blocks'] = blocks

    p['head_w'] = nrm((n_out, c, 1, 1))
    p['head_b'] = nrm((n_out,))
    p['head_bn'] = bn(n_out)

    # ConvTranspose2d weights are (Cin, Cout, kh, kw) in PyTorch.
    p['up1_w'] = nrm((n_out, n_out, 7, 7)); p['up1_b'] = nrm((n_out,))
    p['up1_bn'] = bn(n_out)
    p['up2_w'] = nrm((n_out, n_out, 3, 3)); p['up2_b'] = nrm((n_out,))
    p['up2_bn'] = bn(n_out)
    p['up3_w'] = nrm((n_out, n_out, 3, 3)); p['up3_b'] = nrm((n_out,))
    return p


if __name__ == "__main__":
    key = jax.random.PRNGKey(0)
    pkey, xkey = jax.random.split(key)
    params = make_params(pkey)
    x = jax.random.normal(xkey, (2, 3, 16, 16), dtype=jnp.float32)

    fwd = jax.jit(fcn_forward)
    y = fwd(x, params)
    y = jax.block_until_ready(y)
    assert y.shape == (2, 5, 16, 16), y.shape
    assert bool(jnp.all(jnp.isfinite(y)))
    print("KERNEL_OK")
</pallas_src>

<mosaic_0001>
module attributes {stable_mosaic.version = 11 : i64} {
  func.func @_fused_mm_kernel(%arg0: i32, %arg1: memref<128x160xbf16, #tpu.memory_space<vmem>>, %arg2: memref<160x64xbf16, #tpu.memory_space<vmem>>, %arg3: memref<1x64xf32, #tpu.memory_space<vmem>>, %arg4: memref<128x64xbf16, #tpu.memory_space<vmem>>) attributes {dimension_semantics = [#tpu.dimension_semantics<parallel>], iteration_bounds = array<i64: 1>, scalar_prefetch = 0 : i64, scratch_operands = 0 : i64, tpu.core_type = #tpu.core_type<tc>, window_params = [{transform_indices = @transform_0, window_bounds = array<i64: 128, 160>}, {pipeline_mode = #tpu.pipeline_mode<synchronous>, transform_indices = @transform_1, window_bounds = array<i64: 160, 64>}, {pipeline_mode = #tpu.pipeline_mode<synchronous>, transform_indices = @transform_2, window_bounds = array<i64: 1, 64>}, {transform_indices = @transform_3, window_bounds = array<i64: 128, 64>}]} {
    %c0 = arith.constant 0 : index
    %c0_0 = arith.constant 0 : index
    %0 = vector.load %arg1[%c0, %c0_0] : memref<128x160xbf16, #tpu.memory_space<vmem>>, vector<128x160xbf16>
    %c0_1 = arith.constant 0 : index
    %c0_2 = arith.constant 0 : index
    %1 = vector.load %arg2[%c0_1, %c0_2] : memref<160x64xbf16, #tpu.memory_space<vmem>>, vector<160x64xbf16>
    %cst = arith.constant dense<0.000000e+00> : vector<128x64xf32>
    %2 = tpu.matmul %0, %1, %cst {dimension_numbers = #tpu.dot_dimension_numbers<[1], [0], [0], [1], [0, 0, 1, 1], [], []>} : vector<128x160xbf16>, vector<160x64xbf16>, vector<128x64xf32> -> vector<128x64xf32>
    %c0_3 = arith.constant 0 : index
    %c0_4 = arith.constant 0 : index
    %3 = vector.load %arg3[%c0_3, %c0_4] : memref<1x64xf32, #tpu.memory_space<vmem>>, vector<1x64xf32>
    %4 = vector.broadcast %3 : vector<1x64xf32> to vector<128x64xf32>
    %5 = arith.addf %2, %4 : vector<128x64xf32>
    %cst_5 = arith.constant 0.000000e+00 : f32
    %6 = vector.broadcast %cst_5 : f32 to vector<128x64xf32>
    %7 = arith.maximumf %5, %6 : vector<128x64xf32>
    %8 = arith.truncf %7 : vector<128x64xf32> to vector<128x64xbf16>
    %c0_6 = arith.constant 0 : index
    %c0_7 = arith.constant 0 : index
    %9 = vector.load %arg4[%c0_6, %c0_7] : memref<128x64xbf16, #tpu.memory_space<vmem>>, vector<128x64xbf16>
    tpu.vector_store %arg4[%c0_6, %c0_7], %8 {strides = array<i32>} : memref<128x64xbf16, #tpu.memory_space<vmem>>, vector<128x64xbf16>,
    return
  }
  func.func @transform_0(%arg0: i32) -> (i32, i32) {
    %c0_i32 = arith.constant 0 : i32
    %c0_i32_0 = arith.constant 0 : i32
    return %arg0, %c0_i32 : i32, i32
  }
  func.func @transform_1(%arg0: i32) -> (i32, i32) {
    %c0_i32 = arith.constant 0 : i32
    %c0_i32_0 = arith.constant 0 : i32
    %c0_i32_1 = arith.constant 0 : i32
    return %c0_i32, %c0_i32_0 : i32, i32
  }
  func.func @transform_2(%arg0: i32) -> (i32, i32) {
    %c0_i32 = arith.constant 0 : i32
    %c0_i32_0 = arith.constant 0 : i32
    %c0_i32_1 = arith.constant 0 : i32
    return %c0_i32, %c0_i32_0 : i32, i32
  }
  func.func @transform_3(%arg0: i32) -> (i32, i32) {
    %c0_i32 = arith.constant 0 : i32
    %c0_i32_0 = arith.constant 0 : i32
    return %arg0, %c0_i32 : i32, i32
  }
}

module attributes {stable_mosaic.version = 11 : i64} {
  func.func @_fused_mm_kernel(%arg0: i32, %arg1: memref<32x576xbf16, #tpu.memory_space<vmem>>, %arg2: memref<576x128xbf16, #tpu.memory_space<vmem>>, %arg3: memref<1x128xf32, #tpu.memory_space<vmem>>, %arg4: memref<32x128xbf16, #tpu.memory_space<vmem>>) attributes {dimension_semantics = [#tpu.dimension_semantics<parallel>], iteration_bounds = array<i64: 1>, scalar_prefetch = 0 : i64, scratch_operands = 0 : i64, tpu.core_type = #tpu.core_type<tc>, window_params = [{transform_indices = @transform_0, window_bounds = array<i64: 32, 576>}, {pipeline_mode = #tpu.pipeline_mode<synchronous>, transform_indices = @transform_1, window_bounds = array<i64: 576, 128>}, {pipeline_mode = #tpu.pipeline_mode<synchronous>, transform_indices = @transform_2, window_bounds = array<i64: 1, 128>}, {transform_indices = @transform_3, window_bounds = array<i64: 32, 128>}]} {
    %c0 = arith.constant 0 : index
    %c0_0 = arith.constant 0 : index
    %0 = vector.load %arg1[%c0, %c0_0] : memref<32x576xbf16, #tpu.memory_space<vmem>>, vector<32x576xbf16>
    %c0_1 = arith.constant 0 : index
    %c0_2 = arith.constant 0 : index
    %1 = vector.load %arg2[%c0_1, %c0_2] : memref<576x128xbf16, #tpu.memory_space<vmem>>, vector<576x128xbf16>
    %cst = arith.constant dense<0.000000e+00> : vector<32x128xf32>
    %2 = tpu.matmul %0, %1, %cst {dimension_numbers = #tpu.dot_dimension_numbers<[1], [0], [0], [1], [0, 0, 1, 1], [], []>} : vector<32x576xbf16>, vector<576x128xbf16>, vector<32x128xf32> -> vector<32x128xf32>
    %c0_3 = arith.constant 0 : index
    %c0_4 = arith.constant 0 : index
    %3 = vector.load %arg3[%c0_3, %c0_4] : memref<1x128xf32, #tpu.memory_space<vmem>>, vector<1x128xf32>
    %4 = vector.broadcast %3 : vector<1x128xf32> to vector<32x128xf32>
    %5 = arith.addf %2, %4 : vector<32x128xf32>
    %6 = tpu.iota {dimensions = array<i32: 1>} : vector<32x128xi32>
    %c64_i32 = arith.constant 64 : i32
    %7 = vector.broadcast %c64_i32 : i32 to vector<32x128xi32>
    %8 = arith.cmpi slt, %6, %7 : vector<32x128xi32>
    %cst_5 = arith.constant 0.000000e+00 : f32
    %9 = vector.broadcast %cst_5 : f32 to vector<32x128xf32>
    %10 = arith.maximumf %5, %9 : vector<32x128xf32>
    %11 = arith.select %8, %10, %5 : vector<32x128xi1>, vector<32x128xf32>
    %12 = arith.truncf %11 : vector<32x128xf32> to vector<32x128xbf16>
    %c0_6 = arith.constant 0 : index
    %c0_7 = arith.constant 0 : index
    %13 = vector.load %arg4[%c0_6, %c0_7] : memref<32x128xbf16, #tpu.memory_space<vmem>>, vector<32x128xbf16>
    tpu.vector_store %arg4[%c0_6, %c0_7], %12 {strides = array<i32>} : memref<32x128xbf16, #tpu.memory_space<vmem>>, vector<32x128xbf16>,
    return
  }
  func.func @transform_0(%arg0: i32) -> (i32, i32) {
    %c0_i32 = arith.constant 0 : i32
    %c0_i32_0 = arith.constant 0 : i32
    return %arg0, %c0_i32 : i32, i32
  }
  func.func @transform_1(%arg0: i32) -> (i32, i32) {
    %c0_i32 = arith.constant 0 : i32
    %c0_i32_0 = arith.constant 0 : i32
    %c0_i32_1 = arith.constant 0 : i32
    return %c0_i32, %c0_i32_0 : i32, i32
  }
  func.func @transform_2(%arg0: i32) -> (i32, i32) {
    %c0_i32 = arith.constant 0 : i32
    %c0_i32_0 = arith.constant 0 : i32
    %c0_i32_1 = arith.constant 0 : i32
    return %c0_i32, %c0_i32_0 : i32, i32
  }
  func.func @transform_3(%arg0: i32) -> (i32, i32) {
    %c0_i32 = arith.constant 0 : i32
    %c0_i32_0 = arith.constant 0 : i32
    return %arg0, %c0_i32 : i32, i32
  }
}

module attributes {stable_mosaic.version = 11 : i64} {
  func.func @_fused_mm_res_kernel(%arg0: i32, %arg1: memref<32x576xbf16, #tpu.memory_space<vmem>>, %arg2: memref<576x64xbf16, #tpu.memory_space<vmem>>, %arg3: memref<1x64xf32, #tpu.memory_space<vmem>>, %arg4: memref<32x64xbf16, #tpu.memory_space<vmem>>, %arg5: memref<32x64xbf16, #tpu.memory_space<vmem>>) attributes {dimension_semantics = [#tpu.dimension_semantics<parallel>], iteration_bounds = array<i64: 1>, scalar_prefetch = 0 : i64, scratch_operands = 0 : i64, tpu.core_type = #tpu.core_type<tc>, window_params = [{transform_indices = @transform_0, window_bounds = array<i64: 32, 576>}, {pipeline_mode = #tpu.pipeline_mode<synchronous>, transform_indices = @transform_1, window_bounds = array<i64: 576, 64>}, {pipeline_mode = #tpu.pipeline_mode<synchronous>, transform_indices = @transform_2, window_bounds = array<i64: 1, 64>}, {transform_indices = @transform_3, window_bounds = array<i64: 32, 64>}, {transform_indices = @transform_4, window_bounds = array<i64: 32, 64>}]} {
    %c0 = arith.constant 0 : index
    %c0_0 = arith.constant 0 : index
    %0 = vector.load %arg1[%c0, %c0_0] : memref<32x576xbf16, #tpu.memory_space<vmem>>, vector<32x576xbf16>
    %c0_1 = arith.constant 0 : index
    %c0_2 = arith.constant 0 : index
    %1 = vector.load %arg2[%c0_1, %c0_2] : memref<576x64xbf16, #tpu.memory_space<vmem>>, vector<576x64xbf16>
    %cst = arith.constant dense<0.000000e+00> : vector<32x64xf32>
    %2 = tpu.matmul %0, %1, %cst {dimension_numbers = #tpu.dot_dimension_numbers<[1], [0], [0], [1], [0, 0, 1, 1], [], []>} : vector<32x576xbf16>, vector<576x64xbf16>, vector<32x64xf32> -> vector<32x64xf32>
    %c0_3 = arith.constant 0 : index
    %c0_4 = arith.constant 0 : index
    %3 = vector.load %arg3[%c0_3, %c0_4] : memref<1x64xf32, #tpu.memory_space<vmem>>, vector<1x64xf32>
    %4 = vector.broadcast %3 : vector<1x64xf32> to vector<32x64xf32>
    %5 = arith.addf %2, %4 : vector<32x64xf32>
    %cst_5 = arith.constant 0.000000e+00 : f32
    %6 = vector.broadcast %cst_5 : f32 to vector<32x64xf32>
    %7 = arith.maximumf %5, %6 : vector<32x64xf32>
    %c0_6 = arith.constant 0 : index
    %c0_7 = arith.constant 0 : index
    %8 = vector.load %arg4[%c0_6, %c0_7] : memref<32x64xbf16, #tpu.memory_space<vmem>>, vector<32x64xbf16>
    %9 = arith.extf %8 : vector<32x64xbf16> to vector<32x64xf32>
    %10 = arith.addf %7, %9 : vector<32x64xf32>
    %11 = arith.truncf %10 : vector<32x64xf32> to vector<32x64xbf16>
    %c0_8 = arith.constant 0 : index
    %c0_9 = arith.constant 0 : index
    %12 = vector.load %arg5[%c0_8, %c0_9] : memref<32x64xbf16, #tpu.memory_space<vmem>>, vector<32x64xbf16>
    tpu.vector_store %arg5[%c0_8, %c0_9], %11 {strides = array<i32>} : memref<32x64xbf16, #tpu.memory_space<vmem>>, vector<32x64xbf16>,
    return
  }
  func.func @transform_0(%arg0: i32) -> (i32, i32) {
    %c0_i32 = arith.constant 0 : i32
    %c0_i32_0 = arith.constant 0 : i32
    return %arg0, %c0_i32 : i32, i32
  }
  func.func @transform_1(%arg0: i32) -> (i32, i32) {
    %c0_i32 = arith.constant 0 : i32
    %c0_i32_0 = arith.constant 0 : i32
    %c0_i32_1 = arith.constant 0 : i32
    return %c0_i32, %c0_i32_0 : i32, i32
  }
  func.func @transform_2(%arg0: i32) -> (i32, i32) {
    %c0_i32 = arith.constant 0 : i32
    %c0_i32_0 = arith.constant 0 : i32
    %c0_i32_1 = arith.constant 0 : i32
    return %c0_i32, %c0_i32_0 : i32, i32
  }
  func.func @transform_3(%arg0: i32) -> (i32, i32) {
    %c0_i32 = arith.constant 0 : i32
    %c0_i32_0 = arith.constant 0 : i32
    return %arg0, %c0_i32 : i32, i32
  }
  func.func @transform_4(%arg0: i32) -> (i32, i32) {
    %c0_i32 = arith.constant 0 : i32
    %c0_i32_0 = arith.constant 0 : i32
    return %arg0, %c0_i32 : i32, i32
  }
}

module attributes {stable_mosaic.version = 11 : i64} {
  func.func @_fused_mm_kernel(%arg0: i32, %arg1: memref<8x576xbf16, #tpu.memory_space<vmem>>, %arg2: memref<576x256xbf16, #tpu.memory_space<vmem>>, %arg3: memref<1x256xf32, #tpu.memory_space<vmem>>, %arg4: memref<8x256xbf16, #tpu.memory_space<vmem>>) attributes {dimension_semantics = [#tpu.dimension_semantics<parallel>], iteration_bounds = array<i64: 1>, scalar_prefetch = 0 : i64, scratch_operands = 0 : i64, tpu.core_type = #tpu.core_type<tc>, window_params = [{transform_indices = @transform_0, window_bounds = array<i64: 8, 576>}, {pipeline_mode = #tpu.pipeline_mode<synchronous>, transform_indices = @transform_1, window_bounds = array<i64: 576, 256>}, {pipeline_mode = #tpu.pipeline_mode<synchronous>, transform_indices = @transform_2, window_bounds = array<i64: 1, 256>}, {transform_indices = @transform_3, window_bounds = array<i64: 8, 256>}]} {
    %c0 = arith.constant 0 : index
    %c0_0 = arith.constant 0 : index
    %0 = vector.load %arg1[%c0, %c0_0] : memref<8x576xbf16, #tpu.memory_space<vmem>>, vector<8x576xbf16>
    %c0_1 = arith.constant 0 : index
    %c0_2 = arith.constant 0 : index
    %1 = vector.load %arg2[%c0_1, %c0_2] : memref<576x256xbf16, #tpu.memory_space<vmem>>, vector<576x256xbf16>
    %cst = arith.constant dense<0.000000e+00> : vector<8x256xf32>
    %2 = tpu.matmul %0, %1, %cst {dimension_numbers = #tpu.dot_dimension_numbers<[1], [0], [0], [1], [0, 0, 1, 1], [], []>} : vector<8x576xbf16>, vector<576x256xbf16>, vector<8x256xf32> -> vector<8x256xf32>
    %c0_3 = arith.constant 0 : index
    %c0_4 = arith.constant 0 : index
    %3 = vector.load %arg3[%c0_3, %c0_4] : memref<1x256xf32, #tpu.memory_space<vmem>>, vector<1x256xf32>
    %4 = vector.broadcast %3 : vector<1x256xf32> to vector<8x256xf32>
    %5 = arith.addf %2, %4 : vector<8x256xf32>
    %6 = tpu.iota {dimensions = array<i32: 1>} : vector<8x256xi32>
    %c128_i32 = arith.constant 128 : i32
    %7 = vector.broadcast %c128_i32 : i32 to vector<8x256xi32>
    %8 = arith.cmpi slt, %6, %7 : vector<8x256xi32>
    %cst_5 = arith.constant 0.000000e+00 : f32
    %9 = vector.broadcast %cst_5 : f32 to vector<8x256xf32>
    %10 = arith.maximumf %5, %9 : vector<8x256xf32>
    %11 = arith.select %8, %10, %5 : vector<8x256xi1>, vector<8x256xf32>
    %12 = arith.truncf %11 : vector<8x256xf32> to vector<8x256xbf16>
    %c0_6 = arith.constant 0 : index
    %c0_7 = arith.constant 0 : index
    %13 = vector.load %arg4[%c0_6, %c0_7] : memref<8x256xbf16, #tpu.memory_space<vmem>>, vector<8x256xbf16>
    tpu.vector_store %arg4[%c0_6, %c0_7], %12 {strides = array<i32>} : memref<8x256xbf16, #tpu.memory_space<vmem>>, vector<8x256xbf16>,
    return
  }
  func.func @transform_0(%arg0: i32) -> (i32, i32) {
    %c0_i32 = arith.constant 0 : i32
    %c0_i32_0 = arith.constant 0 : i32
    return %arg0, %c0_i32 : i32, i32
  }
  func.func @transform_1(%arg0: i32) -> (i32, i32) {
    %c0_i32 = arith.constant 0 : i32
    %c0_i32_0 = arith.constant 0 : i32
    %c0_i32_1 = arith.constant 0 : i32
    return %c0_i32, %c0_i32_0 : i32, i32
  }
  func.func @transform_2(%arg0: i32) -> (i32, i32) {
    %c0_i32 = arith.constant 0 : i32
    %c0_i32_0 = arith.constant 0 : i32
    %c0_i32_1 = arith.constant 0 : i32
    return %c0_i32, %c0_i32_0 : i32, i32
  }
  func.func @transform_3(%arg0: i32) -> (i32, i32) {
    %c0_i32 = arith.constant 0 : i32
    %c0_i32_0 = arith.constant 0 : i32
    return %arg0, %c0_i32 : i32, i32
  }
}

module attributes {stable_mosaic.version = 11 : i64} {
  func.func @_fused_mm_res_kernel(%arg0: i32, %arg1: memref<8x1152xbf16, #tpu.memory_space<vmem>>, %arg2: memref<1152x128xbf16, #tpu.memory_space<vmem>>, %arg3: memref<1x128xf32, #tpu.memory_space<vmem>>, %arg4: memref<8x128xbf16, #tpu.memory_space<vmem>>, %arg5: memref<8x128xbf16, #tpu.memory_space<vmem>>) attributes {dimension_semantics = [#tpu.dimension_semantics<parallel>], iteration_bounds = array<i64: 1>, scalar_prefetch = 0 : i64, scratch_operands = 0 : i64, tpu.core_type = #tpu.core_type<tc>, window_params = [{transform_indices = @transform_0, window_bounds = array<i64: 8, 1152>}, {pipeline_mode = #tpu.pipeline_mode<synchronous>, transform_indices = @transform_1, window_bounds = array<i64: 1152, 128>}, {pipeline_mode = #tpu.pipeline_mode<synchronous>, transform_indices = @transform_2, window_bounds = array<i64: 1, 128>}, {transform_indices = @transform_3, window_bounds = array<i64: 8, 128>}, {transform_indices = @transform_4, window_bounds = array<i64: 8, 128>}]} {
    %c0 = arith.constant 0 : index
    %c0_0 = arith.constant 0 : index
    %0 = vector.load %arg1[%c0, %c0_0] : memref<8x1152xbf16, #tpu.memory_space<vmem>>, vector<8x1152xbf16>
    %c0_1 = arith.constant 0 : index
    %c0_2 = arith.constant 0 : index
    %1 = vector.load %arg2[%c0_1, %c0_2] : memref<1152x128xbf16, #tpu.memory_space<vmem>>, vector<1152x128xbf16>
    %cst = arith.constant dense<0.000000e+00> : vector<8x128xf32>
    %2 = tpu.matmul %0, %1, %cst {dimension_numbers = #tpu.dot_dimension_numbers<[1], [0], [0], [1], [0, 0, 1, 1], [], []>} : vector<8x1152xbf16>, vector<1152x128xbf16>, vector<8x128xf32> -> vector<8x128xf32>
    %c0_3 = arith.constant 0 : index
    %c0_4 = arith.constant 0 : index
    %3 = vector.load %arg3[%c0_3, %c0_4] : memref<1x128xf32, #tpu.memory_space<vmem>>, vector<1x128xf32>
    %4 = vector.broadcast %3 : vector<1x128xf32> to vector<8x128xf32>
    %5 = arith.addf %2, %4 : vector<8x128xf32>
    %cst_5 = arith.constant 0.000000e+00 : f32
    %6 = vector.broadcast %cst_5 : f32 to vector<8x128xf32>
    %7 = arith.maximumf %5, %6 : vector<8x128xf32>
    %c0_6 = arith.constant 0 : index
    %c0_7 = arith.constant 0 : index
    %8 = vector.load %arg4[%c0_6, %c0_7] : memref<8x128xbf16, #tpu.memory_space<vmem>>, vector<8x128xbf16>
    %9 = arith.extf %8 : vector<8x128xbf16> to vector<8x128xf32>
    %10 = arith.addf %7, %9 : vector<8x128xf32>
    %11 = arith.truncf %10 : vector<8x128xf32> to vector<8x128xbf16>
    %c0_8 = arith.constant 0 : index
    %c0_9 = arith.constant 0 : index
    %12 = vector.load %arg5[%c0_8, %c0_9] : memref<8x128xbf16, #tpu.memory_space<vmem>>, vector<8x128xbf16>
    tpu.vector_store %arg5[%c0_8, %c0_9], %11 {strides = array<i32>} : memref<8x128xbf16, #tpu.memory_space<vmem>>, vector<8x128xbf16>,
    return
  }
  func.func @transform_0(%arg0: i32) -> (i32, i32) {
    %c0_i32 = arith.constant 0 : i32
    %c0_i32_0 = arith.constant 0 : i32
    return %arg0, %c0_i32 : i32, i32
  }
  func.func @transform_1(%arg0: i32) -> (i32, i32) {
    %c0_i32 = arith.constant 0 : i32
    %c0_i32_0 = arith.constant 0 : i32
    %c0_i32_1 = arith.constant 0 : i32
    return %c0_i32, %c0_i32_0 : i32, i32
  }
  func.func @transform_2(%arg0: i32) -> (i32, i32) {
    %c0_i32 = arith.constant 0 : i32
    %c0_i32_0 = arith.constant 0 : i32
    %c0_i32_1 = arith.constant 0 : i32
    return %c0_i32, %c0_i32_0 : i32, i32
  }
  func.func @transform_3(%arg0: i32) -> (i32, i32) {
    %c0_i32 = arith.constant 0 : i32
    %c0_i32_0 = arith.constant 0 : i32
    return %arg0, %c0_i32 : i32, i32
  }
  func.func @transform_4(%arg0: i32) -> (i32, i32) {
    %c0_i32 = arith.constant 0 : i32
    %c0_i32_0 = arith.constant 0 : i32
    return %arg0, %c0_i32 : i32, i32
  }
}

module attributes {stable_mosaic.version = 11 : i64} {
  func.func @_fused_mm_kernel(%arg0: i32, %arg1: memref<8x128xbf16, #tpu.memory_space<vmem>>, %arg2: memref<128x5xbf16, #tpu.memory_space<vmem>>, %arg3: memref<1x5xf32, #tpu.memory_space<vmem>>, %arg4: memref<8x5xbf16, #tpu.memory_space<vmem>>) attributes {dimension_semantics = [#tpu.dimension_semantics<parallel>], iteration_bounds = array<i64: 1>, scalar_prefetch = 0 : i64, scratch_operands = 0 : i64, tpu.core_type = #tpu.core_type<tc>, window_params = [{transform_indices = @transform_0, window_bounds = array<i64: 8, 128>}, {pipeline_mode = #tpu.pipeline_mode<synchronous>, transform_indices = @transform_1, window_bounds = array<i64: 128, 5>}, {pipeline_mode = #tpu.pipeline_mode<synchronous>, transform_indices = @transform_2, window_bounds = array<i64: 1, 5>}, {transform_indices = @transform_3, window_bounds = array<i64: 8, 5>}]} {
    %c0 = arith.constant 0 : index
    %c0_0 = arith.constant 0 : index
    %0 = vector.load %arg1[%c0, %c0_0] : memref<8x128xbf16, #tpu.memory_space<vmem>>, vector<8x128xbf16>
    %c0_1 = arith.constant 0 : index
    %c0_2 = arith.constant 0 : index
    %1 = vector.load %arg2[%c0_1, %c0_2] : memref<128x5xbf16, #tpu.memory_space<vmem>>, vector<128x5xbf16>
    %cst = arith.constant dense<0.000000e+00> : vector<8x5xf32>
    %2 = tpu.matmul %0, %1, %cst {dimension_numbers = #tpu.dot_dimension_numbers<[1], [0], [0], [1], [0, 0, 1, 1], [], []>} : vector<8x128xbf16>, vector<128x5xbf16>, vector<8x5xf32> -> vector<8x5xf32>
    %c0_3 = arith.constant 0 : index
    %c0_4 = arith.constant 0 : index
    %3 = vector.load %arg3[%c0_3, %c0_4] : memref<1x5xf32, #tpu.memory_space<vmem>>, vector<1x5xf32>
    %4 = vector.broadcast %3 : vector<1x5xf32> to vector<8x5xf32>
    %5 = arith.addf %2, %4 : vector<8x5xf32>
    %6 = arith.truncf %5 : vector<8x5xf32> to vector<8x5xbf16>
    %c0_5 = arith.constant 0 : index
    %c0_6 = arith.constant 0 : index
    %7 = vector.load %arg4[%c0_5, %c0_6] : memref<8x5xbf16, #tpu.memory_space<vmem>>, vector<8x5xbf16>
    tpu.vector_store %arg4[%c0_5, %c0_6], %6 {strides = array<i32>} : memref<8x5xbf16, #tpu.memory_space<vmem>>, vector<8x5xbf16>,
    return
  }
  func.func @transform_0(%arg0: i32) -> (i32, i32) {
    %c0_i32 = arith.constant 0 : i32
    %c0_i32_0 = arith.constant 0 : i32
    return %arg0, %c0_i32 : i32, i32
  }
  func.func @transform_1(%arg0: i32) -> (i32, i32) {
    %c0_i32 = arith.constant 0 : i32
    %c0_i32_0 = arith.constant 0 : i32
    %c0_i32_1 = arith.constant 0 : i32
    return %c0_i32, %c0_i32_0 : i32, i32
  }
  func.func @transform_2(%arg0: i32) -> (i32, i32) {
    %c0_i32 = arith.constant 0 : i32
    %c0_i32_0 = arith.constant 0 : i32
    %c0_i32_1 = arith.constant 0 : i32
    return %c0_i32, %c0_i32_0 : i32, i32
  }
  func.func @transform_3(%arg0: i32) -> (i32, i32) {
    %c0_i32 = arith.constant 0 : i32
    %c0_i32_0 = arith.constant 0 : i32
    return %arg0, %c0_i32 : i32, i32
  }
}

module attributes {stable_mosaic.version = 11 : i64} {
  func.func @_fused_mm_kernel(%arg0: i32, %arg1: memref<8x80xbf16, #tpu.memory_space<vmem>>, %arg2: memref<80x20xbf16, #tpu.memory_space<vmem>>, %arg3: memref<1x20xf32, #tpu.memory_space<vmem>>, %arg4: memref<8x20xbf16, #tpu.memory_space<vmem>>) attributes {dimension_semantics = [#tpu.dimension_semantics<parallel>], iteration_bounds = array<i64: 1>, scalar_prefetch = 0 : i64, scratch_operands = 0 : i64, tpu.core_type = #tpu.core_type<tc>, window_params = [{transform_indices = @transform_0, window_bounds = array<i64: 8, 80>}, {pipeline_mode = #tpu.pipeline_mode<synchronous>, transform_indices = @transform_1, window_bounds = array<i64: 80, 20>}, {pipeline_mode = #tpu.pipeline_mode<synchronous>, transform_indices = @transform_2, window_bounds = array<i64: 1, 20>}, {transform_indices = @transform_3, window_bounds = array<i64: 8, 20>}]} {
    %c0 = arith.constant 0 : index
    %c0_0 = arith.constant 0 : index
    %0 = vector.load %arg1[%c0, %c0_0] : memref<8x80xbf16, #tpu.memory_space<vmem>>, vector<8x80xbf16>
    %c0_1 = arith.constant 0 : index
    %c0_2 = arith.constant 0 : index
    %1 = vector.load %arg2[%c0_1, %c0_2] : memref<80x20xbf16, #tpu.memory_space<vmem>>, vector<80x20xbf16>
    %cst = arith.constant dense<0.000000e+00> : vector<8x20xf32>
    %2 = tpu.matmul %0, %1, %cst {dimension_numbers = #tpu.dot_dimension_numbers<[1], [0], [0], [1], [0, 0, 1, 1], [], []>} : vector<8x80xbf16>, vector<80x20xbf16>, vector<8x20xf32> -> vector<8x20xf32>
    %c0_3 = arith.constant 0 : index
    %c0_4 = arith.constant 0 : index
    %3 = vector.load %arg3[%c0_3, %c0_4] : memref<1x20xf32, #tpu.memory_space<vmem>>, vector<1x20xf32>
    %4 = vector.broadcast %3 : vector<1x20xf32> to vector<8x20xf32>
    %5 = arith.addf %2, %4 : vector<8x20xf32>
    %6 = arith.truncf %5 : vector<8x20xf32> to vector<8x20xbf16>
    %c0_5 = arith.constant 0 : index
    %c0_6 = arith.constant 0 : index
    %7 = vector.load %arg4[%c0_5, %c0_6] : memref<8x20xbf16, #tpu.memory_space<vmem>>, vector<8x20xbf16>
    tpu.vector_store %arg4[%c0_5, %c0_6], %6 {strides = array<i32>} : memref<8x20xbf16, #tpu.memory_space<vmem>>, vector<8x20xbf16>,
    return
  }
  func.func @transform_0(%arg0: i32) -> (i32, i32) {
    %c0_i32 = arith.constant 0 : i32
    %c0_i32_0 = arith.constant 0 : i32
    return %arg0, %c0_i32 : i32, i32
  }
  func.func @transform_1(%arg0: i32) -> (i32, i32) {
    %c0_i32 = arith.constant 0 : i32
    %c0_i32_0 = arith.constant 0 : i32
    %c0_i32_1 = arith.constant 0 : i32
    return %c0_i32, %c0_i32_0 : i32, i32
  }
  func.func @transform_2(%arg0: i32) -> (i32, i32) {
    %c0_i32 = arith.constant 0 : i32
    %c0_i32_0 = arith.constant 0 : i32
    %c0_i32_1 = arith.constant 0 : i32
    return %c0_i32, %c0_i32_0 : i32, i32
  }
  func.func @transform_3(%arg0: i32) -> (i32, i32) {
    %c0_i32 = arith.constant 0 : i32
    %c0_i32_0 = arith.constant 0 : i32
    return %arg0, %c0_i32 : i32, i32
  }
}

module attributes {stable_mosaic.version = 11 : i64} {
  func.func @_fused_mm_kernel(%arg0: i32, %arg1: memref<32x32xbf16, #tpu.memory_space<vmem>>, %arg2: memref<32x20xbf16, #tpu.memory_space<vmem>>, %arg3: memref<1x20xf32, #tpu.memory_space<vmem>>, %arg4: memref<32x20xbf16, #tpu.memory_space<vmem>>) attributes {dimension_semantics = [#tpu.dimension_semantics<parallel>], iteration_bounds = array<i64: 1>, scalar_prefetch = 0 : i64, scratch_operands = 0 : i64, tpu.core_type = #tpu.core_type<tc>, window_params = [{transform_indices = @transform_0, window_bounds = array<i64: 32, 32>}, {pipeline_mode = #tpu.pipeline_mode<synchronous>, transform_indices = @transform_1, window_bounds = array<i64: 32, 20>}, {pipeline_mode = #tpu.pipeline_mode<synchronous>, transform_indices = @transform_2, window_bounds = array<i64: 1, 20>}, {transform_indices = @transform_3, window_bounds = array<i64: 32, 20>}]} {
    %c0 = arith.constant 0 : index
    %c0_0 = arith.constant 0 : index
    %0 = vector.load %arg1[%c0, %c0_0] : memref<32x32xbf16, #tpu.memory_space<vmem>>, vector<32x32xbf16>
    %c0_1 = arith.constant 0 : index
    %c0_2 = arith.constant 0 : index
    %1 = vector.load %arg2[%c0_1, %c0_2] : memref<32x20xbf16, #tpu.memory_space<vmem>>, vector<32x20xbf16>
    %cst = arith.constant dense<0.000000e+00> : vector<32x20xf32>
    %2 = tpu.matmul %0, %1, %cst {dimension_numbers = #tpu.dot_dimension_numbers<[1], [0], [0], [1], [0, 0, 1, 1], [], []>} : vector<32x32xbf16>, vector<32x20xbf16>, vector<32x20xf32> -> vector<32x20xf32>
    %c0_3 = arith.constant 0 : index
    %c0_4 = arith.constant 0 : index
    %3 = vector.load %arg3[%c0_3, %c0_4] : memref<1x20xf32, #tpu.memory_space<vmem>>, vector<1x20xf32>
    %4 = vector.broadcast %3 : vector<1x20xf32> to vector<32x20xf32>
    %5 = arith.addf %2, %4 : vector<32x20xf32>
    %6 = arith.truncf %5 : vector<32x20xf32> to vector<32x20xbf16>
    %c0_5 = arith.constant 0 : index
    %c0_6 = arith.constant 0 : index
    %7 = vector.load %arg4[%c0_5, %c0_6] : memref<32x20xbf16, #tpu.memory_space<vmem>>, vector<32x20xbf16>
    tpu.vector_store %arg4[%c0_5, %c0_6], %6 {strides = array<i32>} : memref<32x20xbf16, #tpu.memory_space<vmem>>, vector<32x20xbf16>,
    return
  }
  func.func @transform_0(%arg0: i32) -> (i32, i32) {
    %c0_i32 = arith.constant 0 : i32
    %c0_i32_0 = arith.constant 0 : i32
    return %arg0, %c0_i32 : i32, i32
  }
  func.func @transform_1(%arg0: i32) -> (i32, i32) {
    %c0_i32 = arith.constant 0 : i32
    %c0_i32_0 = arith.constant 0 : i32
    %c0_i32_1 = arith.constant 0 : i32
    return %c0_i32, %c0_i32_0 : i32, i32
  }
  func.func @transform_2(%arg0: i32) -> (i32, i32) {
    %c0_i32 = arith.constant 0 : i32
    %c0_i32_0 = arith.constant 0 : i32
    %c0_i32_1 = arith.constant 0 : i32
    return %c0_i32, %c0_i32_0 : i32, i32
  }
  func.func @transform_3(%arg0: i32) -> (i32, i32) {
    %c0_i32 = arith.constant 0 : i32
    %c0_i32_0 = arith.constant 0 : i32
    return %arg0, %c0_i32 : i32, i32
  }
}

module attributes {stable_mosaic.version = 11 : i64} {
  func.func @_fused_mm_kernel(%arg0: i32, %arg1: memref<128x32xbf16, #tpu.memory_space<vmem>>, %arg2: memref<32x20xbf16, #tpu.memory_space<vmem>>, %arg3: memref<1x20xf32, #tpu.memory_space<vmem>>, %arg4: memref<128x20xbf16, #tpu.memory_space<vmem>>) attributes {dimension_semantics = [#tpu.dimension_semantics<parallel>], iteration_bounds = array<i64: 1>, scalar_prefetch = 0 : i64, scratch_operands = 0 : i64, tpu.core_type = #tpu.core_type<tc>, window_params = [{transform_indices = @transform_0, window_bounds = array<i64: 128, 32>}, {pipeline_mode = #tpu.pipeline_mode<synchronous>, transform_indices = @transform_1, window_bounds = array<i64: 32, 20>}, {pipeline_mode = #tpu.pipeline_mode<synchronous>, transform_indices = @transform_2, window_bounds = array<i64: 1, 20>}, {transform_indices = @transform_3, window_bounds = array<i64: 128, 20>}]} {
    %c0 = arith.constant 0 : index
    %c0_0 = arith.constant 0 : index
    %0 = vector.load %arg1[%c0, %c0_0] : memref<128x32xbf16, #tpu.memory_space<vmem>>, vector<128x32xbf16>
    %c0_1 = arith.constant 0 : index
    %c0_2 = arith.constant 0 : index
    %1 = vector.load %arg2[%c0_1, %c0_2] : memref<32x20xbf16, #tpu.memory_space<vmem>>, vector<32x20xbf16>
    %cst = arith.constant dense<0.000000e+00> : vector<128x20xf32>
    %2 = tpu.matmul %0, %1, %cst {dimension_numbers = #tpu.dot_dimension_numbers<[1], [0], [0], [1], [0, 0, 1, 1], [], []>} : vector<128x32xbf16>, vector<32x20xbf16>, vector<128x20xf32> -> vector<128x20xf32>
    %c0_3 = arith.constant 0 : index
    %c0_4 = arith.constant 0 : index
    %3 = vector.load %arg3[%c0_3, %c0_4] : memref<1x20xf32, #tpu.memory_space<vmem>>, vector<1x20xf32>
    %4 = vector.broadcast %3 : vector<1x20xf32> to vector<128x20xf32>
    %5 = arith.addf %2, %4 : vector<128x20xf32>
    %6 = arith.truncf %5 : vector<128x20xf32> to vector<128x20xbf16>
    %c0_5 = arith.constant 0 : index
    %c0_6 = arith.constant 0 : index
    %7 = vector.load %arg4[%c0_5, %c0_6] : memref<128x20xbf16, #tpu.memory_space<vmem>>, vector<128x20xbf16>
    tpu.vector_store %arg4[%c0_5, %c0_6], %6 {strides = array<i32>} : memref<128x20xbf16, #tpu.memory_space<vmem>>, vector<128x20xbf16>,
    return
  }
  func.func @transform_0(%arg0: i32) -> (i32, i32) {
    %c0_i32 = arith.constant 0 : i32
    %c0_i32_0 = arith.constant 0 : i32
    return %arg0, %c0_i32 : i32, i32
  }
  func.func @transform_1(%arg0: i32) -> (i32, i32) {
    %c0_i32 = arith.constant 0 : i32
    %c0_i32_0 = arith.constant 0 : i32
    %c0_i32_1 = arith.constant 0 : i32
    return %c0_i32, %c0_i32_0 : i32, i32
  }
  func.func @transform_2(%arg0: i32) -> (i32, i32) {
    %c0_i32 = arith.constant 0 : i32
    %c0_i32_0 = arith.constant 0 : i32
    %c0_i32_1 = arith.constant 0 : i32
    return %c0_i32, %c0_i32_0 : i32, i32
  }
  func.func @transform_3(%arg0: i32) -> (i32, i32) {
    %c0_i32 = arith.constant 0 : i32
    %c0_i32_0 = arith.constant 0 : i32
    return %arg0, %c0_i32 : i32, i32
  }
}

</mosaic_0001>

<llo_original>
// kernel: fcn_forward.9
$region0: #{fcn_forward.9}
  #allocation0 [shape = 'u32[]', space=smem, size = 0x4, offset = 0x4, fixed_abs, tag = 'smem constant byte address 0x4 - core index']
  #allocation1 [shape = 'u32[144,128]{1,0:T(1,128)}', space=vmem, size = 0x12000, scoped, tag = 'internal scratch']
  %s0 = inlined_call_operand.vmem [shape: bf16[128,160], index: 0, kind: input, shape index: {}]
  %s1 = inlined_call_operand.vmem [shape: bf16[160,64], index: 1, kind: input, shape index: {}]
  %s2 = inlined_call_operand.vmem [shape: f32[1,64], index: 2, kind: input, shape index: {}]
  %s3 = inlined_call_operand.vmem [shape: bf16[128,64], index: 3, kind: output, shape index: {}]
  %s4 = sld [smem:[#allocation0]]
  $region22: #{fcn_forward.9} parent=0
    _
  %s6 = ssub.s32 1, %s4
  %s7 = scalar_select 0, %s6, %s4
  // Predicated region
  $region2: #{fcn_forward.9} parent=0 // pred_check
    _
  $region3: #{fcn_forward.9} parent=0 // pred_check_branch
    %9 = sbr.rel (0) target = $region5
  $region4: #{fcn_forward.9} parent=0 // pred_region
    _
  $region5: #{fcn_forward.9} parent=0 // pred_fallthru
    _
  // Predicated region
  $region6: #{fcn_forward.9} parent=0 // pred_check
    _
  $region7: #{fcn_forward.9} parent=0 // pred_check_branch
    %11 = sbr.rel (0) target = $region9
  $region8: #{fcn_forward.9} parent=0 // pred_region
    _
  $region9: #{fcn_forward.9} parent=0 // pred_fallthru
    _
  // Predicated region
  $region10: #{fcn_forward.9} parent=0 // pred_check
    _
  $region11: #{fcn_forward.9} parent=0 // pred_check_branch
    %13 = sbr.rel (0) target = $region13
  $region12: #{fcn_forward.9} parent=0 // pred_region
    _
  $region13: #{fcn_forward.9} parent=0 // pred_fallthru
    _
  %v15 = vld [vmem:[%s0] sm:$0xff]
  %v16 = vld [vmem:[%s0 + $0x8] sm:$0xff]
  %v17 = vld [vmem:[%s0 + $0x10] sm:$0xff]
  %v18 = vld [vmem:[%s0 + $0x18] sm:$0xff]
  %v19 = vld [vmem:[%s0 + $0x20] sm:$0xff]
  %v20 = vld [vmem:[%s0 + $0x28] sm:$0xff]
  %v21 = vld [vmem:[%s0 + $0x30] sm:$0xff]
  %v22 = vld [vmem:[%s0 + $0x38] sm:$0xff]
  %v23 = vld [vmem:[%s0 + $0x40] sm:$0xff]
  %v24 = vld [vmem:[%s0 + $0x48] sm:$0xff]
  %v25 = vld [vmem:[%s0 + $0x50] sm:$0xff]
  %v26 = vld [vmem:[%s0 + $0x58] sm:$0xff]
  %v27 = vld [vmem:[%s0 + $0x60] sm:$0xff]
  %v28 = vld [vmem:[%s0 + $0x68] sm:$0xff]
  %v29 = vld [vmem:[%s0 + $0x70] sm:$0xff]
  %v30 = vld [vmem:[%s0 + $0x78] sm:$0xff]
  %v31 = vld [vmem:[%s1] sm:$0xf]
  %v32 = vld [vmem:[%s1 + $0x4] sm:$0xf]
  %v33 = vld [vmem:[%s1 + $0x8] sm:$0xf]
  %v34 = vld [vmem:[%s1 + $0xc] sm:$0xf]
  %v35 = vld [vmem:[%s1 + $0x10] sm:$0xf]
  %v36 = vld [vmem:[%s1 + $0x14] sm:$0xf]
  %v37 = vld [vmem:[%s1 + $0x18] sm:$0xf]
  %v38 = vld [vmem:[%s1 + $0x1c] sm:$0xf]
  %v39 = vld [vmem:[%s1 + $0x20] sm:$0xf]
  %v40 = vld [vmem:[%s1 + $0x24] sm:$0xf]
  %v41 = vld [vmem:[%s1 + $0x28] sm:$0xf]
  %v42 = vld [vmem:[%s1 + $0x2c] sm:$0xf]
  %v43 = vld [vmem:[%s1 + $0x30] sm:$0xf]
  %v44 = vld [vmem:[%s1 + $0x34] sm:$0xf]
  %v45 = vld [vmem:[%s1 + $0x38] sm:$0xf]
  %v46 = vld [vmem:[%s1 + $0x3c] sm:$0xf]
  %v47 = vld [vmem:[%s1 + $0x40] sm:$0xf]
  %v48 = vld [vmem:[%s1 + $0x44] sm:$0xf]
  %v49 = vld [vmem:[%s1 + $0x48] sm:$0xf]
  %v50 = vld [vmem:[%s1 + $0x4c] sm:$0xf]
  %v51 = vld [vmem:[%s2] sm:$0x1]
  %v53 = vlaneseq
  %v54 = vshrl.u32 %v53, 7
  %v55 = vsub.s32 0, %v54
  %v56 = vrot.slane %v51, %v55
  %v74 = vunpack.c.l.b16 %v15
  %v75 = vunpack.c.h.b16 %v15
  %v76 = vunpack.c.l.b16 %v16
  %v77 = vunpack.c.h.b16 %v16
  %v78 = vunpack.c.l.b16 %v17
  %v79 = vunpack.c.h.b16 %v17
  %v80 = vunpack.c.l.b16 %v18
  %v81 = vunpack.c.h.b16 %v18
  %v82 = vunpack.c.l.b16 %v19
  %v83 = vunpack.c.h.b16 %v19
  %v84 = vunpack.c.l.b16 %v20
  %v85 = vunpack.c.h.b16 %v20
  %v86 = vunpack.c.l.b16 %v21
  %v87 = vunpack.c.h.b16 %v21
  %v88 = vunpack.c.l.b16 %v22
  %v89 = vunpack.c.h.b16 %v22
  %v90 = vunpack.c.l.b16 %v23
  %v91 = vunpack.c.h.b16 %v23
  %v92 = vunpack.c.l.b16 %v24
  %v93 = vunpack.c.h.b16 %v24
  %v94 = vunpack.c.l.b16 %v25
  %v95 = vunpack.c.h.b16 %v25
  %v96 = vunpack.c.l.b16 %v26
  %v97 = vunpack.c.h.b16 %v26
  %v98 = vunpack.c.l.b16 %v27
  %v99 = vunpack.c.h.b16 %v27
  %v100 = vunpack.c.l.b16 %v28
  %v101 = vunpack.c.h.b16 %v28
  %v102 = vunpack.c.l.b16 %v29
  %v103 = vunpack.c.h.b16 %v29
  %v104 = vunpack.c.l.b16 %v30
  %v105 = vunpack.c.h.b16 %v30
  %v106 = vpack.c.b16 %v76, %v74
  %v107 = vpack.c.b16 %v77, %v75
  %v108 = vpack.c.b16 %v80, %v78
  %v109 = vpack.c.b16 %v81, %v79
  %v110 = vpack.c.b16 %v84, %v82
  %v111 = vpack.c.b16 %v85, %v83
  %v112 = vpack.c.b16 %v88, %v86
  %v113 = vpack.c.b16 %v89, %v87
  %v114 = vpack.c.b16 %v92, %v90
  %v115 = vpack.c.b16 %v93, %v91
  %v116 = vpack.c.b16 %v96, %v94
  %v117 = vpack.c.b16 %v97, %v95
  %v118 = vpack.c.b16 %v100, %v98
  %v119 = vpack.c.b16 %v101, %v99
  %v120 = vpack.c.b16 %v104, %v102
  %v121 = vpack.c.b16 %v105, %v103
  %v150 = vunpack.c.l.b16 %v31
  %v151 = vunpack.c.l.b16 %v32
  %v152 = vunpack.c.l.b16 %v33
  %v153 = vunpack.c.l.b16 %v34
  %v154 = vunpack.c.l.b16 %v35
  %v155 = vunpack.c.l.b16 %v36
  %v156 = vunpack.c.l.b16 %v37
  %v157 = vunpack.c.l.b16 %v38
  %v158 = vunpack.c.l.b16 %v39
  %v159 = vunpack.c.l.b16 %v40
  %v160 = vunpack.c.l.b16 %v41
  %v161 = vunpack.c.l.b16 %v42
  %v162 = vunpack.c.l.b16 %v43
  %v163 = vunpack.c.l.b16 %v44
  %v164 = vunpack.c.l.b16 %v45
  %v165 = vunpack.c.l.b16 %v46
  %v166 = vunpack.c.l.b16 %v47
  %v167 = vunpack.c.l.b16 %v48
  %v168 = vunpack.c.l.b16 %v49
  %v169 = vunpack.c.l.b16 %v50
  %v170 = vpack.c.b16 %v151, %v150
  %v171 = vpack.c.b16 %v153, %v152
  %v172 = vpack.c.b16 %v155, %v154
  %v173 = vpack.c.b16 %v157, %v156
  %v174 = vpack.c.b16 %v159, %v158
  %v175 = vpack.c.b16 %v161, %v160
  %v176 = vpack.c.b16 %v163, %v162
  %v177 = vpack.c.b16 %v165, %v164
  %v178 = vpack.c.b16 %v167, %v166
  %v179 = vpack.c.b16 %v169, %v168
  %vm190 = vcmask 261120
  %v192 = vsel %vm190, %v107, 0
  %v195 = vsel %vm190, %v109, 0
  %v198 = vsel %vm190, %v111, 0
  %v201 = vsel %vm190, %v113, 0
  %v204 = vsel %vm190, %v115, 0
  %v207 = vsel %vm190, %v117, 0
  %v210 = vsel %vm190, %v119, 0
  %v213 = vsel %vm190, %v121, 0
  %215 = vmatprep.subr.bf16.mxu0 0
  %216 = vmatpush1.bf16.msra.mxu0 %v170
  %217 = vmatprep.subr.bf16.mxu0 0
  %218 = vmatpush1.bf16.msra.mxu0 %v171
  %219 = vmatprep.subr.bf16.mxu0 0
  %220 = vmatpush1.bf16.msra.mxu0 %v172
  %221 = vmatprep.subr.bf16.mxu0 0
  %222 = vmatpush1.bf16.msra.mxu0 %v173
  %223 = vmatprep.subr.bf16.mxu0 0
  %224 = vmatpush1.bf16.msra.mxu0 %v174
  %225 = vmatprep.subr.bf16.mxu0 0
  %226 = vmatpush1.bf16.msra.mxu0 %v175
  %227 = vmatprep.subr.bf16.mxu0 0
  %228 = vmatpush1.bf16.msra.mxu0 %v176
  %229 = vmatprep.subr.bf16.mxu0 0
  %230 = vmatpush1.bf16.msra.mxu0 %v177
  %231 = vmatprep.subr.bf16.mxu0 0
  %232 = vmatpush1.bf16.msra.mxu0 %v178
  %233 = vmatprep.subr.bf16.mxu0 0
  %234 = vmatpush1.bf16.msra.mxu0 %v179
  %235 = vmatprep.subr.bf16.mxu0 0
  %236 = vmatpush1.bf16.msra.mxu0 0
  %237 = vmatprep.subr.bf16.mxu0 0
  %238 = vmatpush1.bf16.msra.mxu0 0
  %239 = vmatprep.subr.bf16.mxu0 0
  %240 = vmatpush1.bf16.msra.mxu0 0
  %241 = vmatprep.subr.bf16.mxu0 0
  %242 = vmatpush1.bf16.msra.mxu0 0
  %243 = vmatprep.subr.bf16.mxu0 0
  %244 = vmatpush1.bf16.msra.mxu0 0
  %245 = vmatprep.subr.bf16.mxu0 0
  %246 = vmatpush1.bf16.msra.mxu0 0
  %247 = vmatprep.mubr.bf16.mxu0 %v192
  %248 = vmatmul.mubr.bf16.gmra.mrb[0].mxu0 %v106
  %v249 = vpop.f32.mrb[0].mxu0
  %v250 = vadd.f32 %v56, %v249
  %v251 = vpop.f32.mrb[0].mxu0
  %v252 = vpop.f32.mrb[0].mxu0
  %v253 = vadd.f32 %v56, %v252
  %v254 = vpop.f32.mrb[0].mxu0
  %255 = vmatprep.mubr.bf16.mxu0 %v195
  %256 = vmatmul.mubr.bf16.gmra.mrb[0].mxu0 %v108
  %v257 = vpop.f32.mrb[0].mxu0
  %v258 = vadd.f32 %v56, %v257
  %v259 = vpop.f32.mrb[0].mxu0
  %v260 = vpop.f32.mrb[0].mxu0
  %v261 = vadd.f32 %v56, %v260
  %v262 = vpop.f32.mrb[0].mxu0
  %263 = vmatprep.mubr.bf16.mxu0 %v198
  %264 = vmatmul.mubr.bf16.gmra.mrb[0].mxu0 %v110
  %v265 = vpop.f32.mrb[0].mxu0
  %v266 = vadd.f32 %v56, %v265
  %v267 = vpop.f32.mrb[0].mxu0
  %v268 = vpop.f32.mrb[0].mxu0
  %v269 = vadd.f32 %v56, %v268
  %v270 = vpop.f32.mrb[0].mxu0
  %271 = vmatprep.mubr.bf16.mxu0 %v201
  %272 = vmatmul.mubr.bf16.gmra.mrb[0].mxu0 %v112
  %v273 = vpop.f32.mrb[0].mxu0
  %v274 = vadd.f32 %v56, %v273
  %v275 = vpop.f32.mrb[0].mxu0
  %v276 = vpop.f32.mrb[0].mxu0
  %v277 = vadd.f32 %v56, %v276
  %v278 = vpop.f32.mrb[0].mxu0
  %279 = vmatprep.mubr.bf16.mxu0 %v204
  %280 = vmatmul.mubr.bf16.gmra.mrb[0].mxu0 %v114
  %v281 = vpop.f32.mrb[0].mxu0
  %v282 = vadd.f32 %v56, %v281
  %v283 = vpop.f32.mrb[0].mxu0
  %v284 = vpop.f32.mrb[0].mxu0
  %v285 = vadd.f32 %v56, %v284
  %v286 = vpop.f32.mrb[0].mxu0
  %287 = vmatprep.mubr.bf16.mxu0 %v207
  %288 = vmatmul.mubr.bf16.gmra.mrb[0].mxu0 %v116
  %v289 = vpop.f32.mrb[0].mxu0
  %v290 = vadd.f32 %v56, %v289
  %v291 = vpop.f32.mrb[0].mxu0
  %v292 = vpop.f32.mrb[0].mxu0
  %v293 = vadd.f32 %v56, %v292
  %v294 = vpop.f32.mrb[0].mxu0
  %295 = vmatprep.mubr.bf16.mxu0 %v210
  %296 = vmatmul.mubr.bf16.gmra.mrb[0].mxu0 %v118
  %v297 = vpop.f32.mrb[0].mxu0
  %v298 = vadd.f32 %v56, %v297
  %v299 = vpop.f32.mrb[0].mxu0
  %v300 = vpop.f32.mrb[0].mxu0
  %v301 = vadd.f32 %v56, %v300
  %v302 = vpop.f32.mrb[0].mxu0
  %303 = vmatprep.mubr.bf16.mxu0 %v213
  %304 = vmatmul.mubr.bf16.gmra.mrb[0].mxu0 %v120
  %v305 = vpop.f32.mrb[0].mxu0
  %v306 = vadd.f32 %v56, %v305
  %v307 = vpop.f32.mrb[0].mxu0
  %v308 = vpop.f32.mrb[0].mxu0
  %v309 = vadd.f32 %v56, %v308
  %v310 = vpop.f32.mrb[0].mxu0
  %311 = vdwg.mxu0
  %v312 = vmax.f32 %v250, 0.0
  %v313 = vmax.f32 %v253, 0.0
  %v314 = vmax.f32 %v258, 0.0
  %v315 = vmax.f32 %v261, 0.0
  %v316 = vmax.f32 %v266, 0.0
  %v317 = vmax.f32 %v269, 0.0
  %v318 = vmax.f32 %v274, 0.0
  %v319 = vmax.f32 %v277, 0.0
  %v320 = vmax.f32 %v282, 0.0
  %v321 = vmax.f32 %v285, 0.0
  %v322 = vmax.f32 %v290, 0.0
  %v323 = vmax.f32 %v293, 0.0
  %v324 = vmax.f32 %v298, 0.0
  %v325 = vmax.f32 %v301, 0.0
  %v326 = vmax.f32 %v306, 0.0
  %v327 = vmax.f32 %v309, 0.0
  %v328 = vpack.c.bf16 %v313, %v312
  %v329 = vpack.c.bf16 %v315, %v314
  %v330 = vpack.c.bf16 %v317, %v316
  %v331 = vpack.c.bf16 %v319, %v318
  %v332 = vpack.c.bf16 %v321, %v320
  %v333 = vpack.c.bf16 %v323, %v322
  %v334 = vpack.c.bf16 %v325, %v324
  %v335 = vpack.c.bf16 %v327, %v326
  %v344 = vunpack.c.l.b16 %v328
  %v345 = vunpack.c.h.b16 %v328
  %v346 = vunpack.c.l.b16 %v329
  %v347 = vunpack.c.h.b16 %v329
  %v348 = vunpack.c.l.b16 %v330
  %v349 = vunpack.c.h.b16 %v330
  %v350 = vunpack.c.l.b16 %v331
  %v351 = vunpack.c.h.b16 %v331
  %v352 = vunpack.c.l.b16 %v332
  %v353 = vunpack.c.h.b16 %v332
  %v354 = vunpack.c.l.b16 %v333
  %v355 = vunpack.c.h.b16 %v333
  %v356 = vunpack.c.l.b16 %v334
  %v357 = vunpack.c.h.b16 %v334
  %v358 = vunpack.c.l.b16 %v335
  %v359 = vunpack.c.h.b16 %v335
  %v360 = vpack.c.b16 %v344, %v344
  %v361 = vpack.c.b16 %v345, %v345
  %v362 = vpack.c.b16 %v346, %v346
  %v363 = vpack.c.b16 %v347, %v347
  %v364 = vpack.c.b16 %v348, %v348
  %v365 = vpack.c.b16 %v349, %v349
  %v366 = vpack.c.b16 %v350, %v350
  %v367 = vpack.c.b16 %v351, %v351
  %v368 = vpack.c.b16 %v352, %v352
  %v369 = vpack.c.b16 %v353, %v353
  %v370 = vpack.c.b16 %v354, %v354
  %v371 = vpack.c.b16 %v355, %v355
  %v372 = vpack.c.b16 %v356, %v356
  %v373 = vpack.c.b16 %v357, %v357
  %v374 = vpack.c.b16 %v358, %v358
  %v375 = vpack.c.b16 %v359, %v359
  %vm392 = vcmask 519168
  %393 = vst.msk [vmem:[%s3] sm:$0xf] %vm392, %v360
  %394 = vst.msk [vmem:[%s3 + $0x4] sm:$0xf] %vm392, %v361
  %395 = vst.msk [vmem:[%s3 + $0x8] sm:$0xf] %vm392, %v362
  %396 = vst.msk [vmem:[%s3 + $0xc] sm:$0xf] %vm392, %v363
  %397 = vst.msk [vmem:[%s3 + $0x10] sm:$0xf] %vm392, %v364
  %398 = vst.msk [vmem:[%s3 + $0x14] sm:$0xf] %vm392, %v365
  %399 = vst.msk [vmem:[%s3 + $0x18] sm:$0xf] %vm392, %v366
  %400 = vst.msk [vmem:[%s3 + $0x1c] sm:$0xf] %vm392, %v367
  %401 = vst.msk [vmem:[%s3 + $0x20] sm:$0xf] %vm392, %v368
  %402 = vst.msk [vmem:[%s3 + $0x24] sm:$0xf] %vm392, %v369
  %403 = vst.msk [vmem:[%s3 + $0x28] sm:$0xf] %vm392, %v370
  %404 = vst.msk [vmem:[%s3 + $0x2c] sm:$0xf] %vm392, %v371
  %405 = vst.msk [vmem:[%s3 + $0x30] sm:$0xf] %vm392, %v372
  %406 = vst.msk [vmem:[%s3 + $0x34] sm:$0xf] %vm392, %v373
  %407 = vst.msk [vmem:[%s3 + $0x38] sm:$0xf] %vm392, %v374
  %408 = vst.msk [vmem:[%s3 + $0x3c] sm:$0xf] %vm392, %v375
  // Predicated region
  $region14: #{fcn_forward.9} parent=0 // pred_check
    _
  $region15: #{fcn_forward.9} parent=0 // pred_check_branch
    %410 = sbr.rel (0) target = $region17
  $region16: #{fcn_forward.9} parent=0 // pred_region
    _
  $region17: #{fcn_forward.9} parent=0 // pred_fallthru
    _
  // Predicated region
  $region18: #{fcn_forward.9} parent=0 // pred_check
    _
  $region19: #{fcn_forward.9} parent=0 // pred_check_branch
    %412 = sbr.rel (0) target = $region21
  $region20: #{fcn_forward.9} parent=0 // pred_region
    _
  $region21: #{fcn_forward.9} parent=0 // pred_fallthru
    _

// kernel: fcn_forward.10
$region0: #{fcn_forward.10}
  #allocation0 [shape = 'u32[]', space=smem, size = 0x4, offset = 0x4, fixed_abs, tag = 'smem constant byte address 0x4 - core index']
  #allocation1 [shape = 'u32[144,128]{1,0:T(1,128)}', space=vmem, size = 0x12000, scoped, tag = 'internal scratch']
  %s0 = inlined_call_operand.vmem [shape: bf16[32,576], index: 0, kind: input, shape index: {}]
  %s1 = inlined_call_operand.vmem [shape: bf16[576,128], index: 1, kind: input, shape index: {}]
  %s2 = inlined_call_operand.vmem [shape: f32[1,128], index: 2, kind: input, shape index: {}]
  %s3 = inlined_call_operand.vmem [shape: bf16[32,128], index: 3, kind: output, shape index: {}]
  %s4 = sld [smem:[#allocation0]]
  $region22: #{fcn_forward.10} parent=0
    _
  %s6 = ssub.s32 1, %s4
  %s7 = scalar_select 0, %s6, %s4
  // Predicated region
  $region2: #{fcn_forward.10} parent=0 // pred_check
    _
  $region3: #{fcn_forward.10} parent=0 // pred_check_branch
    %9 = sbr.rel (0) target = $region5
  $region4: #{fcn_forward.10} parent=0 // pred_region
    _
  $region5: #{fcn_forward.10} parent=0 // pred_fallthru
    _
  // Predicated region
  $region6: #{fcn_forward.10} parent=0 // pred_check
    _
  $region7: #{fcn_forward.10} parent=0 // pred_check_branch
    %11 = sbr.rel (0) target = $region9
  $region8: #{fcn_forward.10} parent=0 // pred_region
    _
  $region9: #{fcn_forward.10} parent=0 // pred_fallthru
    _
  // Predicated region
  $region10: #{fcn_forward.10} parent=0 // pred_check
    _
  $region11: #{fcn_forward.10} parent=0 // pred_check_branch
    %13 = sbr.rel (0) target = $region13
  $region12: #{fcn_forward.10} parent=0 // pred_region
    _
  $region13: #{fcn_forward.10} parent=0 // pred_fallthru
    _
  %v15 = vld [vmem:[%s0] sm:$0xff]
  %v16 = vld [vmem:[%s0 + $0x8] sm:$0xff]
  %v17 = vld [vmem:[%s0 + $0x10] sm:$0xf]
  %v18 = vld [vmem:[%s0 + $0x14] sm:$0xff]
  %v19 = vld [vmem:[%s0 + $0x1c] sm:$0xff]
  %v20 = vld [vmem:[%s0 + $0x24] sm:$0xf]
  %v21 = vld [vmem:[%s0 + $0x28] sm:$0xff]
  %v22 = vld [vmem:[%s0 + $0x30] sm:$0xff]
  %v23 = vld [vmem:[%s0 + $0x38] sm:$0xf]
  %v24 = vld [vmem:[%s0 + $0x3c] sm:$0xff]
  %v25 = vld [vmem:[%s0 + $0x44] sm:$0xff]
  %v26 = vld [vmem:[%s0 + $0x4c] sm:$0xf]
  %v27 = vld [vmem:[%s1] sm:$0xf]
  %v28 = vld [vmem:[%s1 + $0x4] sm:$0xf]
  %v29 = vld [vmem:[%s1 + $0x8] sm:$0xf]
  %v30 = vld [vmem:[%s1 + $0xc] sm:$0xf]
  %v31 = vld [vmem:[%s1 + $0x10] sm:$0xf]
  %v32 = vld [vmem:[%s1 + $0x14] sm:$0xf]
  %v33 = vld [vmem:[%s1 + $0x18] sm:$0xf]
  %v34 = vld [vmem:[%s1 + $0x1c] sm:$0xf]
  %v35 = vld [vmem:[%s1 + $0x20] sm:$0xf]
  %v36 = vld [vmem:[%s1 + $0x24] sm:$0xf]
  %v37 = vld [vmem:[%s1 + $0x28] sm:$0xf]
  %v38 = vld [vmem:[%s1 + $0x2c] sm:$0xf]
  %v39 = vld [vmem:[%s1 + $0x30] sm:$0xf]
  %v40 = vld [vmem:[%s1 + $0x34] sm:$0xf]
  %v41 = vld [vmem:[%s1 + $0x38] sm:$0xf]
  %v42 = vld [vmem:[%s1 + $0x3c] sm:$0xf]
  %v43 = vld [vmem:[%s1 + $0x40] sm:$0xf]
  %v44 = vld [vmem:[%s1 + $0x44] sm:$0xf]
  %v45 = vld [vmem:[%s1 + $0x48] sm:$0xf]
  %v46 = vld [vmem:[%s1 + $0x4c] sm:$0xf]
  %v47 = vld [vmem:[%s1 + $0x50] sm:$0xf]
  %v48 = vld [vmem:[%s1 + $0x54] sm:$0xf]
  %v49 = vld [vmem:[%s1 + $0x58] sm:$0xf]
  %v50 = vld [vmem:[%s1 + $0x5c] sm:$0xf]
  %v51 = vld [vmem:[%s1 + $0x60] sm:$0xf]
  %v52 = vld [vmem:[%s1 + $0x64] sm:$0xf]
  %v53 = vld [vmem:[%s1 + $0x68] sm:$0xf]
  %v54 = vld [vmem:[%s1 + $0x6c] sm:$0xf]
  %v55 = vld [vmem:[%s1 + $0x70] sm:$0xf]
  %v56 = vld [vmem:[%s1 + $0x74] sm:$0xf]
  %v57 = vld [vmem:[%s1 + $0x78] sm:$0xf]
  %v58 = vld [vmem:[%s1 + $0x7c] sm:$0xf]
  %v59 = vld [vmem:[%s1 + $0x80] sm:$0xf]
  %v60 = vld [vmem:[%s1 + $0x84] sm:$0xf]
  %v61 = vld [vmem:[%s1 + $0x88] sm:$0xf]
  %v62 = vld [vmem:[%s1 + $0x8c] sm:$0xf]
  %v63 = vld [vmem:[%s1 + $0x90] sm:$0xf]
  %v64 = vld [vmem:[%s1 + $0x94] sm:$0xf]
  %v65 = vld [vmem:[%s1 + $0x98] sm:$0xf]
  %v66 = vld [vmem:[%s1 + $0x9c] sm:$0xf]
  %v67 = vld [vmem:[%s1 + $0xa0] sm:$0xf]
  %v68 = vld [vmem:[%s1 + $0xa4] sm:$0xf]
  %v69 = vld [vmem:[%s1 + $0xa8] sm:$0xf]
  %v70 = vld [vmem:[%s1 + $0xac] sm:$0xf]
  %v71 = vld [vmem:[%s1 + $0xb0] sm:$0xf]
  %v72 = vld [vmem:[%s1 + $0xb4] sm:$0xf]
  %v73 = vld [vmem:[%s1 + $0xb8] sm:$0xf]
  %v74 = vld [vmem:[%s1 + $0xbc] sm:$0xf]
  %v75 = vld [vmem:[%s1 + $0xc0] sm:$0xf]
  %v76 = vld [vmem:[%s1 + $0xc4] sm:$0xf]
  %v77 = vld [vmem:[%s1 + $0xc8] sm:$0xf]
  %v78 = vld [vmem:[%s1 + $0xcc] sm:$0xf]
  %v79 = vld [vmem:[%s1 + $0xd0] sm:$0xf]
  %v80 = vld [vmem:[%s1 + $0xd4] sm:$0xf]
  %v81 = vld [vmem:[%s1 + $0xd8] sm:$0xf]
  %v82 = vld [vmem:[%s1 + $0xdc] sm:$0xf]
  %v83 = vld [vmem:[%s1 + $0xe0] sm:$0xf]
  %v84 = vld [vmem:[%s1 + $0xe4] sm:$0xf]
  %v85 = vld [vmem:[%s1 + $0xe8] sm:$0xf]
  %v86 = vld [vmem:[%s1 + $0xec] sm:$0xf]
  %v87 = vld [vmem:[%s1 + $0xf0] sm:$0xf]
  %v88 = vld [vmem:[%s1 + $0xf4] sm:$0xf]
  %v89 = vld [vmem:[%s1 + $0xf8] sm:$0xf]
  %v90 = vld [vmem:[%s1 + $0xfc] sm:$0xf]
  %v91 = vld [vmem:[%s1 + $0x100] sm:$0xf]
  %v92 = vld [vmem:[%s1 + $0x104] sm:$0xf]
  %v93 = vld [vmem:[%s1 + $0x108] sm:$0xf]
  %v94 = vld [vmem:[%s1 + $0x10c] sm:$0xf]
  %v95 = vld [vmem:[%s1 + $0x110] sm:$0xf]
  %v96 = vld [vmem:[%s1 + $0x114] sm:$0xf]
  %v97 = vld [vmem:[%s1 + $0x118] sm:$0xf]
  %v98 = vld [vmem:[%s1 + $0x11c] sm:$0xf]
  %v99 = vld [vmem:[%s2] sm:$0x1]
  %v101 = vlaneseq
  %v102 = vshrl.u32 %v101, 7
  %v103 = vsub.s32 0, %v102
  %v104 = vrot.slane %v99, %v103
  %v118 = vunpack.c.l.b16 %v15
  %v119 = vunpack.c.h.b16 %v15
  %v120 = vunpack.c.l.b16 %v16
  %v121 = vunpack.c.h.b16 %v16
  %v122 = vunpack.c.l.b16 %v17
  %v123 = vunpack.c.l.b16 %v18
  %v124 = vunpack.c.h.b16 %v18
  %v125 = vunpack.c.l.b16 %v19
  %v126 = vunpack.c.h.b16 %v19
  %v127 = vunpack.c.l.b16 %v20
  %v128 = vunpack.c.l.b16 %v21
  %v129 = vunpack.c.h.b16 %v21
  %v130 = vunpack.c.l.b16 %v22
  %v131 = vunpack.c.h.b16 %v22
  %v132 = vunpack.c.l.b16 %v23
  %v133 = vunpack.c.l.b16 %v24
  %v134 = vunpack.c.h.b16 %v24
  %v135 = vunpack.c.l.b16 %v25
  %v136 = vunpack.c.h.b16 %v25
  %v137 = vunpack.c.l.b16 %v26
  %v138 = vpack.c.b16 %v123, %v118
  %v139 = vpack.c.b16 %v124, %v119
  %v140 = vpack.c.b16 %v125, %v120
  %v141 = vpack.c.b16 %v126, %v121
  %v142 = vpack.c.b16 %v127, %v122
  %v143 = vpack.c.b16 %v133, %v128
  %v144 = vpack.c.b16 %v134, %v129
  %v145 = vpack.c.b16 %v135, %v130
  %v146 = vpack.c.b16 %v136, %v131
  %v147 = vpack.c.b16 %v137, %v132
  %v228 = vunpack.c.l.b16 %v27
  %v229 = vunpack.c.l.b16 %v28
  %v230 = vunpack.c.l.b16 %v29
  %v231 = vunpack.c.l.b16 %v30
  %v232 = vunpack.c.l.b16 %v31
  %v233 = vunpack.c.l.b16 %v32
  %v234 = vunpack.c.l.b16 %v33
  %v235 = vunpack.c.l.b16 %v34
  %v236 = vunpack.c.l.b16 %v35
  %v237 = vunpack.c.l.b16 %v36
  %v238 = vunpack.c.l.b16 %v37
  %v239 = vunpack.c.l.b16 %v38
  %v240 = vunpack.c.l.b16 %v39
  %v241 = vunpack.c.l.b16 %v40
  %v242 = vunpack.c.l.b16 %v41
  %v243 = vunpack.c.l.b16 %v42
  %v244 = vunpack.c.l.b16 %v43
  %v245 = vunpack.c.l.b16 %v44
  %v246 = vunpack.c.l.b16 %v45
  %v247 = vunpack.c.l.b16 %v46
  %v248 = vunpack.c.l.b16 %v47
  %v249 = vunpack.c.l.b16 %v48
  %v250 = vunpack.c.l.b16 %v49
  %v251 = vunpack.c.l.b16 %v50
  %v252 = vunpack.c.l.b16 %v51
  %v253 = vunpack.c.l.b16 %v52
  %v254 = vunpack.c.l.b16 %v53
  %v255 = vunpack.c.l.b16 %v54
  %v256 = vunpack.c.l.b16 %v55
  %v257 = vunpack.c.l.b16 %v56
  %v258 = vunpack.c.l.b16 %v57
  %v259 = vunpack.c.l.b16 %v58
  %v260 = vunpack.c.l.b16 %v59
  %v261 = vunpack.c.l.b16 %v60
  %v262 = vunpack.c.l.b16 %v61
  %v263 = vunpack.c.l.b16 %v62
  %v264 = vunpack.c.l.b16 %v63
  %v265 = vunpack.c.l.b16 %v64
  %v266 = vunpack.c.l.b16 %v65
  %v267 = vunpack.c.l.b16 %v66
  %v268 = vunpack.c.l.b16 %v67
  %v269 = vunpack.c.l.b16 %v68
  %v270 = vunpack.c.l.b16 %v69
  %v271 = vunpack.c.l.b16 %v70
  %v272 = vunpack.c.l.b16 %v71
  %v273 = vunpack.c.l.b16 %v72
  %v274 = vunpack.c.l.b16 %v73
  %v275 = vunpack.c.l.b16 %v74
  %v276 = vunpack.c.l.b16 %v75
  %v277 = vunpack.c.l.b16 %v76
  %v278 = vunpack.c.l.b16 %v77
  %v279 = vunpack.c.l.b16 %v78
  %v280 = vunpack.c.l.b16 %v79
  %v281 = vunpack.c.l.b16 %v80
  %v282 = vunpack.c.l.b16 %v81
  %v283 = vunpack.c.l.b16 %v82
  %v284 = vunpack.c.l.b16 %v83
  %v285 = vunpack.c.l.b16 %v84
  %v286 = vunpack.c.l.b16 %v85
  %v287 = vunpack.c.l.b16 %v86
  %v288 = vunpack.c.l.b16 %v87
  %v289 = vunpack.c.l.b16 %v88
  %v290 = vunpack.c.l.b16 %v89
  %v291 = vunpack.c.l.b16 %v90
  %v292 = vunpack.c.l.b16 %v91
  %v293 = vunpack.c.l.b16 %v92
  %v294 = vunpack.c.l.b16 %v93
  %v295 = vunpack.c.l.b16 %v94
  %v296 = vunpack.c.l.b16 %v95
  %v297 = vunpack.c.l.b16 %v96
  %v298 = vunpack.c.l.b16 %v97
  %v299 = vunpack.c.l.b16 %v98
  %v300 = vpack.c.b16 %v229, %v228
  %v301 = vpack.c.b16 %v231, %v230
  %v302 = vpack.c.b16 %v233, %v232
  %v303 = vpack.c.b16 %v235, %v234
  %v304 = vpack.c.b16 %v237, %v236
  %v305 = vpack.c.b16 %v239, %v238
  %v306 = vpack.c.b16 %v241, %v240
  %v307 = vpack.c.b16 %v243, %v242
  %v308 = vpack.c.b16 %v245, %v244
  %v309 = vpack.c.b16 %v247, %v246
  %v310 = vpack.c.b16 %v249, %v248
  %v311 = vpack.c.b16 %v251, %v250
  %v312 = vpack.c.b16 %v253, %v252
  %v313 = vpack.c.b16 %v255, %v254
  %v314 = vpack.c.b16 %v257, %v256
  %v315 = vpack.c.b16 %v259, %v258
  %v316 = vpack.c.b16 %v261, %v260
  %v317 = vpack.c.b16 %v263, %v262
  %v318 = vpack.c.b16 %v265, %v264
  %v319 = vpack.c.b16 %v267, %v266
  %v320 = vpack.c.b16 %v269, %v268
  %v321 = vpack.c.b16 %v271, %v270
  %v322 = vpack.c.b16 %v273, %v272
  %v323 = vpack.c.b16 %v275, %v274
  %v324 = vpack.c.b16 %v277, %v276
  %v325 = vpack.c.b16 %v279, %v278
  %v326 = vpack.c.b16 %v281, %v280
  %v327 = vpack.c.b16 %v283, %v282
  %v328 = vpack.c.b16 %v285, %v284
  %v329 = vpack.c.b16 %v287, %v286
  %v330 = vpack.c.b16 %v289, %v288
  %v331 = vpack.c.b16 %v291, %v290
  %v332 = vpack.c.b16 %v293, %v292
  %v333 = vpack.c.b16 %v295, %v294
  %v334 = vpack.c.b16 %v297, %v296
  %v335 = vpack.c.b16 %v299, %v298
  %vm372 = vcmask 523264
  %v374 = vsel %vm372, %v142, 0
  %v377 = vsel %vm372, %v147, 0
  %379 = vmatprep.subr.bf16.mxu0 0
  %380 = vmatpush1.bf16.msra.mxu0 %v300
  %381 = vmatprep.subr.bf16.mxu0 0
  %382 = vmatpush1.bf16.msra.mxu0 %v301
  %383 = vmatprep.subr.bf16.mxu0 0
  %384 = vmatpush1.bf16.msra.mxu0 %v302
  %385 = vmatprep.subr.bf16.mxu0 0
  %386 = vmatpush1.bf16.msra.mxu0 %v303
  %387 = vmatprep.subr.bf16.mxu0 0
  %388 = vmatpush1.bf16.msra.mxu0 %v304
  %389 = vmatprep.subr.bf16.mxu0 0
  %390 = vmatpush1.bf16.msra.mxu0 %v305
  %391 = vmatprep.subr.bf16.mxu0 0
  %392 = vmatpush1.bf16.msra.mxu0 %v306
  %393 = vmatprep.subr.bf16.mxu0 0
  %394 = vmatpush1.bf16.msra.mxu0 %v307
  %395 = vmatprep.subr.bf16.mxu0 0
  %396 = vmatpush1.bf16.msra.mxu0 %v308
  %397 = vmatprep.subr.bf16.mxu0 0
  %398 = vmatpush1.bf16.msra.mxu0 %v309
  %399 = vmatprep.subr.bf16.mxu0 0
  %400 = vmatpush1.bf16.msra.mxu0 %v310
  %401 = vmatprep.subr.bf16.mxu0 0
  %402 = vmatpush1.bf16.msra.mxu0 %v311
  %403 = vmatprep.subr.bf16.mxu0 0
  %404 = vmatpush1.bf16.msra.mxu0 %v312
  %405 = vmatprep.subr.bf16.mxu0 0
  %406 = vmatpush1.bf16.msra.mxu0 %v313
  %407 = vmatprep.subr.bf16.mxu0 0
  %408 = vmatpush1.bf16.msra.mxu0 %v314
  %409 = vmatprep.subr.bf16.mxu0 0
  %410 = vmatpush1.bf16.msra.mxu0 %v315
  %411 = vmatprep.mubr.bf16.mxu0 %v139
  %412 = vmatmul.mubr.bf16.gmra.mrb[0].mxu0 %v138
  %v413 = vpop.f32.mrb[0].mxu0
  %v414 = vadd.f32 %v104, %v413
  %v415 = vpop.f32.mrb[0].mxu0
  %v416 = vpop.f32.mrb[0].mxu0
  %v417 = vadd.f32 %v104, %v416
  %v418 = vpop.f32.mrb[0].mxu0
  %419 = vmatprep.mubr.bf16.mxu0 %v144
  %420 = vmatmul.mubr.bf16.gmra.mrb[0].mxu0 %v143
  %v421 = vpop.f32.mrb[0].mxu0
  %v422 = vadd.f32 %v104, %v421
  %v423 = vpop.f32.mrb[0].mxu0
  %v424 = vpop.f32.mrb[0].mxu0
  %v425 = vadd.f32 %v104, %v424
  %v426 = vpop.f32.mrb[0].mxu0
  %427 = vdwg.mxu0
  %428 = vmatprep.subr.bf16.mxu0 0
  %429 = vmatpush1.bf16.msra.mxu0 %v316
  %430 = vmatprep.subr.bf16.mxu0 0
  %431 = vmatpush1.bf16.msra.mxu0 %v317
  %432 = vmatprep.subr.bf16.mxu0 0
  %433 = vmatpush1.bf16.msra.mxu0 %v318
  %434 = vmatprep.subr.bf16.mxu0 0
  %435 = vmatpush1.bf16.msra.mxu0 %v319
  %436 = vmatprep.subr.bf16.mxu0 0
  %437 = vmatpush1.bf16.msra.mxu0 %v320
  %438 = vmatprep.subr.bf16.mxu0 0
  %439 = vmatpush1.bf16.msra.mxu0 %v321
  %440 = vmatprep.subr.bf16.mxu0 0
  %441 = vmatpush1.bf16.msra.mxu0 %v322
  %442 = vmatprep.subr.bf16.mxu0 0
  %443 = vmatpush1.bf16.msra.mxu0 %v323
  %444 = vmatprep.subr.bf16.mxu0 0
  %445 = vmatpush1.bf16.msra.mxu0 %v324
  %446 = vmatprep.subr.bf16.mxu0 0
  %447 = vmatpush1.bf16.msra.mxu0 %v325
  %448 = vmatprep.subr.bf16.mxu0 0
  %449 = vmatpush1.bf16.msra.mxu0 %v326
  %450 = vmatprep.subr.bf16.mxu0 0
  %451 = vmatpush1.bf16.msra.mxu0 %v327
  %452 = vmatprep.subr.bf16.mxu0 0
  %453 = vmatpush1.bf16.msra.mxu0 %v328
  %454 = vmatprep.subr.bf16.mxu0 0
  %455 = vmatpush1.bf16.msra.mxu0 %v329
  %456 = vmatprep.subr.bf16.mxu0 0
  %457 = vmatpush1.bf16.msra.mxu0 %v330
  %458 = vmatprep.subr.bf16.mxu0 0
  %459 = vmatpush1.bf16.msra.mxu0 %v331
  %460 = vmatprep.mubr.bf16.mxu0 %v141
  %461 = vmatmul.mubr.bf16.gmra.mrb[0].mxu0 %v140
  %v462 = vpop.f32.mrb[0].mxu0
  %v463 = vadd.f32 %v414, %v462
  %v464 = vpop.f32.mrb[0].mxu0
  %v465 = vpop.f32.mrb[0].mxu0
  %v466 = vadd.f32 %v417, %v465
  %v467 = vpop.f32.mrb[0].mxu0
  %468 = vmatprep.mubr.bf16.mxu0 %v146
  %469 = vmatmul.mubr.bf16.gmra.mrb[0].mxu0 %v145
  %v470 = vpop.f32.mrb[0].mxu0
  %v471 = vadd.f32 %v422, %v470
  %v472 = vpop.f32.mrb[0].mxu0
  %v473 = vpop.f32.mrb[0].mxu0
  %v474 = vadd.f32 %v425, %v473
  %v475 = vpop.f32.mrb[0].mxu0
  %476 = vdwg.mxu0
  %477 = vmatprep.subr.bf16.mxu0 0
  %478 = vmatpush1.bf16.msra.mxu0 %v332
  %479 = vmatprep.subr.bf16.mxu0 0
  %480 = vmatpush1.bf16.msra.mxu0 %v333
  %481 = vmatprep.subr.bf16.mxu0 0
  %482 = vmatpush1.bf16.msra.mxu0 %v334
  %483 = vmatprep.subr.bf16.mxu0 0
  %484 = vmatpush1.bf16.msra.mxu0 %v335
  %485 = vmatprep.subr.bf16.mxu0 0
  %486 = vmatpush1.bf16.msra.mxu0 0
  %487 = vmatprep.subr.bf16.mxu0 0
  %488 = vmatpush1.bf16.msra.mxu0 0
  %489 = vmatprep.subr.bf16.mxu0 0
  %490 = vmatpush1.bf16.msra.mxu0 0
  %491 = vmatprep.subr.bf16.mxu0 0
  %492 = vmatpush1.bf16.msra.mxu0 0
  %493 = vmatprep.subr.bf16.mxu0 0
  %494 = vmatpush1.bf16.msra.mxu0 0
  %495 = vmatprep.subr.bf16.mxu0 0
  %496 = vmatpush1.bf16.msra.mxu0 0
  %497 = vmatprep.subr.bf16.mxu0 0
  %498 = vmatpush1.bf16.msra.mxu0 0
  %499 = vmatprep.subr.bf16.mxu0 0
  %500 = vmatpush1.bf16.msra.mxu0 0
  %501 = vmatprep.subr.bf16.mxu0 0
  %502 = vmatpush1.bf16.msra.mxu0 0
  %503 = vmatprep.subr.bf16.mxu0 0
  %504 = vmatpush1.bf16.msra.mxu0 0
  %505 = vmatprep.subr.bf16.mxu0 0
  %506 = vmatpush1.bf16.msra.mxu0 0
  %507 = vmatprep.subr.bf16.mxu0 0
  %508 = vmatpush1.bf16.msra.mxu0 0
  %509 = vmatprep.mubr.bf16.mxu0 0
  %510 = vmatmul.mubr.bf16.gmra.mrb[0].mxu0 %v374
  %v511 = vpop.f32.mrb[0].mxu0
  %v512 = vadd.f32 %v463, %v511
  %v513 = vpop.f32.mrb[0].mxu0
  %v514 = vpop.f32.mrb[0].mxu0
  %v515 = vadd.f32 %v466, %v514
  %v516 = vpop.f32.mrb[0].mxu0
  %517 = vmatprep.mubr.bf16.mxu0 0
  %518 = vmatmul.mubr.bf16.gmra.mrb[0].mxu0 %v377
  %v519 = vpop.f32.mrb[0].mxu0
  %v520 = vadd.f32 %v471, %v519
  %v521 = vpop.f32.mrb[0].mxu0
  %v522 = vpop.f32.mrb[0].mxu0
  %v523 = vadd.f32 %v474, %v522
  %v524 = vpop.f32.mrb[0].mxu0
  %525 = vdwg.mxu0
  %v526 = vlaneseq
  %v527 = vand.u32 %v526, 127
  %vm528 = vcmp.lt.s32.totalorder %v527, 64
  %v529 = vmax.f32 %v512, 0.0
  %v530 = vmax.f32 %v515, 0.0
  %v531 = vmax.f32 %v520, 0.0
  %v532 = vmax.f32 %v523, 0.0
  %v533 = vsel %vm528, %v529, %v512
  %v534 = vsel %vm528, %v530, %v515
  %v535 = vsel %vm528, %v531, %v520
  %v536 = vsel %vm528, %v532, %v523
  %v537 = vpack.c.bf16 %v534, %v533
  %v538 = vpack.c.bf16 %v536, %v535
  %v541 = vunpack.c.l.b16 %v537
  %v542 = vunpack.c.h.b16 %v537
  %v543 = vunpack.c.l.b16 %v538
  %v544 = vunpack.c.h.b16 %v538
  %v545 = vpack.c.b16 %v541, %v541
  %v546 = vpack.c.b16 %v542, %v542
  %v547 = vpack.c.b16 %v543, %v543
  %v548 = vpack.c.b16 %v544, %v544
  %553 = vst [vmem:[%s3] sm:$0xf] %v545
  %554 = vst [vmem:[%s3 + $0x4] sm:$0xf] %v546
  %555 = vst [vmem:[%s3 + $0x8] sm:$0xf] %v547
  %556 = vst [vmem:[%s3 + $0xc] sm:$0xf] %v548
  // Predicated region
  $region14: #{fcn_forward.10} parent=0 // pred_check
    _
  $region15: #{fcn_forward.10} parent=0 // pred_check_branch
    %558 = sbr.rel (0) target = $region17
  $region16: #{fcn_forward.10} parent=0 // pred_region
    _
  $region17: #{fcn_forward.10} parent=0 // pred_fallthru
    _
  // Predicated region
  $region18: #{fcn_forward.10} parent=0 // pred_check
    _
  $region19: #{fcn_forward.10} parent=0 // pred_check_branch
    %560 = sbr.rel (0) target = $region21
  $region20: #{fcn_forward.10} parent=0 // pred_region
    _
  $region21: #{fcn_forward.10} parent=0 // pred_fallthru
    _

// kernel: fcn_forward.11
$region0: #{fcn_forward.11}
  #allocation0 [shape = 'u32[]', space=smem, size = 0x4, offset = 0x4, fixed_abs, tag = 'smem constant byte address 0x4 - core index']
  #allocation1 [shape = 'u32[144,128]{1,0:T(1,128)}', space=vmem, size = 0x12000, scoped, tag = 'internal scratch']
  %s0 = inlined_call_operand.vmem [shape: bf16[32,576], index: 0, kind: input, shape index: {}]
  %s1 = inlined_call_operand.vmem [shape: bf16[576,64], index: 1, kind: input, shape index: {}]
  %s2 = inlined_call_operand.vmem [shape: f32[1,64], index: 2, kind: input, shape index: {}]
  %s3 = inlined_call_operand.vmem [shape: bf16[32,64], index: 3, kind: input, shape index: {}, may-alias: {3,4}]
  %s4 = inlined_call_operand.vmem [shape: bf16[32,64], index: 4, kind: output, shape index: {}, may-alias: {3,4}]
  %s5 = sld [smem:[#allocation0]]
  $region26: #{fcn_forward.11} parent=0
    _
  %s7 = ssub.s32 1, %s5
  %s8 = scalar_select 0, %s7, %s5
  // Predicated region
  $region2: #{fcn_forward.11} parent=0 // pred_check
    _
  $region3: #{fcn_forward.11} parent=0 // pred_check_branch
    %10 = sbr.rel (0) target = $region5
  $region4: #{fcn_forward.11} parent=0 // pred_region
    _
  $region5: #{fcn_forward.11} parent=0 // pred_fallthru
    _
  // Predicated region
  $region6: #{fcn_forward.11} parent=0 // pred_check
    _
  $region7: #{fcn_forward.11} parent=0 // pred_check_branch
    %12 = sbr.rel (0) target = $region9
  $region8: #{fcn_forward.11} parent=0 // pred_region
    _
  $region9: #{fcn_forward.11} parent=0 // pred_fallthru
    _
  // Predicated region
  $region10: #{fcn_forward.11} parent=0 // pred_check
    _
  $region11: #{fcn_forward.11} parent=0 // pred_check_branch
    %14 = sbr.rel (0) target = $region13
  $region12: #{fcn_forward.11} parent=0 // pred_region
    _
  $region13: #{fcn_forward.11} parent=0 // pred_fallthru
    _
  // Predicated region
  $region14: #{fcn_forward.11} parent=0 // pred_check
    _
  $region15: #{fcn_forward.11} parent=0 // pred_check_branch
    %16 = sbr.rel (0) target = $region17
  $region16: #{fcn_forward.11} parent=0 // pred_region
    _
  $region17: #{fcn_forward.11} parent=0 // pred_fallthru
    _
  %v18 = vld [vmem:[%s0] sm:$0xff]
  %v19 = vld [vmem:[%s0 + $0x8] sm:$0xff]
  %v20 = vld [vmem:[%s0 + $0x10] sm:$0xf]
  %v21 = vld [vmem:[%s0 + $0x14] sm:$0xff]
  %v22 = vld [vmem:[%s0 + $0x1c] sm:$0xff]
  %v23 = vld [vmem:[%s0 + $0x24] sm:$0xf]
  %v24 = vld [vmem:[%s0 + $0x28] sm:$0xff]
  %v25 = vld [vmem:[%s0 + $0x30] sm:$0xff]
  %v26 = vld [vmem:[%s0 + $0x38] sm:$0xf]
  %v27 = vld [vmem:[%s0 + $0x3c] sm:$0xff]
  %v28 = vld [vmem:[%s0 + $0x44] sm:$0xff]
  %v29 = vld [vmem:[%s0 + $0x4c] sm:$0xf]
  %v30 = vld [vmem:[%s1] sm:$0xf]
  %v31 = vld [vmem:[%s1 + $0x4] sm:$0xf]
  %v32 = vld [vmem:[%s1 + $0x8] sm:$0xf]
  %v33 = vld [vmem:[%s1 + $0xc] sm:$0xf]
  %v34 = vld [vmem:[%s1 + $0x10] sm:$0xf]
  %v35 = vld [vmem:[%s1 + $0x14] sm:$0xf]
  %v36 = vld [vmem:[%s1 + $0x18] sm:$0xf]
  %v37 = vld [vmem:[%s1 + $0x1c] sm:$0xf]
  %v38 = vld [vmem:[%s1 + $0x20] sm:$0xf]
  %v39 = vld [vmem:[%s1 + $0x24] sm:$0xf]
  %v40 = vld [vmem:[%s1 + $0x28] sm:$0xf]
  %v41 = vld [vmem:[%s1 + $0x2c] sm:$0xf]
  %v42 = vld [vmem:[%s1 + $0x30] sm:$0xf]
  %v43 = vld [vmem:[%s1 + $0x34] sm:$0xf]
  %v44 = vld [vmem:[%s1 + $0x38] sm:$0xf]
  %v45 = vld [vmem:[%s1 + $0x3c] sm:$0xf]
  %v46 = vld [vmem:[%s1 + $0x40] sm:$0xf]
  %v47 = vld [vmem:[%s1 + $0x44] sm:$0xf]
  %v48 = vld [vmem:[%s1 + $0x48] sm:$0xf]
  %v49 = vld [vmem:[%s1 + $0x4c] sm:$0xf]
  %v50 = vld [vmem:[%s1 + $0x50] sm:$0xf]
  %v51 = vld [vmem:[%s1 + $0x54] sm:$0xf]
  %v52 = vld [vmem:[%s1 + $0x58] sm:$0xf]
  %v53 = vld [vmem:[%s1 + $0x5c] sm:$0xf]
  %v54 = vld [vmem:[%s1 + $0x60] sm:$0xf]
  %v55 = vld [vmem:[%s1 + $0x64] sm:$0xf]
  %v56 = vld [vmem:[%s1 + $0x68] sm:$0xf]
  %v57 = vld [vmem:[%s1 + $0x6c] sm:$0xf]
  %v58 = vld [vmem:[%s1 + $0x70] sm:$0xf]
  %v59 = vld [vmem:[%s1 + $0x74] sm:$0xf]
  %v60 = vld [vmem:[%s1 + $0x78] sm:$0xf]
  %v61 = vld [vmem:[%s1 + $0x7c] sm:$0xf]
  %v62 = vld [vmem:[%s1 + $0x80] sm:$0xf]
  %v63 = vld [vmem:[%s1 + $0x84] sm:$0xf]
  %v64 = vld [vmem:[%s1 + $0x88] sm:$0xf]
  %v65 = vld [vmem:[%s1 + $0x8c] sm:$0xf]
  %v66 = vld [vmem:[%s1 + $0x90] sm:$0xf]
  %v67 = vld [vmem:[%s1 + $0x94] sm:$0xf]
  %v68 = vld [vmem:[%s1 + $0x98] sm:$0xf]
  %v69 = vld [vmem:[%s1 + $0x9c] sm:$0xf]
  %v70 = vld [vmem:[%s1 + $0xa0] sm:$0xf]
  %v71 = vld [vmem:[%s1 + $0xa4] sm:$0xf]
  %v72 = vld [vmem:[%s1 + $0xa8] sm:$0xf]
  %v73 = vld [vmem:[%s1 + $0xac] sm:$0xf]
  %v74 = vld [vmem:[%s1 + $0xb0] sm:$0xf]
  %v75 = vld [vmem:[%s1 + $0xb4] sm:$0xf]
  %v76 = vld [vmem:[%s1 + $0xb8] sm:$0xf]
  %v77 = vld [vmem:[%s1 + $0xbc] sm:$0xf]
  %v78 = vld [vmem:[%s1 + $0xc0] sm:$0xf]
  %v79 = vld [vmem:[%s1 + $0xc4] sm:$0xf]
  %v80 = vld [vmem:[%s1 + $0xc8] sm:$0xf]
  %v81 = vld [vmem:[%s1 + $0xcc] sm:$0xf]
  %v82 = vld [vmem:[%s1 + $0xd0] sm:$0xf]
  %v83 = vld [vmem:[%s1 + $0xd4] sm:$0xf]
  %v84 = vld [vmem:[%s1 + $0xd8] sm:$0xf]
  %v85 = vld [vmem:[%s1 + $0xdc] sm:$0xf]
  %v86 = vld [vmem:[%s1 + $0xe0] sm:$0xf]
  %v87 = vld [vmem:[%s1 + $0xe4] sm:$0xf]
  %v88 = vld [vmem:[%s1 + $0xe8] sm:$0xf]
  %v89 = vld [vmem:[%s1 + $0xec] sm:$0xf]
  %v90 = vld [vmem:[%s1 + $0xf0] sm:$0xf]
  %v91 = vld [vmem:[%s1 + $0xf4] sm:$0xf]
  %v92 = vld [vmem:[%s1 + $0xf8] sm:$0xf]
  %v93 = vld [vmem:[%s1 + $0xfc] sm:$0xf]
  %v94 = vld [vmem:[%s1 + $0x100] sm:$0xf]
  %v95 = vld [vmem:[%s1 + $0x104] sm:$0xf]
  %v96 = vld [vmem:[%s1 + $0x108] sm:$0xf]
  %v97 = vld [vmem:[%s1 + $0x10c] sm:$0xf]
  %v98 = vld [vmem:[%s1 + $0x110] sm:$0xf]
  %v99 = vld [vmem:[%s1 + $0x114] sm:$0xf]
  %v100 = vld [vmem:[%s1 + $0x118] sm:$0xf]
  %v101 = vld [vmem:[%s1 + $0x11c] sm:$0xf]
  %v102 = vld [vmem:[%s2] sm:$0x1]
  %v104 = vlaneseq
  %v105 = vshrl.u32 %v104, 7
  %v106 = vsub.s32 0, %v105
  %v107 = vrot.slane %v102, %v106
  %v121 = vunpack.c.l.b16 %v18
  %v122 = vunpack.c.h.b16 %v18
  %v123 = vunpack.c.l.b16 %v19
  %v124 = vunpack.c.h.b16 %v19
  %v125 = vunpack.c.l.b16 %v20
  %v126 = vunpack.c.l.b16 %v21
  %v127 = vunpack.c.h.b16 %v21
  %v128 = vunpack.c.l.b16 %v22
  %v129 = vunpack.c.h.b16 %v22
  %v130 = vunpack.c.l.b16 %v23
  %v131 = vunpack.c.l.b16 %v24
  %v132 = vunpack.c.h.b16 %v24
  %v133 = vunpack.c.l.b16 %v25
  %v134 = vunpack.c.h.b16 %v25
  %v135 = vunpack.c.l.b16 %v26
  %v136 = vunpack.c.l.b16 %v27
  %v137 = vunpack.c.h.b16 %v27
  %v138 = vunpack.c.l.b16 %v28
  %v139 = vunpack.c.h.b16 %v28
  %v140 = vunpack.c.l.b16 %v29
  %v141 = vpack.c.b16 %v126, %v121
  %v142 = vpack.c.b16 %v127, %v122
  %v143 = vpack.c.b16 %v128, %v123
  %v144 = vpack.c.b16 %v129, %v124
  %v145 = vpack.c.b16 %v130, %v125
  %v146 = vpack.c.b16 %v136, %v131
  %v147 = vpack.c.b16 %v137, %v132
  %v148 = vpack.c.b16 %v138, %v133
  %v149 = vpack.c.b16 %v139, %v134
  %v150 = vpack.c.b16 %v140, %v135
  %v231 = vunpack.c.l.b16 %v30
  %v232 = vunpack.c.l.b16 %v31
  %v233 = vunpack.c.l.b16 %v32
  %v234 = vunpack.c.l.b16 %v33
  %v235 = vunpack.c.l.b16 %v34
  %v236 = vunpack.c.l.b16 %v35
  %v237 = vunpack.c.l.b16 %v36
  %v238 = vunpack.c.l.b16 %v37
  %v239 = vunpack.c.l.b16 %v38
  %v240 = vunpack.c.l.b16 %v39
  %v241 = vunpack.c.l.b16 %v40
  %v242 = vunpack.c.l.b16 %v41
  %v243 = vunpack.c.l.b16 %v42
  %v244 = vunpack.c.l.b16 %v43
  %v245 = vunpack.c.l.b16 %v44
  %v246 = vunpack.c.l.b16 %v45
  %v247 = vunpack.c.l.b16 %v46
  %v248 = vunpack.c.l.b16 %v47
  %v249 = vunpack.c.l.b16 %v48
  %v250 = vunpack.c.l.b16 %v49
  %v251 = vunpack.c.l.b16 %v50
  %v252 = vunpack.c.l.b16 %v51
  %v253 = vunpack.c.l.b16 %v52
  %v254 = vunpack.c.l.b16 %v53
  %v255 = vunpack.c.l.b16 %v54
  %v256 = vunpack.c.l.b16 %v55
  %v257 = vunpack.c.l.b16 %v56
  %v258 = vunpack.c.l.b16 %v57
  %v259 = vunpack.c.l.b16 %v58
  %v260 = vunpack.c.l.b16 %v59
  %v261 = vunpack.c.l.b16 %v60
  %v262 = vunpack.c.l.b16 %v61
  %v263 = vunpack.c.l.b16 %v62
  %v264 = vunpack.c.l.b16 %v63
  %v265 = vunpack.c.l.b16 %v64
  %v266 = vunpack.c.l.b16 %v65
  %v267 = vunpack.c.l.b16 %v66
  %v268 = vunpack.c.l.b16 %v67
  %v269 = vunpack.c.l.b16 %v68
  %v270 = vunpack.c.l.b16 %v69
  %v271 = vunpack.c.l.b16 %v70
  %v272 = vunpack.c.l.b16 %v71
  %v273 = vunpack.c.l.b16 %v72
  %v274 = vunpack.c.l.b16 %v73
  %v275 = vunpack.c.l.b16 %v74
  %v276 = vunpack.c.l.b16 %v75
  %v277 = vunpack.c.l.b16 %v76
  %v278 = vunpack.c.l.b16 %v77
  %v279 = vunpack.c.l.b16 %v78
  %v280 = vunpack.c.l.b16 %v79
  %v281 = vunpack.c.l.b16 %v80
  %v282 = vunpack.c.l.b16 %v81
  %v283 = vunpack.c.l.b16 %v82
  %v284 = vunpack.c.l.b16 %v83
  %v285 = vunpack.c.l.b16 %v84
  %v286 = vunpack.c.l.b16 %v85
  %v287 = vunpack.c.l.b16 %v86
  %v288 = vunpack.c.l.b16 %v87
  %v289 = vunpack.c.l.b16 %v88
  %v290 = vunpack.c.l.b16 %v89
  %v291 = vunpack.c.l.b16 %v90
  %v292 = vunpack.c.l.b16 %v91
  %v293 = vunpack.c.l.b16 %v92
  %v294 = vunpack.c.l.b16 %v93
  %v295 = vunpack.c.l.b16 %v94
  %v296 = vunpack.c.l.b16 %v95
  %v297 = vunpack.c.l.b16 %v96
  %v298 = vunpack.c.l.b16 %v97
  %v299 = vunpack.c.l.b16 %v98
  %v300 = vunpack.c.l.b16 %v99
  %v301 = vunpack.c.l.b16 %v100
  %v302 = vunpack.c.l.b16 %v101
  %v303 = vpack.c.b16 %v232, %v231
  %v304 = vpack.c.b16 %v234, %v233
  %v305 = vpack.c.b16 %v236, %v235
  %v306 = vpack.c.b16 %v238, %v237
  %v307 = vpack.c.b16 %v240, %v239
  %v308 = vpack.c.b16 %v242, %v241
  %v309 = vpack.c.b16 %v244, %v243
  %v310 = vpack.c.b16 %v246, %v245
  %v311 = vpack.c.b16 %v248, %v247
  %v312 = vpack.c.b16 %v250, %v249
  %v313 = vpack.c.b16 %v252, %v251
  %v314 = vpack.c.b16 %v254, %v253
  %v315 = vpack.c.b16 %v256, %v255
  %v316 = vpack.c.b16 %v258, %v257
  %v317 = vpack.c.b16 %v260, %v259
  %v318 = vpack.c.b16 %v262, %v261
  %v319 = vpack.c.b16 %v264, %v263
  %v320 = vpack.c.b16 %v266, %v265
  %v321 = vpack.c.b16 %v268, %v267
  %v322 = vpack.c.b16 %v270, %v269
  %v323 = vpack.c.b16 %v272, %v271
  %v324 = vpack.c.b16 %v274, %v273
  %v325 = vpack.c.b16 %v276, %v275
  %v326 = vpack.c.b16 %v278, %v277
  %v327 = vpack.c.b16 %v280, %v279
  %v328 = vpack.c.b16 %v282, %v281
  %v329 = vpack.c.b16 %v284, %v283
  %v330 = vpack.c.b16 %v286, %v285
  %v331 = vpack.c.b16 %v288, %v287
  %v332 = vpack.c.b16 %v290, %v289
  %v333 = vpack.c.b16 %v292, %v291
  %v334 = vpack.c.b16 %v294, %v293
  %v335 = vpack.c.b16 %v296, %v295
  %v336 = vpack.c.b16 %v298, %v297
  %v337 = vpack.c.b16 %v300, %v299
  %v338 = vpack.c.b16 %v302, %v301
  %vm375 = vcmask 523264
  %v377 = vsel %vm375, %v145, 0
  %v380 = vsel %vm375, %v150, 0
  %382 = vmatprep.subr.bf16.mxu0 0
  %383 = vmatpush1.bf16.msra.mxu0 %v303
  %384 = vmatprep.subr.bf16.mxu0 0
  %385 = vmatpush1.bf16.msra.mxu0 %v304
  %386 = vmatprep.subr.bf16.mxu0 0
  %387 = vmatpush1.bf16.msra.mxu0 %v305
  %388 = vmatprep.subr.bf16.mxu0 0
  %389 = vmatpush1.bf16.msra.mxu0 %v306
  %390 = vmatprep.subr.bf16.mxu0 0
  %391 = vmatpush1.bf16.msra.mxu0 %v307
  %392 = vmatprep.subr.bf16.mxu0 0
  %393 = vmatpush1.bf16.msra.mxu0 %v308
  %394 = vmatprep.subr.bf16.mxu0 0
  %395 = vmatpush1.bf16.msra.mxu0 %v309
  %396 = vmatprep.subr.bf16.mxu0 0
  %397 = vmatpush1.bf16.msra.mxu0 %v310
  %398 = vmatprep.subr.bf16.mxu0 0
  %399 = vmatpush1.bf16.msra.mxu0 %v311
  %400 = vmatprep.subr.bf16.mxu0 0
  %401 = vmatpush1.bf16.msra.mxu0 %v312
  %402 = vmatprep.subr.bf16.mxu0 0
  %403 = vmatpush1.bf16.msra.mxu0 %v313
  %404 = vmatprep.subr.bf16.mxu0 0
  %405 = vmatpush1.bf16.msra.mxu0 %v314
  %406 = vmatprep.subr.bf16.mxu0 0
  %407 = vmatpush1.bf16.msra.mxu0 %v315
  %408 = vmatprep.subr.bf16.mxu0 0
  %409 = vmatpush1.bf16.msra.mxu0 %v316
  %410 = vmatprep.subr.bf16.mxu0 0
  %411 = vmatpush1.bf16.msra.mxu0 %v317
  %412 = vmatprep.subr.bf16.mxu0 0
  %413 = vmatpush1.bf16.msra.mxu0 %v318
  %414 = vmatprep.mubr.bf16.mxu0 %v142
  %415 = vmatmul.mubr.bf16.gmra.mrb[0].mxu0 %v141
  %v416 = vpop.f32.mrb[0].mxu0
  %v417 = vadd.f32 %v107, %v416
  %v418 = vpop.f32.mrb[0].mxu0
  %v419 = vpop.f32.mrb[0].mxu0
  %v420 = vadd.f32 %v107, %v419
  %v421 = vpop.f32.mrb[0].mxu0
  %422 = vmatprep.mubr.bf16.mxu0 %v147
  %423 = vmatmul.mubr.bf16.gmra.mrb[0].mxu0 %v146
  %v424 = vpop.f32.mrb[0].mxu0
  %v425 = vadd.f32 %v107, %v424
  %v426 = vpop.f32.mrb[0].mxu0
  %v427 = vpop.f32.mrb[0].mxu0
  %v428 = vadd.f32 %v107, %v427
  %v429 = vpop.f32.mrb[0].mxu0
  %430 = vdwg.mxu0
  %431 = vmatprep.subr.bf16.mxu0 0
  %432 = vmatpush1.bf16.msra.mxu0 %v319
  %433 = vmatprep.subr.bf16.mxu0 0
  %434 = vmatpush1.bf16.msra.mxu0 %v320
  %435 = vmatprep.subr.bf16.mxu0 0
  %436 = vmatpush1.bf16.msra.mxu0 %v321
  %437 = vmatprep.subr.bf16.mxu0 0
  %438 = vmatpush1.bf16.msra.mxu0 %v322
  %439 = vmatprep.subr.bf16.mxu0 0
  %440 = vmatpush1.bf16.msra.mxu0 %v323
  %441 = vmatprep.subr.bf16.mxu0 0
  %442 = vmatpush1.bf16.msra.mxu0 %v324
  %443 = vmatprep.subr.bf16.mxu0 0
  %444 = vmatpush1.bf16.msra.mxu0 %v325
  %445 = vmatprep.subr.bf16.mxu0 0
  %446 = vmatpush1.bf16.msra.mxu0 %v326
  %447 = vmatprep.subr.bf16.mxu0 0
  %448 = vmatpush1.bf16.msra.mxu0 %v327
  %449 = vmatprep.subr.bf16.mxu0 0
  %450 = vmatpush1.bf16.msra.mxu0 %v328
  %451 = vmatprep.subr.bf16.mxu0 0
  %452 = vmatpush1.bf16.msra.mxu0 %v329
  %453 = vmatprep.subr.bf16.mxu0 0
  %454 = vmatpush1.bf16.msra.mxu0 %v330
  %455 = vmatprep.subr.bf16.mxu0 0
  %456 = vmatpush1.bf16.msra.mxu0 %v331
  %457 = vmatprep.subr.bf16.mxu0 0
  %458 = vmatpush1.bf16.msra.mxu0 %v332
  %459 = vmatprep.subr.bf16.mxu0 0
  %460 = vmatpush1.bf16.msra.mxu0 %v333
  %461 = vmatprep.subr.bf16.mxu0 0
  %462 = vmatpush1.bf16.msra.mxu0 %v334
  %463 = vmatprep.mubr.bf16.mxu0 %v144
  %464 = vmatmul.mubr.bf16.gmra.mrb[0].mxu0 %v143
  %v465 = vpop.f32.mrb[0].mxu0
  %v466 = vadd.f32 %v417, %v465
  %v467 = vpop.f32.mrb[0].mxu0
  %v468 = vpop.f32.mrb[0].mxu0
  %v469 = vadd.f32 %v420, %v468
  %v470 = vpop.f32.mrb[0].mxu0
  %471 = vmatprep.mubr.bf16.mxu0 %v149
  %472 = vmatmul.mubr.bf16.gmra.mrb[0].mxu0 %v148
  %v473 = vpop.f32.mrb[0].mxu0
  %v474 = vadd.f32 %v425, %v473
  %v475 = vpop.f32.mrb[0].mxu0
  %v476 = vpop.f32.mrb[0].mxu0
  %v477 = vadd.f32 %v428, %v476
  %v478 = vpop.f32.mrb[0].mxu0
  %479 = vdwg.mxu0
  %480 = vmatprep.subr.bf16.mxu0 0
  %481 = vmatpush1.bf16.msra.mxu0 %v335
  %482 = vmatprep.subr.bf16.mxu0 0
  %483 = vmatpush1.bf16.msra.mxu0 %v336
  %484 = vmatprep.subr.bf16.mxu0 0
  %485 = vmatpush1.bf16.msra.mxu0 %v337
  %486 = vmatprep.subr.bf16.mxu0 0
  %487 = vmatpush1.bf16.msra.mxu0 %v338
  %488 = vmatprep.subr.bf16.mxu0 0
  %489 = vmatpush1.bf16.msra.mxu0 0
  %490 = vmatprep.subr.bf16.mxu0 0
  %491 = vmatpush1.bf16.msra.mxu0 0
  %492 = vmatprep.subr.bf16.mxu0 0
  %493 = vmatpush1.bf16.msra.mxu0 0
  %494 = vmatprep.subr.bf16.mxu0 0
  %495 = vmatpush1.bf16.msra.mxu0 0
  %496 = vmatprep.subr.bf16.mxu0 0
  %497 = vmatpush1.bf16.msra.mxu0 0
  %498 = vmatprep.subr.bf16.mxu0 0
  %499 = vmatpush1.bf16.msra.mxu0 0
  %500 = vmatprep.subr.bf16.mxu0 0
  %501 = vmatpush1.bf16.msra.mxu0 0
  %502 = vmatprep.subr.bf16.mxu0 0
  %503 = vmatpush1.bf16.msra.mxu0 0
  %504 = vmatprep.subr.bf16.mxu0 0
  %505 = vmatpush1.bf16.msra.mxu0 0
  %506 = vmatprep.subr.bf16.mxu0 0
  %507 = vmatpush1.bf16.msra.mxu0 0
  %508 = vmatprep.subr.bf16.mxu0 0
  %509 = vmatpush1.bf16.msra.mxu0 0
  %510 = vmatprep.subr.bf16.mxu0 0
  %511 = vmatpush1.bf16.msra.mxu0 0
  %512 = vmatprep.mubr.bf16.mxu0 0
  %513 = vmatmul.mubr.bf16.gmra.mrb[0].mxu0 %v377
  %v514 = vpop.f32.mrb[0].mxu0
  %v515 = vadd.f32 %v466, %v514
  %v516 = vpop.f32.mrb[0].mxu0
  %v517 = vpop.f32.mrb[0].mxu0
  %v518 = vadd.f32 %v469, %v517
  %v519 = vpop.f32.mrb[0].mxu0
  %520 = vmatprep.mubr.bf16.mxu0 0
  %521 = vmatmul.mubr.bf16.gmra.mrb[0].mxu0 %v380
  %v522 = vpop.f32.mrb[0].mxu0
  %v523 = vadd.f32 %v474, %v522
  %v524 = vpop.f32.mrb[0].mxu0
  %v525 = vpop.f32.mrb[0].mxu0
  %v526 = vadd.f32 %v477, %v525
  %v527 = vpop.f32.mrb[0].mxu0
  %528 = vdwg.mxu0
  %v529 = vmax.f32 %v515, 0.0
  %v530 = vmax.f32 %v518, 0.0
  %v531 = vmax.f32 %v523, 0.0
  %v532 = vmax.f32 %v526, 0.0
  %v533 = vld [vmem:[%s3] sm:$0xf]
  %v534 = vld [vmem:[%s3 + $0x4] sm:$0xf]
  %v535 = vld [vmem:[%s3 + $0x8] sm:$0xf]
  %v536 = vld [vmem:[%s3 + $0xc] sm:$0xf]
  %v537 = vunpack.c.l.bf16 %v533
  %v538 = vunpack.c.l.bf16 %v534
  %v539 = vunpack.c.l.bf16 %v535
  %v540 = vunpack.c.l.bf16 %v536
  %v541 = vadd.f32 %v529, %v537
  %v542 = vadd.f32 %v530, %v538
  %v543 = vadd.f32 %v531, %v539
  %v544 = vadd.f32 %v532, %v540
  %v545 = vpack.c.bf16 %v542, %v541
  %v546 = vpack.c.bf16 %v544, %v543
  %v549 = vunpack.c.l.b16 %v545
  %v550 = vunpack.c.h.b16 %v545
  %v551 = vunpack.c.l.b16 %v546
  %v552 = vunpack.c.h.b16 %v546
  %v553 = vpack.c.b16 %v549, %v549
  %v554 = vpack.c.b16 %v550, %v550
  %v555 = vpack.c.b16 %v551, %v551
  %v556 = vpack.c.b16 %v552, %v552
  %vm561 = vcmask 519168
  %562 = vst.msk [vmem:[%s4] sm:$0xf] %vm561, %v553
  %563 = vst.msk [vmem:[%s4 + $0x4] sm:$0xf] %vm561, %v554
  %564 = vst.msk [vmem:[%s4 + $0x8] sm:$0xf] %vm561, %v555
  %565 = vst.msk [vmem:[%s4 + $0xc] sm:$0xf] %vm561, %v556
  // Predicated region
  $region18: #{fcn_forward.11} parent=0 // pred_check
    _
  $region19: #{fcn_forward.11} parent=0 // pred_check_branch
    %567 = sbr.rel (0) target = $region21
  $region20: #{fcn_forward.11} parent=0 // pred_region
    _
  $region21: #{fcn_forward.11} parent=0 // pred_fallthru
    _
  // Predicated region
  $region22: #{fcn_forward.11} parent=0 // pred_check
    _
  $region23: #{fcn_forward.11} parent=0 // pred_check_branch
    %569 = sbr.rel (0) target = $region25
  $region24: #{fcn_forward.11} parent=0 // pred_region
    _
  $region25: #{fcn_forward.11} parent=0 // pred_fallthru
    _

// kernel: fcn_forward.12
$region0: #{fcn_forward.12}
  #allocation0 [shape = 'u32[]', space=smem, size = 0x4, offset = 0x4, fixed_abs, tag = 'smem constant byte address 0x4 - core index']
  #allocation1 [shape = 'u32[144,128]{1,0:T(1,128)}', space=vmem, size = 0x12000, scoped, tag = 'internal scratch']
  %s0 = inlined_call_operand.vmem [shape: bf16[8,576], index: 0, kind: input, shape index: {}]
  %s1 = inlined_call_operand.vmem [shape: bf16[576,256], index: 1, kind: input, shape index: {}]
  %s2 = inlined_call_operand.vmem [shape: f32[1,256], index: 2, kind: input, shape index: {}]
  %s3 = inlined_call_operand.vmem [shape: bf16[8,256], index: 3, kind: output, shape index: {}]
  %s4 = sld [smem:[#allocation0]]
  $region22: #{fcn_forward.12} parent=0
    _
  %s6 = ssub.s32 1, %s4
  %s7 = scalar_select 0, %s6, %s4
  // Predicated region
  $region2: #{fcn_forward.12} parent=0 // pred_check
    _
  $region3: #{fcn_forward.12} parent=0 // pred_check_branch
    %9 = sbr.rel (0) target = $region5
  $region4: #{fcn_forward.12} parent=0 // pred_region
    _
  $region5: #{fcn_forward.12} parent=0 // pred_fallthru
    _
  // Predicated region
  $region6: #{fcn_forward.12} parent=0 // pred_check
    _
  $region7: #{fcn_forward.12} parent=0 // pred_check_branch
    %11 = sbr.rel (0) target = $region9
  $region8: #{fcn_forward.12} parent=0 // pred_region
    _
  $region9: #{fcn_forward.12} parent=0 // pred_fallthru
    _
  // Predicated region
  $region10: #{fcn_forward.12} parent=0 // pred_check
    _
  $region11: #{fcn_forward.12} parent=0 // pred_check_branch
    %13 = sbr.rel (0) target = $region13
  $region12: #{fcn_forward.12} parent=0 // pred_region
    _
  $region13: #{fcn_forward.12} parent=0 // pred_fallthru
    _
  %v15 = vld [vmem:[%s0] sm:$0xff]
  %v16 = vld [vmem:[%s0 + $0x8] sm:$0xff]
  %v17 = vld [vmem:[%s0 + $0x10] sm:$0xf]
  %v18 = vld [vmem:[%s1] sm:$0xff]
  %v19 = vld [vmem:[%s1 + $0x8] sm:$0xff]
  %v20 = vld [vmem:[%s1 + $0x10] sm:$0xff]
  %v21 = vld [vmem:[%s1 + $0x18] sm:$0xff]
  %v22 = vld [vmem:[%s1 + $0x20] sm:$0xff]
  %v23 = vld [vmem:[%s1 + $0x28] sm:$0xff]
  %v24 = vld [vmem:[%s1 + $0x30] sm:$0xff]
  %v25 = vld [vmem:[%s1 + $0x38] sm:$0xff]
  %v26 = vld [vmem:[%s1 + $0x40] sm:$0xff]
  %v27 = vld [vmem:[%s1 + $0x48] sm:$0xff]
  %v28 = vld [vmem:[%s1 + $0x50] sm:$0xff]
  %v29 = vld [vmem:[%s1 + $0x58] sm:$0xff]
  %v30 = vld [vmem:[%s1 + $0x60] sm:$0xff]
  %v31 = vld [vmem:[%s1 + $0x68] sm:$0xff]
  %v32 = vld [vmem:[%s1 + $0x70] sm:$0xff]
  %v33 = vld [vmem:[%s1 + $0x78] sm:$0xff]
  %v34 = vld [vmem:[%s1 + $0x80] sm:$0xff]
  %v35 = vld [vmem:[%s1 + $0x88] sm:$0xff]
  %v36 = vld [vmem:[%s1 + $0x90] sm:$0xff]
  %v37 = vld [vmem:[%s1 + $0x98] sm:$0xff]
  %v38 = vld [vmem:[%s1 + $0xa0] sm:$0xff]
  %v39 = vld [vmem:[%s1 + $0xa8] sm:$0xff]
  %v40 = vld [vmem:[%s1 + $0xb0] sm:$0xff]
  %v41 = vld [vmem:[%s1 + $0xb8] sm:$0xff]
  %v42 = vld [vmem:[%s1 + $0xc0] sm:$0xff]
  %v43 = vld [vmem:[%s1 + $0xc8] sm:$0xff]
  %v44 = vld [vmem:[%s1 + $0xd0] sm:$0xff]
  %v45 = vld [vmem:[%s1 + $0xd8] sm:$0xff]
  %v46 = vld [vmem:[%s1 + $0xe0] sm:$0xff]
  %v47 = vld [vmem:[%s1 + $0xe8] sm:$0xff]
  %v48 = vld [vmem:[%s1 + $0xf0] sm:$0xff]
  %v49 = vld [vmem:[%s1 + $0xf8] sm:$0xff]
  %v50 = vld [vmem:[%s1 + $0x100] sm:$0xff]
  %v51 = vld [vmem:[%s1 + $0x108] sm:$0xff]
  %v52 = vld [vmem:[%s1 + $0x110] sm:$0xff]
  %v53 = vld [vmem:[%s1 + $0x118] sm:$0xff]
  %v54 = vld [vmem:[%s1 + $0x120] sm:$0xff]
  %v55 = vld [vmem:[%s1 + $0x128] sm:$0xff]
  %v56 = vld [vmem:[%s1 + $0x130] sm:$0xff]
  %v57 = vld [vmem:[%s1 + $0x138] sm:$0xff]
  %v58 = vld [vmem:[%s1 + $0x140] sm:$0xff]
  %v59 = vld [vmem:[%s1 + $0x148] sm:$0xff]
  %v60 = vld [vmem:[%s1 + $0x150] sm:$0xff]
  %v61 = vld [vmem:[%s1 + $0x158] sm:$0xff]
  %v62 = vld [vmem:[%s1 + $0x160] sm:$0xff]
  %v63 = vld [vmem:[%s1 + $0x168] sm:$0xff]
  %v64 = vld [vmem:[%s1 + $0x170] sm:$0xff]
  %v65 = vld [vmem:[%s1 + $0x178] sm:$0xff]
  %v66 = vld [vmem:[%s1 + $0x180] sm:$0xff]
  %v67 = vld [vmem:[%s1 + $0x188] sm:$0xff]
  %v68 = vld [vmem:[%s1 + $0x190] sm:$0xff]
  %v69 = vld [vmem:[%s1 + $0x198] sm:$0xff]
  %v70 = vld [vmem:[%s1 + $0x1a0] sm:$0xff]
  %v71 = vld [vmem:[%s1 + $0x1a8] sm:$0xff]
  %v72 = vld [vmem:[%s1 + $0x1b0] sm:$0xff]
  %v73 = vld [vmem:[%s1 + $0x1b8] sm:$0xff]
  %v74 = vld [vmem:[%s1 + $0x1c0] sm:$0xff]
  %v75 = vld [vmem:[%s1 + $0x1c8] sm:$0xff]
  %v76 = vld [vmem:[%s1 + $0x1d0] sm:$0xff]
  %v77 = vld [vmem:[%s1 + $0x1d8] sm:$0xff]
  %v78 = vld [vmem:[%s1 + $0x1e0] sm:$0xff]
  %v79 = vld [vmem:[%s1 + $0x1e8] sm:$0xff]
  %v80 = vld [vmem:[%s1 + $0x1f0] sm:$0xff]
  %v81 = vld [vmem:[%s1 + $0x1f8] sm:$0xff]
  %v82 = vld [vmem:[%s1 + $0x200] sm:$0xff]
  %v83 = vld [vmem:[%s1 + $0x208] sm:$0xff]
  %v84 = vld [vmem:[%s1 + $0x210] sm:$0xff]
  %v85 = vld [vmem:[%s1 + $0x218] sm:$0xff]
  %v86 = vld [vmem:[%s1 + $0x220] sm:$0xff]
  %v87 = vld [vmem:[%s1 + $0x228] sm:$0xff]
  %v88 = vld [vmem:[%s1 + $0x230] sm:$0xff]
  %v89 = vld [vmem:[%s1 + $0x238] sm:$0xff]
  %v90 = vld [vmem:[%s2] sm:$0x3]
  %v92 = vlaneseq
  %v93 = vshrl.u32 %v92, 7
  %v94 = vsub.s32 0, %v93
  %v95 = vrot.slane %v90, %v94
  %v96 = vlaneseq
  %v97 = vshrl.u32 %v96, 7
  %v98 = vsub.s32 1, %v97
  %v99 = vrot.slane %v90, %v98
  %v105 = vunpack.c.l.b16 %v15
  %v106 = vunpack.c.h.b16 %v15
  %v107 = vunpack.c.l.b16 %v16
  %v108 = vunpack.c.h.b16 %v16
  %v109 = vunpack.c.l.b16 %v17
  %v110 = vpack.c.b16 %v105, %v105
  %v111 = vpack.c.b16 %v106, %v106
  %v112 = vpack.c.b16 %v107, %v107
  %v113 = vpack.c.b16 %v108, %v108
  %v114 = vpack.c.b16 %v109, %v109
  %v191 = vunpack.c.l.b16 %v18
  %v192 = vunpack.c.h.b16 %v18
  %v193 = vunpack.c.l.b16 %v19
  %v194 = vunpack.c.h.b16 %v19
  %v195 = vunpack.c.l.b16 %v20
  %v196 = vunpack.c.h.b16 %v20
  %v197 = vunpack.c.l.b16 %v21
  %v198 = vunpack.c.h.b16 %v21
  %v199 = vunpack.c.l.b16 %v22
  %v200 = vunpack.c.h.b16 %v22
  %v201 = vunpack.c.l.b16 %v23
  %v202 = vunpack.c.h.b16 %v23
  %v203 = vunpack.c.l.b16 %v24
  %v204 = vunpack.c.h.b16 %v24
  %v205 = vunpack.c.l.b16 %v25
  %v206 = vunpack.c.h.b16 %v25
  %v207 = vunpack.c.l.b16 %v26
  %v208 = vunpack.c.h.b16 %v26
  %v209 = vunpack.c.l.b16 %v27
  %v210 = vunpack.c.h.b16 %v27
  %v211 = vunpack.c.l.b16 %v28
  %v212 = vunpack.c.h.b16 %v28
  %v213 = vunpack.c.l.b16 %v29
  %v214 = vunpack.c.h.b16 %v29
  %v215 = vunpack.c.l.b16 %v30
  %v216 = vunpack.c.h.b16 %v30
  %v217 = vunpack.c.l.b16 %v31
  %v218 = vunpack.c.h.b16 %v31
  %v219 = vunpack.c.l.b16 %v32
  %v220 = vunpack.c.h.b16 %v32
  %v221 = vunpack.c.l.b16 %v33
  %v222 = vunpack.c.h.b16 %v33
  %v223 = vunpack.c.l.b16 %v34
  %v224 = vunpack.c.h.b16 %v34
  %v225 = vunpack.c.l.b16 %v35
  %v226 = vunpack.c.h.b16 %v35
  %v227 = vunpack.c.l.b16 %v36
  %v228 = vunpack.c.h.b16 %v36
  %v229 = vunpack.c.l.b16 %v37
  %v230 = vunpack.c.h.b16 %v37
  %v231 = vunpack.c.l.b16 %v38
  %v232 = vunpack.c.h.b16 %v38
  %v233 = vunpack.c.l.b16 %v39
  %v234 = vunpack.c.h.b16 %v39
  %v235 = vunpack.c.l.b16 %v40
  %v236 = vunpack.c.h.b16 %v40
  %v237 = vunpack.c.l.b16 %v41
  %v238 = vunpack.c.h.b16 %v41
  %v239 = vunpack.c.l.b16 %v42
  %v240 = vunpack.c.h.b16 %v42
  %v241 = vunpack.c.l.b16 %v43
  %v242 = vunpack.c.h.b16 %v43
  %v243 = vunpack.c.l.b16 %v44
  %v244 = vunpack.c.h.b16 %v44
  %v245 = vunpack.c.l.b16 %v45
  %v246 = vunpack.c.h.b16 %v45
  %v247 = vunpack.c.l.b16 %v46
  %v248 = vunpack.c.h.b16 %v46
  %v249 = vunpack.c.l.b16 %v47
  %v250 = vunpack.c.h.b16 %v47
  %v251 = vunpack.c.l.b16 %v48
  %v252 = vunpack.c.h.b16 %v48
  %v253 = vunpack.c.l.b16 %v49
  %v254 = vunpack.c.h.b16 %v49
  %v255 = vunpack.c.l.b16 %v50
  %v256 = vunpack.c.h.b16 %v50
  %v257 = vunpack.c.l.b16 %v51
  %v258 = vunpack.c.h.b16 %v51
  %v259 = vunpack.c.l.b16 %v52
  %v260 = vunpack.c.h.b16 %v52
  %v261 = vunpack.c.l.b16 %v53
  %v262 = vunpack.c.h.b16 %v53
  %v263 = vunpack.c.l.b16 %v54
  %v264 = vunpack.c.h.b16 %v54
  %v265 = vunpack.c.l.b16 %v55
  %v266 = vunpack.c.h.b16 %v55
  %v267 = vunpack.c.l.b16 %v56
  %v268 = vunpack.c.h.b16 %v56
  %v269 = vunpack.c.l.b16 %v57
  %v270 = vunpack.c.h.b16 %v57
  %v271 = vunpack.c.l.b16 %v58
  %v272 = vunpack.c.h.b16 %v58
  %v273 = vunpack.c.l.b16 %v59
  %v274 = vunpack.c.h.b16 %v59
  %v275 = vunpack.c.l.b16 %v60
  %v276 = vunpack.c.h.b16 %v60
  %v277 = vunpack.c.l.b16 %v61
  %v278 = vunpack.c.h.b16 %v61
  %v279 = vunpack.c.l.b16 %v62
  %v280 = vunpack.c.h.b16 %v62
  %v281 = vunpack.c.l.b16 %v63
  %v282 = vunpack.c.h.b16 %v63
  %v283 = vunpack.c.l.b16 %v64
  %v284 = vunpack.c.h.b16 %v64
  %v285 = vunpack.c.l.b16 %v65
  %v286 = vunpack.c.h.b16 %v65
  %v287 = vunpack.c.l.b16 %v66
  %v288 = vunpack.c.h.b16 %v66
  %v289 = vunpack.c.l.b16 %v67
  %v290 = vunpack.c.h.b16 %v67
  %v291 = vunpack.c.l.b16 %v68
  %v292 = vunpack.c.h.b16 %v68
  %v293 = vunpack.c.l.b16 %v69
  %v294 = vunpack.c.h.b16 %v69
  %v295 = vunpack.c.l.b16 %v70
  %v296 = vunpack.c.h.b16 %v70
  %v297 = vunpack.c.l.b16 %v71
  %v298 = vunpack.c.h.b16 %v71
  %v299 = vunpack.c.l.b16 %v72
  %v300 = vunpack.c.h.b16 %v72
  %v301 = vunpack.c.l.b16 %v73
  %v302 = vunpack.c.h.b16 %v73
  %v303 = vunpack.c.l.b16 %v74
  %v304 = vunpack.c.h.b16 %v74
  %v305 = vunpack.c.l.b16 %v75
  %v306 = vunpack.c.h.b16 %v75
  %v307 = vunpack.c.l.b16 %v76
  %v308 = vunpack.c.h.b16 %v76
  %v309 = vunpack.c.l.b16 %v77
  %v310 = vunpack.c.h.b16 %v77
  %v311 = vunpack.c.l.b16 %v78
  %v312 = vunpack.c.h.b16 %v78
  %v313 = vunpack.c.l.b16 %v79
  %v314 = vunpack.c.h.b16 %v79
  %v315 = vunpack.c.l.b16 %v80
  %v316 = vunpack.c.h.b16 %v80
  %v317 = vunpack.c.l.b16 %v81
  %v318 = vunpack.c.h.b16 %v81
  %v319 = vunpack.c.l.b16 %v82
  %v320 = vunpack.c.h.b16 %v82
  %v321 = vunpack.c.l.b16 %v83
  %v322 = vunpack.c.h.b16 %v83
  %v323 = vunpack.c.l.b16 %v84
  %v324 = vunpack.c.h.b16 %v84
  %v325 = vunpack.c.l.b16 %v85
  %v326 = vunpack.c.h.b16 %v85
  %v327 = vunpack.c.l.b16 %v86
  %v328 = vunpack.c.h.b16 %v86
  %v329 = vunpack.c.l.b16 %v87
  %v330 = vunpack.c.h.b16 %v87
  %v331 = vunpack.c.l.b16 %v88
  %v332 = vunpack.c.h.b16 %v88
  %v333 = vunpack.c.l.b16 %v89
  %v334 = vunpack.c.h.b16 %v89
  %v335 = vpack.c.b16 %v193, %v191
  %v336 = vpack.c.b16 %v194, %v192
  %v337 = vpack.c.b16 %v197, %v195
  %v338 = vpack.c.b16 %v198, %v196
  %v339 = vpack.c.b16 %v201, %v199
  %v340 = vpack.c.b16 %v202, %v200
  %v341 = vpack.c.b16 %v205, %v203
  %v342 = vpack.c.b16 %v206, %v204
  %v343 = vpack.c.b16 %v209, %v207
  %v344 = vpack.c.b16 %v210, %v208
  %v345 = vpack.c.b16 %v213, %v211
  %v346 = vpack.c.b16 %v214, %v212
  %v347 = vpack.c.b16 %v217, %v215
  %v348 = vpack.c.b16 %v218, %v216
  %v349 = vpack.c.b16 %v221, %v219
  %v350 = vpack.c.b16 %v222, %v220
  %v351 = vpack.c.b16 %v225, %v223
  %v352 = vpack.c.b16 %v226, %v224
  %v353 = vpack.c.b16 %v229, %v227
  %v354 = vpack.c.b16 %v230, %v228
  %v355 = vpack.c.b16 %v233, %v231
  %v356 = vpack.c.b16 %v234, %v232
  %v357 = vpack.c.b16 %v237, %v235
  %v358 = vpack.c.b16 %v238, %v236
  %v359 = vpack.c.b16 %v241, %v239
  %v360 = vpack.c.b16 %v242, %v240
  %v361 = vpack.c.b16 %v245, %v243
  %v362 = vpack.c.b16 %v246, %v244
  %v363 = vpack.c.b16 %v249, %v247
  %v364 = vpack.c.b16 %v250, %v248
  %v365 = vpack.c.b16 %v253, %v251
  %v366 = vpack.c.b16 %v254, %v252
  %v367 = vpack.c.b16 %v257, %v255
  %v368 = vpack.c.b16 %v258, %v256
  %v369 = vpack.c.b16 %v261, %v259
  %v370 = vpack.c.b16 %v262, %v260
  %v371 = vpack.c.b16 %v265, %v263
  %v372 = vpack.c.b16 %v266, %v264
  %v373 = vpack.c.b16 %v269, %v267
  %v374 = vpack.c.b16 %v270, %v268
  %v375 = vpack.c.b16 %v273, %v271
  %v376 = vpack.c.b16 %v274, %v272
  %v377 = vpack.c.b16 %v277, %v275
  %v378 = vpack.c.b16 %v278, %v276
  %v379 = vpack.c.b16 %v281, %v279
  %v380 = vpack.c.b16 %v282, %v280
  %v381 = vpack.c.b16 %v285, %v283
  %v382 = vpack.c.b16 %v286, %v284
  %v383 = vpack.c.b16 %v289, %v287
  %v384 = vpack.c.b16 %v290, %v288
  %v385 = vpack.c.b16 %v293, %v291
  %v386 = vpack.c.b16 %v294, %v292
  %v387 = vpack.c.b16 %v297, %v295
  %v388 = vpack.c.b16 %v298, %v296
  %v389 = vpack.c.b16 %v301, %v299
  %v390 = vpack.c.b16 %v302, %v300
  %v391 = vpack.c.b16 %v305, %v303
  %v392 = vpack.c.b16 %v306, %v304
  %v393 = vpack.c.b16 %v309, %v307
  %v394 = vpack.c.b16 %v310, %v308
  %v395 = vpack.c.b16 %v313, %v311
  %v396 = vpack.c.b16 %v314, %v312
  %v397 = vpack.c.b16 %v317, %v315
  %v398 = vpack.c.b16 %v318, %v316
  %v399 = vpack.c.b16 %v321, %v319
  %v400 = vpack.c.b16 %v322, %v320
  %v401 = vpack.c.b16 %v325, %v323
  %v402 = vpack.c.b16 %v326, %v324
  %v403 = vpack.c.b16 %v329, %v327
  %v404 = vpack.c.b16 %v330, %v328
  %v405 = vpack.c.b16 %v333, %v331
  %v406 = vpack.c.b16 %v334, %v332
  %vm479 = vcmask 523264
  %v481 = vsel %vm479, %v114, 0
  %483 = vmatprep.subr.bf16.mxu0 %v336
  %484 = vmatpush1.bf16.msra.mxu0 %v335
  %485 = vmatprep.subr.bf16.mxu0 %v338
  %486 = vmatpush1.bf16.msra.mxu0 %v337
  %487 = vmatprep.subr.bf16.mxu0 %v340
  %488 = vmatpush1.bf16.msra.mxu0 %v339
  %489 = vmatprep.subr.bf16.mxu0 %v342
  %490 = vmatpush1.bf16.msra.mxu0 %v341
  %491 = vmatprep.subr.bf16.mxu0 %v344
  %492 = vmatpush1.bf16.msra.mxu0 %v343
  %493 = vmatprep.subr.bf16.mxu0 %v346
  %494 = vmatpush1.bf16.msra.mxu0 %v345
  %495 = vmatprep.subr.bf16.mxu0 %v348
  %496 = vmatpush1.bf16.msra.mxu0 %v347
  %497 = vmatprep.subr.bf16.mxu0 %v350
  %498 = vmatpush1.bf16.msra.mxu0 %v349
  %499 = vmatprep.subr.bf16.mxu0 %v352
  %500 = vmatpush1.bf16.msra.mxu0 %v351
  %501 = vmatprep.subr.bf16.mxu0 %v354
  %502 = vmatpush1.bf16.msra.mxu0 %v353
  %503 = vmatprep.subr.bf16.mxu0 %v356
  %504 = vmatpush1.bf16.msra.mxu0 %v355
  %505 = vmatprep.subr.bf16.mxu0 %v358
  %506 = vmatpush1.bf16.msra.mxu0 %v357
  %507 = vmatprep.subr.bf16.mxu0 %v360
  %508 = vmatpush1.bf16.msra.mxu0 %v359
  %509 = vmatprep.subr.bf16.mxu0 %v362
  %510 = vmatpush1.bf16.msra.mxu0 %v361
  %511 = vmatprep.subr.bf16.mxu0 %v364
  %512 = vmatpush1.bf16.msra.mxu0 %v363
  %513 = vmatprep.subr.bf16.mxu0 %v366
  %514 = vmatpush1.bf16.msra.mxu0 %v365
  %515 = vmatprep.mubr.bf16.mxu0 %v111
  %516 = vmatmul.mubr.bf16.gmra.mrb[0].mxu0 %v110
  %v517 = vpop.f32.mrb[0].mxu0
  %v518 = vadd.f32 %v95, %v517
  %v519 = vpop.f32.mrb[0].mxu0
  %v520 = vadd.f32 %v99, %v519
  %v521 = vpop.f32.mrb[0].mxu0
  %v522 = vpop.f32.mrb[0].mxu0
  %523 = vdwg.mxu0
  %524 = vmatprep.subr.bf16.mxu0 %v368
  %525 = vmatpush1.bf16.msra.mxu0 %v367
  %526 = vmatprep.subr.bf16.mxu0 %v370
  %527 = vmatpush1.bf16.msra.mxu0 %v369
  %528 = vmatprep.subr.bf16.mxu0 %v372
  %529 = vmatpush1.bf16.msra.mxu0 %v371
  %530 = vmatprep.subr.bf16.mxu0 %v374
  %531 = vmatpush1.bf16.msra.mxu0 %v373
  %532 = vmatprep.subr.bf16.mxu0 %v376
  %533 = vmatpush1.bf16.msra.mxu0 %v375
  %534 = vmatprep.subr.bf16.mxu0 %v378
  %535 = vmatpush1.bf16.msra.mxu0 %v377
  %536 = vmatprep.subr.bf16.mxu0 %v380
  %537 = vmatpush1.bf16.msra.mxu0 %v379
  %538 = vmatprep.subr.bf16.mxu0 %v382
  %539 = vmatpush1.bf16.msra.mxu0 %v381
  %540 = vmatprep.subr.bf16.mxu0 %v384
  %541 = vmatpush1.bf16.msra.mxu0 %v383
  %542 = vmatprep.subr.bf16.mxu0 %v386
  %543 = vmatpush1.bf16.msra.mxu0 %v385
  %544 = vmatprep.subr.bf16.mxu0 %v388
  %545 = vmatpush1.bf16.msra.mxu0 %v387
  %546 = vmatprep.subr.bf16.mxu0 %v390
  %547 = vmatpush1.bf16.msra.mxu0 %v389
  %548 = vmatprep.subr.bf16.mxu0 %v392
  %549 = vmatpush1.bf16.msra.mxu0 %v391
  %550 = vmatprep.subr.bf16.mxu0 %v394
  %551 = vmatpush1.bf16.msra.mxu0 %v393
  %552 = vmatprep.subr.bf16.mxu0 %v396
  %553 = vmatpush1.bf16.msra.mxu0 %v395
  %554 = vmatprep.subr.bf16.mxu0 %v398
  %555 = vmatpush1.bf16.msra.mxu0 %v397
  %556 = vmatprep.mubr.bf16.mxu0 %v113
  %557 = vmatmul.mubr.bf16.gmra.mrb[0].mxu0 %v112
  %v558 = vpop.f32.mrb[0].mxu0
  %v559 = vadd.f32 %v518, %v558
  %v560 = vpop.f32.mrb[0].mxu0
  %v561 = vadd.f32 %v520, %v560
  %v562 = vpop.f32.mrb[0].mxu0
  %v563 = vpop.f32.mrb[0].mxu0
  %564 = vdwg.mxu0
  %565 = vmatprep.subr.bf16.mxu0 %v400
  %566 = vmatpush1.bf16.msra.mxu0 %v399
  %567 = vmatprep.subr.bf16.mxu0 %v402
  %568 = vmatpush1.bf16.msra.mxu0 %v401
  %569 = vmatprep.subr.bf16.mxu0 %v404
  %570 = vmatpush1.bf16.msra.mxu0 %v403
  %571 = vmatprep.subr.bf16.mxu0 %v406
  %572 = vmatpush1.bf16.msra.mxu0 %v405
  %573 = vmatprep.subr.bf16.mxu0 0
  %574 = vmatpush1.bf16.msra.mxu0 0
  %575 = vmatprep.subr.bf16.mxu0 0
  %576 = vmatpush1.bf16.msra.mxu0 0
  %577 = vmatprep.subr.bf16.mxu0 0
  %578 = vmatpush1.bf16.msra.mxu0 0
  %579 = vmatprep.subr.bf16.mxu0 0
  %580 = vmatpush1.bf16.msra.mxu0 0
  %581 = vmatprep.subr.bf16.mxu0 0
  %582 = vmatpush1.bf16.msra.mxu0 0
  %583 = vmatprep.subr.bf16.mxu0 0
  %584 = vmatpush1.bf16.msra.mxu0 0
  %585 = vmatprep.subr.bf16.mxu0 0
  %586 = vmatpush1.bf16.msra.mxu0 0
  %587 = vmatprep.subr.bf16.mxu0 0
  %588 = vmatpush1.bf16.msra.mxu0 0
  %589 = vmatprep.subr.bf16.mxu0 0
  %590 = vmatpush1.bf16.msra.mxu0 0
  %591 = vmatprep.subr.bf16.mxu0 0
  %592 = vmatpush1.bf16.msra.mxu0 0
  %593 = vmatprep.subr.bf16.mxu0 0
  %594 = vmatpush1.bf16.msra.mxu0 0
  %595 = vmatprep.subr.bf16.mxu0 0
  %596 = vmatpush1.bf16.msra.mxu0 0
  %597 = vmatprep.mubr.bf16.mxu0 0
  %598 = vmatmul.mubr.bf16.gmra.mrb[0].mxu0 %v481
  %v599 = vpop.f32.mrb[0].mxu0
  %v600 = vadd.f32 %v559, %v599
  %v601 = vpop.f32.mrb[0].mxu0
  %v602 = vadd.f32 %v561, %v601
  %v603 = vpop.f32.mrb[0].mxu0
  %v604 = vpop.f32.mrb[0].mxu0
  %605 = vdwg.mxu0
  %v606 = vlaneseq
  %v607 = vand.u32 %v606, 127
  %v608 = vadd.s32 %v607, 128
  %vm609 = vcmp.lt.s32.totalorder %v607, 128
  %vm610 = vcmp.lt.s32.totalorder %v608, 128
  %v611 = vmax.f32 %v600, 0.0
  %v612 = vmax.f32 %v602, 0.0
  %v613 = vsel %vm609, %v611, %v600
  %v614 = vsel %vm610, %v612, %v602
  %v615 = vpack.c.bf16 %v613, %v613
  %v616 = vpack.c.bf16 %v614, %v614
  %v619 = vunpack.c.l.b16 %v615
  %v620 = vunpack.c.l.b16 %v616
  %v621 = vpack.c.b16 %v620, %v619
  %623 = vst [vmem:[%s3] sm:$0xff] %v621
  // Predicated region
  $region14: #{fcn_forward.12} parent=0 // pred_check
    _
  $region15: #{fcn_forward.12} parent=0 // pred_check_branch
    %625 = sbr.rel (0) target = $region17
  $region16: #{fcn_forward.12} parent=0 // pred_region
    _
  $region17: #{fcn_forward.12} parent=0 // pred_fallthru
    _
  // Predicated region
  $region18: #{fcn_forward.12} parent=0 // pred_check
    _
  $region19: #{fcn_forward.12} parent=0 // pred_check_branch
    %627 = sbr.rel (0) target = $region21
  $region20: #{fcn_forward.12} parent=0 // pred_region
    _
  $region21: #{fcn_forward.12} parent=0 // pred_fallthru
    _

// kernel: fcn_forward.14
$region0: #{fcn_forward.14}
  #allocation0 [shape = 'u32[]', space=smem, size = 0x4, offset = 0x4, fixed_abs, tag = 'smem constant byte address 0x4 - core index']
  #allocation1 [shape = 'u32[144,128]{1,0:T(1,128)}', space=vmem, size = 0x12000, scoped, tag = 'internal scratch']
  %s0 = inlined_call_operand.vmem [shape: bf16[8,128], index: 0, kind: input, shape index: {}]
  %s1 = inlined_call_operand.vmem [shape: bf16[128,5], index: 1, kind: input, shape index: {}]
  %s2 = inlined_call_operand.vmem [shape: f32[1,5], index: 2, kind: input, shape index: {}]
  %s3 = inlined_call_operand.vmem [shape: bf16[8,5], index: 3, kind: output, shape index: {}]
  %s4 = sld [smem:[#allocation0]]
  $region22: #{fcn_forward.14} parent=0
    _
  %s6 = ssub.s32 1, %s4
  %s7 = scalar_select 0, %s6, %s4
  // Predicated region
  $region2: #{fcn_forward.14} parent=0 // pred_check
    _
  $region3: #{fcn_forward.14} parent=0 // pred_check_branch
    %9 = sbr.rel (0) target = $region5
  $region4: #{fcn_forward.14} parent=0 // pred_region
    _
  $region5: #{fcn_forward.14} parent=0 // pred_fallthru
    _
  // Predicated region
  $region6: #{fcn_forward.14} parent=0 // pred_check
    _
  $region7: #{fcn_forward.14} parent=0 // pred_check_branch
    %11 = sbr.rel (0) target = $region9
  $region8: #{fcn_forward.14} parent=0 // pred_region
    _
  $region9: #{fcn_forward.14} parent=0 // pred_fallthru
    _
  // Predicated region
  $region10: #{fcn_forward.14} parent=0 // pred_check
    _
  $region11: #{fcn_forward.14} parent=0 // pred_check_branch
    %13 = sbr.rel (0) target = $region13
  $region12: #{fcn_forward.14} parent=0 // pred_region
    _
  $region13: #{fcn_forward.14} parent=0 // pred_fallthru
    _
  %v15 = vld [vmem:[%s0] sm:$0xf]
  %v16 = vld [vmem:[%s1] sm:$0xf]
  %v17 = vld [vmem:[%s1 + $0x4] sm:$0xf]
  %v18 = vld [vmem:[%s1 + $0x8] sm:$0xf]
  %v19 = vld [vmem:[%s1 + $0xc] sm:$0xf]
  %v20 = vld [vmem:[%s1 + $0x10] sm:$0xf]
  %v21 = vld [vmem:[%s1 + $0x14] sm:$0xf]
  %v22 = vld [vmem:[%s1 + $0x18] sm:$0xf]
  %v23 = vld [vmem:[%s1 + $0x1c] sm:$0xf]
  %v24 = vld [vmem:[%s1 + $0x20] sm:$0xf]
  %v25 = vld [vmem:[%s1 + $0x24] sm:$0xf]
  %v26 = vld [vmem:[%s1 + $0x28] sm:$0xf]
  %v27 = vld [vmem:[%s1 + $0x2c] sm:$0xf]
  %v28 = vld [vmem:[%s1 + $0x30] sm:$0xf]
  %v29 = vld [vmem:[%s1 + $0x34] sm:$0xf]
  %v30 = vld [vmem:[%s1 + $0x38] sm:$0xf]
  %v31 = vld [vmem:[%s1 + $0x3c] sm:$0xf]
  %v32 = vld [vmem:[%s2] sm:$0x1]
  %v34 = vlaneseq
  %v35 = vshrl.u32 %v34, 7
  %v36 = vsub.s32 0, %v35
  %v37 = vrot.slane %v32, %v36
  %v55 = vunpack.c.l.b16 %v16
  %v56 = vunpack.c.l.b16 %v17
  %v57 = vunpack.c.l.b16 %v18
  %v58 = vunpack.c.l.b16 %v19
  %v59 = vunpack.c.l.b16 %v20
  %v60 = vunpack.c.l.b16 %v21
  %v61 = vunpack.c.l.b16 %v22
  %v62 = vunpack.c.l.b16 %v23
  %v63 = vunpack.c.l.b16 %v24
  %v64 = vunpack.c.l.b16 %v25
  %v65 = vunpack.c.l.b16 %v26
  %v66 = vunpack.c.l.b16 %v27
  %v67 = vunpack.c.l.b16 %v28
  %v68 = vunpack.c.l.b16 %v29
  %v69 = vunpack.c.l.b16 %v30
  %v70 = vunpack.c.l.b16 %v31
  %v71 = vpack.c.b16 %v56, %v55
  %v72 = vpack.c.b16 %v58, %v57
  %v73 = vpack.c.b16 %v60, %v59
  %v74 = vpack.c.b16 %v62, %v61
  %v75 = vpack.c.b16 %v64, %v63
  %v76 = vpack.c.b16 %v66, %v65
  %v77 = vpack.c.b16 %v68, %v67
  %v78 = vpack.c.b16 %v70, %v69
  %87 = vmatprep.subr.bf16.mxu0 0
  %88 = vmatpush1.bf16.msra.mxu0 %v71
  %89 = vmatprep.subr.bf16.mxu0 0
  %90 = vmatpush1.bf16.msra.mxu0 %v72
  %91 = vmatprep.subr.bf16.mxu0 0
  %92 = vmatpush1.bf16.msra.mxu0 %v73
  %93 = vmatprep.subr.bf16.mxu0 0
  %94 = vmatpush1.bf16.msra.mxu0 %v74
  %95 = vmatprep.subr.bf16.mxu0 0
  %96 = vmatpush1.bf16.msra.mxu0 %v75
  %97 = vmatprep.subr.bf16.mxu0 0
  %98 = vmatpush1.bf16.msra.mxu0 %v76
  %99 = vmatprep.subr.bf16.mxu0 0
  %100 = vmatpush1.bf16.msra.mxu0 %v77
  %101 = vmatprep.subr.bf16.mxu0 0
  %102 = vmatpush1.bf16.msra.mxu0 %v78
  %103 = vmatprep.subr.bf16.mxu0 0
  %104 = vmatpush1.bf16.msra.mxu0 0
  %105 = vmatprep.subr.bf16.mxu0 0
  %106 = vmatpush1.bf16.msra.mxu0 0
  %107 = vmatprep.subr.bf16.mxu0 0
  %108 = vmatpush1.bf16.msra.mxu0 0
  %109 = vmatprep.subr.bf16.mxu0 0
  %110 = vmatpush1.bf16.msra.mxu0 0
  %111 = vmatprep.subr.bf16.mxu0 0
  %112 = vmatpush1.bf16.msra.mxu0 0
  %113 = vmatprep.subr.bf16.mxu0 0
  %114 = vmatpush1.bf16.msra.mxu0 0
  %115 = vmatprep.subr.bf16.mxu0 0
  %116 = vmatpush1.bf16.msra.mxu0 0
  %117 = vmatprep.subr.bf16.mxu0 0
  %118 = vmatpush1.bf16.msra.mxu0 0
  %119 = vmatprep.mubr.bf16.mxu0 0
  %120 = vmatmul.mubr.bf16.gmra.mrb[0].mxu0 %v15
  %v121 = vpop.f32.mrb[0].mxu0
  %v122 = vadd.f32 %v37, %v121
  %v123 = vpop.f32.mrb[0].mxu0
  %v124 = vpop.f32.mrb[0].mxu0
  %v125 = vpop.f32.mrb[0].mxu0
  %126 = vdwg.mxu0
  %v127 = vpack.c.bf16 %v122, %v122
  %vm128 = vcmask 35840
  %129 = vst.msk [vmem:[%s3] sm:$0xf] %vm128, %v127
  // Predicated region
  $region14: #{fcn_forward.14} parent=0 // pred_check
    _
  $region15: #{fcn_forward.14} parent=0 // pred_check_branch
    %131 = sbr.rel (0) target = $region17
  $region16: #{fcn_forward.14} parent=0 // pred_region
    _
  $region17: #{fcn_forward.14} parent=0 // pred_fallthru
    _
  // Predicated region
  $region18: #{fcn_forward.14} parent=0 // pred_check
    _
  $region19: #{fcn_forward.14} parent=0 // pred_check_branch
    %133 = sbr.rel (0) target = $region21
  $region20: #{fcn_forward.14} parent=0 // pred_region
    _
  $region21: #{fcn_forward.14} parent=0 // pred_fallthru
    _

// kernel: fcn_forward.13
$region0: #{fcn_forward.13}
  #allocation0 [shape = 'u32[]', space=smem, size = 0x4, offset = 0x4, fixed_abs, tag = 'smem constant byte address 0x4 - core index']
  #allocation1 [shape = 'u32[144,128]{1,0:T(1,128)}', space=vmem, size = 0x12000, scoped, tag = 'internal scratch']
  %s0 = inlined_call_operand.vmem [shape: bf16[8,1152], index: 0, kind: input, shape index: {}]
  %s1 = inlined_call_operand.vmem [shape: bf16[1152,128], index: 1, kind: input, shape index: {}]
  %s2 = inlined_call_operand.vmem [shape: f32[1,128], index: 2, kind: input, shape index: {}]
  %s3 = inlined_call_operand.vmem [shape: bf16[8,128], index: 3, kind: input, shape index: {}, may-alias: {3,4}]
  %s4 = inlined_call_operand.vmem [shape: bf16[8,128], index: 4, kind: output, shape index: {}, may-alias: {3,4}]
  %s5 = sld [smem:[#allocation0]]
  $region26: #{fcn_forward.13} parent=0
    _
  %s7 = ssub.s32 1, %s5
  %s8 = scalar_select 0, %s7, %s5
  // Predicated region
  $region2: #{fcn_forward.13} parent=0 // pred_check
    _
  $region3: #{fcn_forward.13} parent=0 // pred_check_branch
    %10 = sbr.rel (0) target = $region5
  $region4: #{fcn_forward.13} parent=0 // pred_region
    _
  $region5: #{fcn_forward.13} parent=0 // pred_fallthru
    _
  // Predicated region
  $region6: #{fcn_forward.13} parent=0 // pred_check
    _
  $region7: #{fcn_forward.13} parent=0 // pred_check_branch
    %12 = sbr.rel (0) target = $region9
  $region8: #{fcn_forward.13} parent=0 // pred_region
    _
  $region9: #{fcn_forward.13} parent=0 // pred_fallthru
    _
  // Predicated region
  $region10: #{fcn_forward.13} parent=0 // pred_check
    _
  $region11: #{fcn_forward.13} parent=0 // pred_check_branch
    %14 = sbr.rel (0) target = $region13
  $region12: #{fcn_forward.13} parent=0 // pred_region
    _
  $region13: #{fcn_forward.13} parent=0 // pred_fallthru
    _
  // Predicated region
  $region14: #{fcn_forward.13} parent=0 // pred_check
    _
  $region15: #{fcn_forward.13} parent=0 // pred_check_branch
    %16 = sbr.rel (0) target = $region17
  $region16: #{fcn_forward.13} parent=0 // pred_region
    _
  $region17: #{fcn_forward.13} parent=0 // pred_fallthru
    _
  %v18 = vld [vmem:[%s0] sm:$0xff]
  %v19 = vld [vmem:[%s0 + $0x8] sm:$0xff]
  %v20 = vld [vmem:[%s0 + $0x10] sm:$0xff]
  %v21 = vld [vmem:[%s0 + $0x18] sm:$0xff]
  %v22 = vld [vmem:[%s0 + $0x20] sm:$0xf]
  %v23 = vld [vmem:[%s1] sm:$0xf]
  %v24 = vld [vmem:[%s1 + $0x4] sm:$0xf]
  %v25 = vld [vmem:[%s1 + $0x8] sm:$0xf]
  %v26 = vld [vmem:[%s1 + $0xc] sm:$0xf]
  %v27 = vld [vmem:[%s1 + $0x10] sm:$0xf]
  %v28 = vld [vmem:[%s1 + $0x14] sm:$0xf]
  %v29 = vld [vmem:[%s1 + $0x18] sm:$0xf]
  %v30 = vld [vmem:[%s1 + $0x1c] sm:$0xf]
  %v31 = vld [vmem:[%s1 + $0x20] sm:$0xf]
  %v32 = vld [vmem:[%s1 + $0x24] sm:$0xf]
  %v33 = vld [vmem:[%s1 + $0x28] sm:$0xf]
  %v34 = vld [vmem:[%s1 + $0x2c] sm:$0xf]
  %v35 = vld [vmem:[%s1 + $0x30] sm:$0xf]
  %v36 = vld [vmem:[%s1 + $0x34] sm:$0xf]
  %v37 = vld [vmem:[%s1 + $0x38] sm:$0xf]
  %v38 = vld [vmem:[%s1 + $0x3c] sm:$0xf]
  %v39 = vld [vmem:[%s1 + $0x40] sm:$0xf]
  %v40 = vld [vmem:[%s1 + $0x44] sm:$0xf]
  %v41 = vld [vmem:[%s1 + $0x48] sm:$0xf]
  %v42 = vld [vmem:[%s1 + $0x4c] sm:$0xf]
  %v43 = vld [vmem:[%s1 + $0x50] sm:$0xf]
  %v44 = vld [vmem:[%s1 + $0x54] sm:$0xf]
  %v45 = vld [vmem:[%s1 + $0x58] sm:$0xf]
  %v46 = vld [vmem:[%s1 + $0x5c] sm:$0xf]
  %v47 = vld [vmem:[%s1 + $0x60] sm:$0xf]
  %v48 = vld [vmem:[%s1 + $0x64] sm:$0xf]
  %v49 = vld [vmem:[%s1 + $0x68] sm:$0xf]
  %v50 = vld [vmem:[%s1 + $0x6c] sm:$0xf]
  %v51 = vld [vmem:[%s1 + $0x70] sm:$0xf]
  %v52 = vld [vmem:[%s1 + $0x74] sm:$0xf]
  %v53 = vld [vmem:[%s1 + $0x78] sm:$0xf]
  %v54 = vld [vmem:[%s1 + $0x7c] sm:$0xf]
  %v55 = vld [vmem:[%s1 + $0x80] sm:$0xf]
  %v56 = vld [vmem:[%s1 + $0x84] sm:$0xf]
  %v57 = vld [vmem:[%s1 + $0x88] sm:$0xf]
  %v58 = vld [vmem:[%s1 + $0x8c] sm:$0xf]
  %v59 = vld [vmem:[%s1 + $0x90] sm:$0xf]
  %v60 = vld [vmem:[%s1 + $0x94] sm:$0xf]
  %v61 = vld [vmem:[%s1 + $0x98] sm:$0xf]
  %v62 = vld [vmem:[%s1 + $0x9c] sm:$0xf]
  %v63 = vld [vmem:[%s1 + $0xa0] sm:$0xf]
  %v64 = vld [vmem:[%s1 + $0xa4] sm:$0xf]
  %v65 = vld [vmem:[%s1 + $0xa8] sm:$0xf]
  %v66 = vld [vmem:[%s1 + $0xac] sm:$0xf]
  %v67 = vld [vmem:[%s1 + $0xb0] sm:$0xf]
  %v68 = vld [vmem:[%s1 + $0xb4] sm:$0xf]
  %v69 = vld [vmem:[%s1 + $0xb8] sm:$0xf]
  %v70 = vld [vmem:[%s1 + $0xbc] sm:$0xf]
  %v71 = vld [vmem:[%s1 + $0xc0] sm:$0xf]
  %v72 = vld [vmem:[%s1 + $0xc4] sm:$0xf]
  %v73 = vld [vmem:[%s1 + $0xc8] sm:$0xf]
  %v74 = vld [vmem:[%s1 + $0xcc] sm:$0xf]
  %v75 = vld [vmem:[%s1 + $0xd0] sm:$0xf]
  %v76 = vld [vmem:[%s1 + $0xd4] sm:$0xf]
  %v77 = vld [vmem:[%s1 + $0xd8] sm:$0xf]
  %v78 = vld [vmem:[%s1 + $0xdc] sm:$0xf]
  %v79 = vld [vmem:[%s1 + $0xe0] sm:$0xf]
  %v80 = vld [vmem:[%s1 + $0xe4] sm:$0xf]
  %v81 = vld [vmem:[%s1 + $0xe8] sm:$0xf]
  %v82 = vld [vmem:[%s1 + $0xec] sm:$0xf]
  %v83 = vld [vmem:[%s1 + $0xf0] sm:$0xf]
  %v84 = vld [vmem:[%s1 + $0xf4] sm:$0xf]
  %v85 = vld [vmem:[%s1 + $0xf8] sm:$0xf]
  %v86 = vld [vmem:[%s1 + $0xfc] sm:$0xf]
  %v87 = vld [vmem:[%s1 + $0x100] sm:$0xf]
  %v88 = vld [vmem:[%s1 + $0x104] sm:$0xf]
  %v89 = vld [vmem:[%s1 + $0x108] sm:$0xf]
  %v90 = vld [vmem:[%s1 + $0x10c] sm:$0xf]
  %v91 = vld [vmem:[%s1 + $0x110] sm:$0xf]
  %v92 = vld [vmem:[%s1 + $0x114] sm:$0xf]
  %v93 = vld [vmem:[%s1 + $0x118] sm:$0xf]
  %v94 = vld [vmem:[%s1 + $0x11c] sm:$0xf]
  %v95 = vld [vmem:[%s1 + $0x120] sm:$0xf]
  %v96 = vld [vmem:[%s1 + $0x124] sm:$0xf]
  %v97 = vld [vmem:[%s1 + $0x128] sm:$0xf]
  %v98 = vld [vmem:[%s1 + $0x12c] sm:$0xf]
  %v99 = vld [vmem:[%s1 + $0x130] sm:$0xf]
  %v100 = vld [vmem:[%s1 + $0x134] sm:$0xf]
  %v101 = vld [vmem:[%s1 + $0x138] sm:$0xf]
  %v102 = vld [vmem:[%s1 + $0x13c] sm:$0xf]
  %v103 = vld [vmem:[%s1 + $0x140] sm:$0xf]
  %v104 = vld [vmem:[%s1 + $0x144] sm:$0xf]
  %v105 = vld [vmem:[%s1 + $0x148] sm:$0xf]
  %v106 = vld [vmem:[%s1 + $0x14c] sm:$0xf]
  %v107 = vld [vmem:[%s1 + $0x150] sm:$0xf]
  %v108 = vld [vmem:[%s1 + $0x154] sm:$0xf]
  %v109 = vld [vmem:[%s1 + $0x158] sm:$0xf]
  %v110 = vld [vmem:[%s1 + $0x15c] sm:$0xf]
  %v111 = vld [vmem:[%s1 + $0x160] sm:$0xf]
  %v112 = vld [vmem:[%s1 + $0x164] sm:$0xf]
  %v113 = vld [vmem:[%s1 + $0x168] sm:$0xf]
  %v114 = vld [vmem:[%s1 + $0x16c] sm:$0xf]
  %v115 = vld [vmem:[%s1 + $0x170] sm:$0xf]
  %v116 = vld [vmem:[%s1 + $0x174] sm:$0xf]
  %v117 = vld [vmem:[%s1 + $0x178] sm:$0xf]
  %v118 = vld [vmem:[%s1 + $0x17c] sm:$0xf]
  %v119 = vld [vmem:[%s1 + $0x180] sm:$0xf]
  %v120 = vld [vmem:[%s1 + $0x184] sm:$0xf]
  %v121 = vld [vmem:[%s1 + $0x188] sm:$0xf]
  %v122 = vld [vmem:[%s1 + $0x18c] sm:$0xf]
  %v123 = vld [vmem:[%s1 + $0x190] sm:$0xf]
  %v124 = vld [vmem:[%s1 + $0x194] sm:$0xf]
  %v125 = vld [vmem:[%s1 + $0x198] sm:$0xf]
  %v126 = vld [vmem:[%s1 + $0x19c] sm:$0xf]
  %v127 = vld [vmem:[%s1 + $0x1a0] sm:$0xf]
  %v128 = vld [vmem:[%s1 + $0x1a4] sm:$0xf]
  %v129 = vld [vmem:[%s1 + $0x1a8] sm:$0xf]
  %v130 = vld [vmem:[%s1 + $0x1ac] sm:$0xf]
  %v131 = vld [vmem:[%s1 + $0x1b0] sm:$0xf]
  %v132 = vld [vmem:[%s1 + $0x1b4] sm:$0xf]
  %v133 = vld [vmem:[%s1 + $0x1b8] sm:$0xf]
  %v134 = vld [vmem:[%s1 + $0x1bc] sm:$0xf]
  %v135 = vld [vmem:[%s1 + $0x1c0] sm:$0xf]
  %v136 = vld [vmem:[%s1 + $0x1c4] sm:$0xf]
  %v137 = vld [vmem:[%s1 + $0x1c8] sm:$0xf]
  %v138 = vld [vmem:[%s1 + $0x1cc] sm:$0xf]
  %v139 = vld [vmem:[%s1 + $0x1d0] sm:$0xf]
  %v140 = vld [vmem:[%s1 + $0x1d4] sm:$0xf]
  %v141 = vld [vmem:[%s1 + $0x1d8] sm:$0xf]
  %v142 = vld [vmem:[%s1 + $0x1dc] sm:$0xf]
  %v143 = vld [vmem:[%s1 + $0x1e0] sm:$0xf]
  %v144 = vld [vmem:[%s1 + $0x1e4] sm:$0xf]
  %v145 = vld [vmem:[%s1 + $0x1e8] sm:$0xf]
  %v146 = vld [vmem:[%s1 + $0x1ec] sm:$0xf]
  %v147 = vld [vmem:[%s1 + $0x1f0] sm:$0xf]
  %v148 = vld [vmem:[%s1 + $0x1f4] sm:$0xf]
  %v149 = vld [vmem:[%s1 + $0x1f8] sm:$0xf]
  %v150 = vld [vmem:[%s1 + $0x1fc] sm:$0xf]
  %v151 = vld [vmem:[%s1 + $0x200] sm:$0xf]
  %v152 = vld [vmem:[%s1 + $0x204] sm:$0xf]
  %v153 = vld [vmem:[%s1 + $0x208] sm:$0xf]
  %v154 = vld [vmem:[%s1 + $0x20c] sm:$0xf]
  %v155 = vld [vmem:[%s1 + $0x210] sm:$0xf]
  %v156 = vld [vmem:[%s1 + $0x214] sm:$0xf]
  %v157 = vld [vmem:[%s1 + $0x218] sm:$0xf]
  %v158 = vld [vmem:[%s1 + $0x21c] sm:$0xf]
  %v159 = vld [vmem:[%s1 + $0x220] sm:$0xf]
  %v160 = vld [vmem:[%s1 + $0x224] sm:$0xf]
  %v161 = vld [vmem:[%s1 + $0x228] sm:$0xf]
  %v162 = vld [vmem:[%s1 + $0x22c] sm:$0xf]
  %v163 = vld [vmem:[%s1 + $0x230] sm:$0xf]
  %v164 = vld [vmem:[%s1 + $0x234] sm:$0xf]
  %v165 = vld [vmem:[%s1 + $0x238] sm:$0xf]
  %v166 = vld [vmem:[%s1 + $0x23c] sm:$0xf]
  %v167 = vld [vmem:[%s2] sm:$0x1]
  %v169 = vlaneseq
  %v170 = vshrl.u32 %v169, 7
  %v171 = vsub.s32 0, %v170
  %v172 = vrot.slane %v167, %v171
  %v179 = vunpack.c.l.b16 %v18
  %v180 = vunpack.c.h.b16 %v18
  %v181 = vunpack.c.l.b16 %v19
  %v182 = vunpack.c.h.b16 %v19
  %v183 = vunpack.c.l.b16 %v20
  %v184 = vunpack.c.h.b16 %v20
  %v185 = vunpack.c.l.b16 %v21
  %v186 = vunpack.c.h.b16 %v21
  %v187 = vunpack.c.l.b16 %v22
  %v188 = vpack.c.b16 %v179, %v179
  %v189 = vpack.c.b16 %v180, %v180
  %v190 = vpack.c.b16 %v181, %v181
  %v191 = vpack.c.b16 %v182, %v182
  %v192 = vpack.c.b16 %v183, %v183
  %v193 = vpack.c.b16 %v184, %v184
  %v194 = vpack.c.b16 %v185, %v185
  %v195 = vpack.c.b16 %v186, %v186
  %v196 = vpack.c.b16 %v187, %v187
  %v350 = vunpack.c.l.b16 %v23
  %v351 = vunpack.c.l.b16 %v24
  %v352 = vunpack.c.l.b16 %v25
  %v353 = vunpack.c.l.b16 %v26
  %v354 = vunpack.c.l.b16 %v27
  %v355 = vunpack.c.l.b16 %v28
  %v356 = vunpack.c.l.b16 %v29
  %v357 = vunpack.c.l.b16 %v30
  %v358 = vunpack.c.l.b16 %v31
  %v359 = vunpack.c.l.b16 %v32
  %v360 = vunpack.c.l.b16 %v33
  %v361 = vunpack.c.l.b16 %v34
  %v362 = vunpack.c.l.b16 %v35
  %v363 = vunpack.c.l.b16 %v36
  %v364 = vunpack.c.l.b16 %v37
  %v365 = vunpack.c.l.b16 %v38
  %v366 = vunpack.c.l.b16 %v39
  %v367 = vunpack.c.l.b16 %v40
  %v368 = vunpack.c.l.b16 %v41
  %v369 = vunpack.c.l.b16 %v42
  %v370 = vunpack.c.l.b16 %v43
  %v371 = vunpack.c.l.b16 %v44
  %v372 = vunpack.c.l.b16 %v45
  %v373 = vunpack.c.l.b16 %v46
  %v374 = vunpack.c.l.b16 %v47
  %v375 = vunpack.c.l.b16 %v48
  %v376 = vunpack.c.l.b16 %v49
  %v377 = vunpack.c.l.b16 %v50
  %v378 = vunpack.c.l.b16 %v51
  %v379 = vunpack.c.l.b16 %v52
  %v380 = vunpack.c.l.b16 %v53
  %v381 = vunpack.c.l.b16 %v54
  %v382 = vunpack.c.l.b16 %v55
  %v383 = vunpack.c.l.b16 %v56
  %v384 = vunpack.c.l.b16 %v57
  %v385 = vunpack.c.l.b16 %v58
  %v386 = vunpack.c.l.b16 %v59
  %v387 = vunpack.c.l.b16 %v60
  %v388 = vunpack.c.l.b16 %v61
  %v389 = vunpack.c.l.b16 %v62
  %v390 = vunpack.c.l.b16 %v63
  %v391 = vunpack.c.l.b16 %v64
  %v392 = vunpack.c.l.b16 %v65
  %v393 = vunpack.c.l.b16 %v66
  %v394 = vunpack.c.l.b16 %v67
  %v395 = vunpack.c.l.b16 %v68
  %v396 = vunpack.c.l.b16 %v69
  %v397 = vunpack.c.l.b16 %v70
  %v398 = vunpack.c.l.b16 %v71
  %v399 = vunpack.c.l.b16 %v72
  %v400 = vunpack.c.l.b16 %v73
  %v401 = vunpack.c.l.b16 %v74
  %v402 = vunpack.c.l.b16 %v75
  %v403 = vunpack.c.l.b16 %v76
  %v404 = vunpack.c.l.b16 %v77
  %v405 = vunpack.c.l.b16 %v78
  %v406 = vunpack.c.l.b16 %v79
  %v407 = vunpack.c.l.b16 %v80
  %v408 = vunpack.c.l.b16 %v81
  %v409 = vunpack.c.l.b16 %v82
  %v410 = vunpack.c.l.b16 %v83
  %v411 = vunpack.c.l.b16 %v84
  %v412 = vunpack.c.l.b16 %v85
  %v413 = vunpack.c.l.b16 %v86
  %v414 = vunpack.c.l.b16 %v87
  %v415 = vunpack.c.l.b16 %v88
  %v416 = vunpack.c.l.b16 %v89
  %v417 = vunpack.c.l.b16 %v90
  %v418 = vunpack.c.l.b16 %v91
  %v419 = vunpack.c.l.b16 %v92
  %v420 = vunpack.c.l.b16 %v93
  %v421 = vunpack.c.l.b16 %v94
  %v422 = vunpack.c.l.b16 %v95
  %v423 = vunpack.c.l.b16 %v96
  %v424 = vunpack.c.l.b16 %v97
  %v425 = vunpack.c.l.b16 %v98
  %v426 = vunpack.c.l.b16 %v99
  %v427 = vunpack.c.l.b16 %v100
  %v428 = vunpack.c.l.b16 %v101
  %v429 = vunpack.c.l.b16 %v102
  %v430 = vunpack.c.l.b16 %v103
  %v431 = vunpack.c.l.b16 %v104
  %v432 = vunpack.c.l.b16 %v105
  %v433 = vunpack.c.l.b16 %v106
  %v434 = vunpack.c.l.b16 %v107
  %v435 = vunpack.c.l.b16 %v108
  %v436 = vunpack.c.l.b16 %v109
  %v437 = vunpack.c.l.b16 %v110
  %v438 = vunpack.c.l.b16 %v111
  %v439 = vunpack.c.l.b16 %v112
  %v440 = vunpack.c.l.b16 %v113
  %v441 = vunpack.c.l.b16 %v114
  %v442 = vunpack.c.l.b16 %v115
  %v443 = vunpack.c.l.b16 %v116
  %v444 = vunpack.c.l.b16 %v117
  %v445 = vunpack.c.l.b16 %v118
  %v446 = vunpack.c.l.b16 %v119
  %v447 = vunpack.c.l.b16 %v120
  %v448 = vunpack.c.l.b16 %v121
  %v449 = vunpack.c.l.b16 %v122
  %v450 = vunpack.c.l.b16 %v123
  %v451 = vunpack.c.l.b16 %v124
  %v452 = vunpack.c.l.b16 %v125
  %v453 = vunpack.c.l.b16 %v126
  %v454 = vunpack.c.l.b16 %v127
  %v455 = vunpack.c.l.b16 %v128
  %v456 = vunpack.c.l.b16 %v129
  %v457 = vunpack.c.l.b16 %v130
  %v458 = vunpack.c.l.b16 %v131
  %v459 = vunpack.c.l.b16 %v132
  %v460 = vunpack.c.l.b16 %v133
  %v461 = vunpack.c.l.b16 %v134
  %v462 = vunpack.c.l.b16 %v135
  %v463 = vunpack.c.l.b16 %v136
  %v464 = vunpack.c.l.b16 %v137
  %v465 = vunpack.c.l.b16 %v138
  %v466 = vunpack.c.l.b16 %v139
  %v467 = vunpack.c.l.b16 %v140
  %v468 = vunpack.c.l.b16 %v141
  %v469 = vunpack.c.l.b16 %v142
  %v470 = vunpack.c.l.b16 %v143
  %v471 = vunpack.c.l.b16 %v144
  %v472 = vunpack.c.l.b16 %v145
  %v473 = vunpack.c.l.b16 %v146
  %v474 = vunpack.c.l.b16 %v147
  %v475 = vunpack.c.l.b16 %v148
  %v476 = vunpack.c.l.b16 %v149
  %v477 = vunpack.c.l.b16 %v150
  %v478 = vunpack.c.l.b16 %v151
  %v479 = vunpack.c.l.b16 %v152
  %v480 = vunpack.c.l.b16 %v153
  %v481 = vunpack.c.l.b16 %v154
  %v482 = vunpack.c.l.b16 %v155
  %v483 = vunpack.c.l.b16 %v156
  %v484 = vunpack.c.l.b16 %v157
  %v485 = vunpack.c.l.b16 %v158
  %v486 = vunpack.c.l.b16 %v159
  %v487 = vunpack.c.l.b16 %v160
  %v488 = vunpack.c.l.b16 %v161
  %v489 = vunpack.c.l.b16 %v162
  %v490 = vunpack.c.l.b16 %v163
  %v491 = vunpack.c.l.b16 %v164
  %v492 = vunpack.c.l.b16 %v165
  %v493 = vunpack.c.l.b16 %v166
  %v494 = vpack.c.b16 %v351, %v350
  %v495 = vpack.c.b16 %v353, %v352
  %v496 = vpack.c.b16 %v355, %v354
  %v497 = vpack.c.b16 %v357, %v356
  %v498 = vpack.c.b16 %v359, %v358
  %v499 = vpack.c.b16 %v361, %v360
  %v500 = vpack.c.b16 %v363, %v362
  %v501 = vpack.c.b16 %v365, %v364
  %v502 = vpack.c.b16 %v367, %v366
  %v503 = vpack.c.b16 %v369, %v368
  %v504 = vpack.c.b16 %v371, %v370
  %v505 = vpack.c.b16 %v373, %v372
  %v506 = vpack.c.b16 %v375, %v374
  %v507 = vpack.c.b16 %v377, %v376
  %v508 = vpack.c.b16 %v379, %v378
  %v509 = vpack.c.b16 %v381, %v380
  %v510 = vpack.c.b16 %v383, %v382
  %v511 = vpack.c.b16 %v385, %v384
  %v512 = vpack.c.b16 %v387, %v386
  %v513 = vpack.c.b16 %v389, %v388
  %v514 = vpack.c.b16 %v391, %v390
  %v515 = vpack.c.b16 %v393, %v392
  %v516 = vpack.c.b16 %v395, %v394
  %v517 = vpack.c.b16 %v397, %v396
  %v518 = vpack.c.b16 %v399, %v398
  %v519 = vpack.c.b16 %v401, %v400
  %v520 = vpack.c.b16 %v403, %v402
  %v521 = vpack.c.b16 %v405, %v404
  %v522 = vpack.c.b16 %v407, %v406
  %v523 = vpack.c.b16 %v409, %v408
  %v524 = vpack.c.b16 %v411, %v410
  %v525 = vpack.c.b16 %v413, %v412
  %v526 = vpack.c.b16 %v415, %v414
  %v527 = vpack.c.b16 %v417, %v416
  %v528 = vpack.c.b16 %v419, %v418
  %v529 = vpack.c.b16 %v421, %v420
  %v530 = vpack.c.b16 %v423, %v422
  %v531 = vpack.c.b16 %v425, %v424
  %v532 = vpack.c.b16 %v427, %v426
  %v533 = vpack.c.b16 %v429, %v428
  %v534 = vpack.c.b16 %v431, %v430
  %v535 = vpack.c.b16 %v433, %v432
  %v536 = vpack.c.b16 %v435, %v434
  %v537 = vpack.c.b16 %v437, %v436
  %v538 = vpack.c.b16 %v439, %v438
  %v539 = vpack.c.b16 %v441, %v440
  %v540 = vpack.c.b16 %v443, %v442
  %v541 = vpack.c.b16 %v445, %v444
  %v542 = vpack.c.b16 %v447, %v446
  %v543 = vpack.c.b16 %v449, %v448
  %v544 = vpack.c.b16 %v451, %v450
  %v545 = vpack.c.b16 %v453, %v452
  %v546 = vpack.c.b16 %v455, %v454
  %v547 = vpack.c.b16 %v457, %v456
  %v548 = vpack.c.b16 %v459, %v458
  %v549 = vpack.c.b16 %v461, %v460
  %v550 = vpack.c.b16 %v463, %v462
  %v551 = vpack.c.b16 %v465, %v464
  %v552 = vpack.c.b16 %v467, %v466
  %v553 = vpack.c.b16 %v469, %v468
  %v554 = vpack.c.b16 %v471, %v470
  %v555 = vpack.c.b16 %v473, %v472
  %v556 = vpack.c.b16 %v475, %v474
  %v557 = vpack.c.b16 %v477, %v476
  %v558 = vpack.c.b16 %v479, %v478
  %v559 = vpack.c.b16 %v481, %v480
  %v560 = vpack.c.b16 %v483, %v482
  %v561 = vpack.c.b16 %v485, %v484
  %v562 = vpack.c.b16 %v487, %v486
  %v563 = vpack.c.b16 %v489, %v488
  %v564 = vpack.c.b16 %v491, %v490
  %v565 = vpack.c.b16 %v493, %v492
  %638 = vmatprep.subr.bf16.mxu0 0
  %639 = vmatpush1.bf16.msra.mxu0 %v494
  %640 = vmatprep.subr.bf16.mxu0 0
  %641 = vmatpush1.bf16.msra.mxu0 %v495
  %642 = vmatprep.subr.bf16.mxu0 0
  %643 = vmatpush1.bf16.msra.mxu0 %v496
  %644 = vmatprep.subr.bf16.mxu0 0
  %645 = vmatpush1.bf16.msra.mxu0 %v497
  %646 = vmatprep.subr.bf16.mxu0 0
  %647 = vmatpush1.bf16.msra.mxu0 %v498
  %648 = vmatprep.subr.bf16.mxu0 0
  %649 = vmatpush1.bf16.msra.mxu0 %v499
  %650 = vmatprep.subr.bf16.mxu0 0
  %651 = vmatpush1.bf16.msra.mxu0 %v500
  %652 = vmatprep.subr.bf16.mxu0 0
  %653 = vmatpush1.bf16.msra.mxu0 %v501
  %654 = vmatprep.subr.bf16.mxu0 0
  %655 = vmatpush1.bf16.msra.mxu0 %v502
  %656 = vmatprep.subr.bf16.mxu0 0
  %657 = vmatpush1.bf16.msra.mxu0 %v503
  %658 = vmatprep.subr.bf16.mxu0 0
  %659 = vmatpush1.bf16.msra.mxu0 %v504
  %660 = vmatprep.subr.bf16.mxu0 0
  %661 = vmatpush1.bf16.msra.mxu0 %v505
  %662 = vmatprep.subr.bf16.mxu0 0
  %663 = vmatpush1.bf16.msra.mxu0 %v506
  %664 = vmatprep.subr.bf16.mxu0 0
  %665 = vmatpush1.bf16.msra.mxu0 %v507
  %666 = vmatprep.subr.bf16.mxu0 0
  %667 = vmatpush1.bf16.msra.mxu0 %v508
  %668 = vmatprep.subr.bf16.mxu0 0
  %669 = vmatpush1.bf16.msra.mxu0 %v509
  %670 = vmatprep.mubr.bf16.mxu0 %v189
  %671 = vmatmul.mubr.bf16.gmra.mrb[0].mxu0 %v188
  %v672 = vpop.f32.mrb[0].mxu0
  %v673 = vadd.f32 %v172, %v672
  %v674 = vpop.f32.mrb[0].mxu0
  %v675 = vpop.f32.mrb[0].mxu0
  %v676 = vpop.f32.mrb[0].mxu0
  %677 = vdwg.mxu0
  %678 = vmatprep.subr.bf16.mxu0 0
  %679 = vmatpush1.bf16.msra.mxu0 %v510
  %680 = vmatprep.subr.bf16.mxu0 0
  %681 = vmatpush1.bf16.msra.mxu0 %v511
  %682 = vmatprep.subr.bf16.mxu0 0
  %683 = vmatpush1.bf16.msra.mxu0 %v512
  %684 = vmatprep.subr.bf16.mxu0 0
  %685 = vmatpush1.bf16.msra.mxu0 %v513
  %686 = vmatprep.subr.bf16.mxu0 0
  %687 = vmatpush1.bf16.msra.mxu0 %v514
  %688 = vmatprep.subr.bf16.mxu0 0
  %689 = vmatpush1.bf16.msra.mxu0 %v515
  %690 = vmatprep.subr.bf16.mxu0 0
  %691 = vmatpush1.bf16.msra.mxu0 %v516
  %692 = vmatprep.subr.bf16.mxu0 0
  %693 = vmatpush1.bf16.msra.mxu0 %v517
  %694 = vmatprep.subr.bf16.mxu0 0
  %695 = vmatpush1.bf16.msra.mxu0 %v518
  %696 = vmatprep.subr.bf16.mxu0 0
  %697 = vmatpush1.bf16.msra.mxu0 %v519
  %698 = vmatprep.subr.bf16.mxu0 0
  %699 = vmatpush1.bf16.msra.mxu0 %v520
  %700 = vmatprep.subr.bf16.mxu0 0
  %701 = vmatpush1.bf16.msra.mxu0 %v521
  %702 = vmatprep.subr.bf16.mxu0 0
  %703 = vmatpush1.bf16.msra.mxu0 %v522
  %704 = vmatprep.subr.bf16.mxu0 0
  %705 = vmatpush1.bf16.msra.mxu0 %v523
  %706 = vmatprep.subr.bf16.mxu0 0
  %707 = vmatpush1.bf16.msra.mxu0 %v524
  %708 = vmatprep.subr.bf16.mxu0 0
  %709 = vmatpush1.bf16.msra.mxu0 %v525
  %710 = vmatprep.mubr.bf16.mxu0 %v191
  %711 = vmatmul.mubr.bf16.gmra.mrb[0].mxu0 %v190
  %v712 = vpop.f32.mrb[0].mxu0
  %v713 = vadd.f32 %v673, %v712
  %v714 = vpop.f32.mrb[0].mxu0
  %v715 = vpop.f32.mrb[0].mxu0
  %v716 = vpop.f32.mrb[0].mxu0
  %717 = vdwg.mxu0
  %718 = vmatprep.subr.bf16.mxu0 0
  %719 = vmatpush1.bf16.msra.mxu0 %v526
  %720 = vmatprep.subr.bf16.mxu0 0
  %721 = vmatpush1.bf16.msra.mxu0 %v527
  %722 = vmatprep.subr.bf16.mxu0 0
  %723 = vmatpush1.bf16.msra.mxu0 %v528
  %724 = vmatprep.subr.bf16.mxu0 0
  %725 = vmatpush1.bf16.msra.mxu0 %v529
  %726 = vmatprep.subr.bf16.mxu0 0
  %727 = vmatpush1.bf16.msra.mxu0 %v530
  %728 = vmatprep.subr.bf16.mxu0 0
  %729 = vmatpush1.bf16.msra.mxu0 %v531
  %730 = vmatprep.subr.bf16.mxu0 0
  %731 = vmatpush1.bf16.msra.mxu0 %v532
  %732 = vmatprep.subr.bf16.mxu0 0
  %733 = vmatpush1.bf16.msra.mxu0 %v533
  %734 = vmatprep.subr.bf16.mxu0 0
  %735 = vmatpush1.bf16.msra.mxu0 %v534
  %736 = vmatprep.subr.bf16.mxu0 0
  %737 = vmatpush1.bf16.msra.mxu0 %v535
  %738 = vmatprep.subr.bf16.mxu0 0
  %739 = vmatpush1.bf16.msra.mxu0 %v536
  %740 = vmatprep.subr.bf16.mxu0 0
  %741 = vmatpush1.bf16.msra.mxu0 %v537
  %742 = vmatprep.subr.bf16.mxu0 0
  %743 = vmatpush1.bf16.msra.mxu0 %v538
  %744 = vmatprep.subr.bf16.mxu0 0
  %745 = vmatpush1.bf16.msra.mxu0 %v539
  %746 = vmatprep.subr.bf16.mxu0 0
  %747 = vmatpush1.bf16.msra.mxu0 %v540
  %748 = vmatprep.subr.bf16.mxu0 0
  %749 = vmatpush1.bf16.msra.mxu0 %v541
  %750 = vmatprep.mubr.bf16.mxu0 %v193
  %751 = vmatmul.mubr.bf16.gmra.mrb[0].mxu0 %v192
  %v752 = vpop.f32.mrb[0].mxu0
  %v753 = vadd.f32 %v713, %v752
  %v754 = vpop.f32.mrb[0].mxu0
  %v755 = vpop.f32.mrb[0].mxu0
  %v756 = vpop.f32.mrb[0].mxu0
  %757 = vdwg.mxu0
  %758 = vmatprep.subr.bf16.mxu0 0
  %759 = vmatpush1.bf16.msra.mxu0 %v542
  %760 = vmatprep.subr.bf16.mxu0 0
  %761 = vmatpush1.bf16.msra.mxu0 %v543
  %762 = vmatprep.subr.bf16.mxu0 0
  %763 = vmatpush1.bf16.msra.mxu0 %v544
  %764 = vmatprep.subr.bf16.mxu0 0
  %765 = vmatpush1.bf16.msra.mxu0 %v545
  %766 = vmatprep.subr.bf16.mxu0 0
  %767 = vmatpush1.bf16.msra.mxu0 %v546
  %768 = vmatprep.subr.bf16.mxu0 0
  %769 = vmatpush1.bf16.msra.mxu0 %v547
  %770 = vmatprep.subr.bf16.mxu0 0
  %771 = vmatpush1.bf16.msra.mxu0 %v548
  %772 = vmatprep.subr.bf16.mxu0 0
  %773 = vmatpush1.bf16.msra.mxu0 %v549
  %774 = vmatprep.subr.bf16.mxu0 0
  %775 = vmatpush1.bf16.msra.mxu0 %v550
  %776 = vmatprep.subr.bf16.mxu0 0
  %777 = vmatpush1.bf16.msra.mxu0 %v551
  %778 = vmatprep.subr.bf16.mxu0 0
  %779 = vmatpush1.bf16.msra.mxu0 %v552
  %780 = vmatprep.subr.bf16.mxu0 0
  %781 = vmatpush1.bf16.msra.mxu0 %v553
  %782 = vmatprep.subr.bf16.mxu0 0
  %783 = vmatpush1.bf16.msra.mxu0 %v554
  %784 = vmatprep.subr.bf16.mxu0 0
  %785 = vmatpush1.bf16.msra.mxu0 %v555
  %786 = vmatprep.subr.bf16.mxu0 0
  %787 = vmatpush1.bf16.msra.mxu0 %v556
  %788 = vmatprep.subr.bf16.mxu0 0
  %789 = vmatpush1.bf16.msra.mxu0 %v557
  %790 = vmatprep.mubr.bf16.mxu0 %v195
  %791 = vmatmul.mubr.bf16.gmra.mrb[0].mxu0 %v194
  %v792 = vpop.f32.mrb[0].mxu0
  %v793 = vadd.f32 %v753, %v792
  %v794 = vpop.f32.mrb[0].mxu0
  %v795 = vpop.f32.mrb[0].mxu0
  %v796 = vpop.f32.mrb[0].mxu0
  %797 = vdwg.mxu0
  %798 = vmatprep.subr.bf16.mxu0 0
  %799 = vmatpush1.bf16.msra.mxu0 %v558
  %800 = vmatprep.subr.bf16.mxu0 0
  %801 = vmatpush1.bf16.msra.mxu0 %v559
  %802 = vmatprep.subr.bf16.mxu0 0
  %803 = vmatpush1.bf16.msra.mxu0 %v560
  %804 = vmatprep.subr.bf16.mxu0 0
  %805 = vmatpush1.bf16.msra.mxu0 %v561
  %806 = vmatprep.subr.bf16.mxu0 0
  %807 = vmatpush1.bf16.msra.mxu0 %v562
  %808 = vmatprep.subr.bf16.mxu0 0
  %809 = vmatpush1.bf16.msra.mxu0 %v563
  %810 = vmatprep.subr.bf16.mxu0 0
  %811 = vmatpush1.bf16.msra.mxu0 %v564
  %812 = vmatprep.subr.bf16.mxu0 0
  %813 = vmatpush1.bf16.msra.mxu0 %v565
  %814 = vmatprep.subr.bf16.mxu0 0
  %815 = vmatpush1.bf16.msra.mxu0 0
  %816 = vmatprep.subr.bf16.mxu0 0
  %817 = vmatpush1.bf16.msra.mxu0 0
  %818 = vmatprep.subr.bf16.mxu0 0
  %819 = vmatpush1.bf16.msra.mxu0 0
  %820 = vmatprep.subr.bf16.mxu0 0
  %821 = vmatpush1.bf16.msra.mxu0 0
  %822 = vmatprep.subr.bf16.mxu0 0
  %823 = vmatpush1.bf16.msra.mxu0 0
  %824 = vmatprep.subr.bf16.mxu0 0
  %825 = vmatpush1.bf16.msra.mxu0 0
  %826 = vmatprep.subr.bf16.mxu0 0
  %827 = vmatpush1.bf16.msra.mxu0 0
  %828 = vmatprep.subr.bf16.mxu0 0
  %829 = vmatpush1.bf16.msra.mxu0 0
  %830 = vmatprep.mubr.bf16.mxu0 0
  %831 = vmatmul.mubr.bf16.gmra.mrb[0].mxu0 %v196
  %v832 = vpop.f32.mrb[0].mxu0
  %v833 = vadd.f32 %v793, %v832
  %v834 = vpop.f32.mrb[0].mxu0
  %v835 = vpop.f32.mrb[0].mxu0
  %v836 = vpop.f32.mrb[0].mxu0
  %837 = vdwg.mxu0
  %v838 = vmax.f32 %v833, 0.0
  %v839 = vld [vmem:[%s3] sm:$0xf]
  %v840 = vunpack.c.l.bf16 %v839
  %v841 = vadd.f32 %v838, %v840
  %v842 = vpack.c.bf16 %v841, %v841
  %843 = vst [vmem:[%s4] sm:$0xf] %v842
  // Predicated region
  $region18: #{fcn_forward.13} parent=0 // pred_check
    _
  $region19: #{fcn_forward.13} parent=0 // pred_check_branch
    %845 = sbr.rel (0) target = $region21
  $region20: #{fcn_forward.13} parent=0 // pred_region
    _
  $region21: #{fcn_forward.13} parent=0 // pred_fallthru
    _
  // Predicated region
  $region22: #{fcn_forward.13} parent=0 // pred_check
    _
  $region23: #{fcn_forward.13} parent=0 // pred_check_branch
    %847 = sbr.rel (0) target = $region25
  $region24: #{fcn_forward.13} parent=0 // pred_region
    _
  $region25: #{fcn_forward.13} parent=0 // pred_fallthru
    _

// kernel: tile.18
$region0: #{tile.18}
  #allocation0 [shape = 's32[1]{0}', space=sflag, size = 0x4, scoped, tag = 'scoped memory for tile.18']
  %s0 = inlined_call_operand.vmem [shape: f32[5], index: 0, kind: input, shape index: {}]
  %s1 = inlined_call_operand.vmem [shape: f32[4,5], index: 1, kind: output, shape index: {}]
  // Predicated region
  $region2: #{tile.18} parent=0 // pred_check
    _
  $region3: #{tile.18} parent=0 // pred_check_branch
    %3 = sbr.rel (0) target = $region5
  $region4: #{tile.18} parent=0 // pred_region
    _
  $region5: #{tile.18} parent=0 // pred_fallthru
    _
  %v4 = vld [vmem:[%s0] ss:$0 sm:$0xff]
  %5 = vst [vmem:[%s1] sm:$0xf] %v4

// kernel: tile.19
$region0: #{tile.19}
  %s0 = inlined_call_operand.vmem [shape: f32[4,5], index: 0, kind: input, shape index: {}]
  %s1 = inlined_call_operand.vmem [shape: f32[1,20], index: 1, kind: output, shape index: {}]
  $region1: #{tile.19} parent=0
    #allocation0 [shape = 'u8[4096]{0}', space=vmem, size = 0x1000, scoped, tag = 'scoped mem for output reshape']
    #allocation1 [shape = 'u8[4096]{0}', space=vmem, size = 0x1000, scoped, tag = 'scoped mem for input reshape']
    %s3 = sshllo.u32 0, 4
    %v4 = vld [vmem:[%s0] sm:%s3]
    %5 = vst [vmem:[#allocation1] sm:%s3] %v4
    %v6 = vld [vmem:[#allocation1] sm:$0x1]
    %vm7 = vcmask 39936
    %8 = vst.msk [vmem:[#allocation0] sm:$0x1] %vm7, %v6
    %s9 = scalar_lea.vmem [#allocation1], 3
    %v10 = vld [vmem:[%s9] sm:$0x1]
    %11 = vrot.lane.b32.xlu0 %v10, 15
    %v12 = vpop.permute.xlu0 %11
    %vm13 = vcmask 162936
    %14 = vst.msk [vmem:[#allocation0] sm:$0x1] %vm13, %v12
    %s15 = scalar_lea.vmem [#allocation1], 2
    %v16 = vld [vmem:[%s15] sm:$0x1]
    %17 = vrot.lane.b32.xlu0 %v16, 10
    %v18 = vpop.permute.xlu0 %17
    %vm19 = vcmask 121936
    %20 = vst.msk [vmem:[#allocation0] sm:$0x1] %vm19, %v18
    %s21 = scalar_lea.vmem [#allocation1], 1
    %v22 = vld [vmem:[%s21] sm:$0x1]
    %23 = vrot.lane.b32.xlu0 %v22, 5
    %v24 = vpop.permute.xlu0 %23
    %vm25 = vcmask 80936
    %26 = vst.msk [vmem:[#allocation0] sm:$0x1] %vm25, %v24
    %s28 = sshllo.u32 0, 1
    %v30 = vld [vmem:[#allocation0] sm:%s28]
    %s31 = sshllo.u32 0, 1
    %32 = vst [vmem:[%s1] sm:%s31] %v30

// kernel: fcn_forward.15
$region0: #{fcn_forward.15}
  #allocation0 [shape = 'u32[]', space=smem, size = 0x4, offset = 0x4, fixed_abs, tag = 'smem constant byte address 0x4 - core index']
  #allocation1 [shape = 'u32[144,128]{1,0:T(1,128)}', space=vmem, size = 0x12000, scoped, tag = 'internal scratch']
  %s0 = inlined_call_operand.vmem [shape: bf16[8,80], index: 0, kind: input, shape index: {}]
  %s1 = inlined_call_operand.vmem [shape: bf16[80,20], index: 1, kind: input, shape index: {}]
  %s2 = inlined_call_operand.vmem [shape: f32[1,20], index: 2, kind: input, shape index: {}]
  %s3 = inlined_call_operand.vmem [shape: bf16[8,20], index: 3, kind: output, shape index: {}]
  %s4 = sld [smem:[#allocation0]]
  $region22: #{fcn_forward.15} parent=0
    _
  %s6 = ssub.s32 1, %s4
  %s7 = scalar_select 0, %s6, %s4
  // Predicated region
  $region2: #{fcn_forward.15} parent=0 // pred_check
    _
  $region3: #{fcn_forward.15} parent=0 // pred_check_branch
    %9 = sbr.rel (0) target = $region5
  $region4: #{fcn_forward.15} parent=0 // pred_region
    _
  $region5: #{fcn_forward.15} parent=0 // pred_fallthru
    _
  // Predicated region
  $region6: #{fcn_forward.15} parent=0 // pred_check
    _
  $region7: #{fcn_forward.15} parent=0 // pred_check_branch
    %11 = sbr.rel (0) target = $region9
  $region8: #{fcn_forward.15} parent=0 // pred_region
    _
  $region9: #{fcn_forward.15} parent=0 // pred_fallthru
    _
  // Predicated region
  $region10: #{fcn_forward.15} parent=0 // pred_check
    _
  $region11: #{fcn_forward.15} parent=0 // pred_check_branch
    %13 = sbr.rel (0) target = $region13
  $region12: #{fcn_forward.15} parent=0 // pred_region
    _
  $region13: #{fcn_forward.15} parent=0 // pred_fallthru
    _
  %v15 = vld [vmem:[%s0] sm:$0xf]
  %v16 = vld [vmem:[%s1] sm:$0xf]
  %v17 = vld [vmem:[%s1 + $0x4] sm:$0xf]
  %v18 = vld [vmem:[%s1 + $0x8] sm:$0xf]
  %v19 = vld [vmem:[%s1 + $0xc] sm:$0xf]
  %v20 = vld [vmem:[%s1 + $0x10] sm:$0xf]
  %v21 = vld [vmem:[%s1 + $0x14] sm:$0xf]
  %v22 = vld [vmem:[%s1 + $0x18] sm:$0xf]
  %v23 = vld [vmem:[%s1 + $0x1c] sm:$0xf]
  %v24 = vld [vmem:[%s1 + $0x20] sm:$0xf]
  %v25 = vld [vmem:[%s1 + $0x24] sm:$0xf]
  %v26 = vld [vmem:[%s2] sm:$0x1]
  %v28 = vlaneseq
  %v29 = vshrl.u32 %v28, 7
  %v30 = vsub.s32 0, %v29
  %v31 = vrot.slane %v26, %v30
  %v43 = vunpack.c.l.b16 %v16
  %v44 = vunpack.c.l.b16 %v17
  %v45 = vunpack.c.l.b16 %v18
  %v46 = vunpack.c.l.b16 %v19
  %v47 = vunpack.c.l.b16 %v20
  %v48 = vunpack.c.l.b16 %v21
  %v49 = vunpack.c.l.b16 %v22
  %v50 = vunpack.c.l.b16 %v23
  %v51 = vunpack.c.l.b16 %v24
  %v52 = vunpack.c.l.b16 %v25
  %v53 = vpack.c.b16 %v44, %v43
  %v54 = vpack.c.b16 %v46, %v45
  %v55 = vpack.c.b16 %v48, %v47
  %v56 = vpack.c.b16 %v50, %v49
  %v57 = vpack.c.b16 %v52, %v51
  %vm63 = vcmask 654336
  %v65 = vsel %vm63, %v15, 0
  %67 = vmatprep.subr.bf16.mxu0 0
  %68 = vmatpush1.bf16.msra.mxu0 %v53
  %69 = vmatprep.subr.bf16.mxu0 0
  %70 = vmatpush1.bf16.msra.mxu0 %v54
  %71 = vmatprep.subr.bf16.mxu0 0
  %72 = vmatpush1.bf16.msra.mxu0 %v55
  %73 = vmatprep.subr.bf16.mxu0 0
  %74 = vmatpush1.bf16.msra.mxu0 %v56
  %75 = vmatprep.subr.bf16.mxu0 0
  %76 = vmatpush1.bf16.msra.mxu0 %v57
  %77 = vmatprep.subr.bf16.mxu0 0
  %78 = vmatpush1.bf16.msra.mxu0 0
  %79 = vmatprep.subr.bf16.mxu0 0
  %80 = vmatpush1.bf16.msra.mxu0 0
  %81 = vmatprep.subr.bf16.mxu0 0
  %82 = vmatpush1.bf16.msra.mxu0 0
  %83 = vmatprep.subr.bf16.mxu0 0
  %84 = vmatpush1.bf16.msra.mxu0 0
  %85 = vmatprep.subr.bf16.mxu0 0
  %86 = vmatpush1.bf16.msra.mxu0 0
  %87 = vmatprep.subr.bf16.mxu0 0
  %88 = vmatpush1.bf16.msra.mxu0 0
  %89 = vmatprep.subr.bf16.mxu0 0
  %90 = vmatpush1.bf16.msra.mxu0 0
  %91 = vmatprep.subr.bf16.mxu0 0
  %92 = vmatpush1.bf16.msra.mxu0 0
  %93 = vmatprep.subr.bf16.mxu0 0
  %94 = vmatpush1.bf16.msra.mxu0 0
  %95 = vmatprep.subr.bf16.mxu0 0
  %96 = vmatpush1.bf16.msra.mxu0 0
  %97 = vmatprep.subr.bf16.mxu0 0
  %98 = vmatpush1.bf16.msra.mxu0 0
  %99 = vmatprep.mubr.bf16.mxu0 0
  %100 = vmatmul.mubr.bf16.gmra.mrb[0].mxu0 %v65
  %v101 = vpop.f32.mrb[0].mxu0
  %v102 = vadd.f32 %v31, %v101
  %v103 = vpop.f32.mrb[0].mxu0
  %v104 = vpop.f32.mrb[0].mxu0
  %v105 = vpop.f32.mrb[0].mxu0
  %106 = vdwg.mxu0
  %v107 = vpack.c.bf16 %v102, %v102
  %vm108 = vcmask 158720
  %109 = vst.msk [vmem:[%s3] sm:$0xf] %vm108, %v107
  // Predicated region
  $region14: #{fcn_forward.15} parent=0 // pred_check
    _
  $region15: #{fcn_forward.15} parent=0 // pred_check_branch
    %111 = sbr.rel (0) target = $region17
  $region16: #{fcn_forward.15} parent=0 // pred_region
    _
  $region17: #{fcn_forward.15} parent=0 // pred_fallthru
    _
  // Predicated region
  $region18: #{fcn_forward.15} parent=0 // pred_check
    _
  $region19: #{fcn_forward.15} parent=0 // pred_check_branch
    %113 = sbr.rel (0) target = $region21
  $region20: #{fcn_forward.15} parent=0 // pred_region
    _
  $region21: #{fcn_forward.15} parent=0 // pred_fallthru
    _

// kernel: fcn_forward.16
$region0: #{fcn_forward.16}
  #allocation0 [shape = 'u32[]', space=smem, size = 0x4, offset = 0x4, fixed_abs, tag = 'smem constant byte address 0x4 - core index']
  #allocation1 [shape = 'u32[144,128]{1,0:T(1,128)}', space=vmem, size = 0x12000, scoped, tag = 'internal scratch']
  %s0 = inlined_call_operand.vmem [shape: bf16[32,32], index: 0, kind: input, shape index: {}]
  %s1 = inlined_call_operand.vmem [shape: bf16[32,20], index: 1, kind: input, shape index: {}]
  %s2 = inlined_call_operand.vmem [shape: f32[1,20], index: 2, kind: input, shape index: {}]
  %s3 = inlined_call_operand.vmem [shape: bf16[32,20], index: 3, kind: output, shape index: {}]
  %s4 = sld [smem:[#allocation0]]
  $region22: #{fcn_forward.16} parent=0
    _
  %s6 = ssub.s32 1, %s4
  %s7 = scalar_select 0, %s6, %s4
  // Predicated region
  $region2: #{fcn_forward.16} parent=0 // pred_check
    _
  $region3: #{fcn_forward.16} parent=0 // pred_check_branch
    %9 = sbr.rel (0) target = $region5
  $region4: #{fcn_forward.16} parent=0 // pred_region
    _
  $region5: #{fcn_forward.16} parent=0 // pred_fallthru
    _
  // Predicated region
  $region6: #{fcn_forward.16} parent=0 // pred_check
    _
  $region7: #{fcn_forward.16} parent=0 // pred_check_branch
    %11 = sbr.rel (0) target = $region9
  $region8: #{fcn_forward.16} parent=0 // pred_region
    _
  $region9: #{fcn_forward.16} parent=0 // pred_fallthru
    _
  // Predicated region
  $region10: #{fcn_forward.16} parent=0 // pred_check
    _
  $region11: #{fcn_forward.16} parent=0 // pred_check_branch
    %13 = sbr.rel (0) target = $region13
  $region12: #{fcn_forward.16} parent=0 // pred_region
    _
  $region13: #{fcn_forward.16} parent=0 // pred_fallthru
    _
  %v15 = vld [vmem:[%s0] sm:$0xf]
  %v16 = vld [vmem:[%s0 + $0x4] sm:$0xf]
  %v17 = vld [vmem:[%s0 + $0x8] sm:$0xf]
  %v18 = vld [vmem:[%s0 + $0xc] sm:$0xf]
  %v19 = vld [vmem:[%s1] sm:$0xf]
  %v20 = vld [vmem:[%s1 + $0x4] sm:$0xf]
  %v21 = vld [vmem:[%s1 + $0x8] sm:$0xf]
  %v22 = vld [vmem:[%s1 + $0xc] sm:$0xf]
  %v23 = vld [vmem:[%s2] sm:$0x1]
  %v25 = vlaneseq
  %v26 = vshrl.u32 %v25, 7
  %v27 = vsub.s32 0, %v26
  %v28 = vrot.slane %v23, %v27
  %v34 = vunpack.c.l.b16 %v15
  %v35 = vunpack.c.l.b16 %v16
  %v36 = vunpack.c.l.b16 %v17
  %v37 = vunpack.c.l.b16 %v18
  %v38 = vpack.c.b16 %v35, %v34
  %v39 = vpack.c.b16 %v37, %v36
  %v44 = vunpack.c.l.b16 %v19
  %v45 = vunpack.c.l.b16 %v20
  %v46 = vunpack.c.l.b16 %v21
  %v47 = vunpack.c.l.b16 %v22
  %v48 = vpack.c.b16 %v45, %v44
  %v49 = vpack.c.b16 %v47, %v46
  %vm52 = vcmask 261120
  %v54 = vsel %vm52, %v38, 0
  %v57 = vsel %vm52, %v39, 0
  %59 = vmatprep.subr.bf16.mxu0 0
  %60 = vmatpush1.bf16.msra.mxu0 %v48
  %61 = vmatprep.subr.bf16.mxu0 0
  %62 = vmatpush1.bf16.msra.mxu0 %v49
  %63 = vmatprep.subr.bf16.mxu0 0
  %64 = vmatpush1.bf16.msra.mxu0 0
  %65 = vmatprep.subr.bf16.mxu0 0
  %66 = vmatpush1.bf16.msra.mxu0 0
  %67 = vmatprep.subr.bf16.mxu0 0
  %68 = vmatpush1.bf16.msra.mxu0 0
  %69 = vmatprep.subr.bf16.mxu0 0
  %70 = vmatpush1.bf16.msra.mxu0 0
  %71 = vmatprep.subr.bf16.mxu0 0
  %72 = vmatpush1.bf16.msra.mxu0 0
  %73 = vmatprep.subr.bf16.mxu0 0
  %74 = vmatpush1.bf16.msra.mxu0 0
  %75 = vmatprep.subr.bf16.mxu0 0
  %76 = vmatpush1.bf16.msra.mxu0 0
  %77 = vmatprep.subr.bf16.mxu0 0
  %78 = vmatpush1.bf16.msra.mxu0 0
  %79 = vmatprep.subr.bf16.mxu0 0
  %80 = vmatpush1.bf16.msra.mxu0 0
  %81 = vmatprep.subr.bf16.mxu0 0
  %82 = vmatpush1.bf16.msra.mxu0 0
  %83 = vmatprep.subr.bf16.mxu0 0
  %84 = vmatpush1.bf16.msra.mxu0 0
  %85 = vmatprep.subr.bf16.mxu0 0
  %86 = vmatpush1.bf16.msra.mxu0 0
  %87 = vmatprep.subr.bf16.mxu0 0
  %88 = vmatpush1.bf16.msra.mxu0 0
  %89 = vmatprep.subr.bf16.mxu0 0
  %90 = vmatpush1.bf16.msra.mxu0 0
  %91 = vmatprep.mubr.bf16.mxu0 0
  %92 = vmatmul.mubr.bf16.gmra.mrb[0].mxu0 %v54
  %v93 = vpop.f32.mrb[0].mxu0
  %v94 = vadd.f32 %v28, %v93
  %v95 = vpop.f32.mrb[0].mxu0
  %v96 = vpop.f32.mrb[0].mxu0
  %v97 = vadd.f32 %v28, %v96
  %v98 = vpop.f32.mrb[0].mxu0
  %99 = vmatprep.mubr.bf16.mxu0 0
  %100 = vmatmul.mubr.bf16.gmra.mrb[0].mxu0 %v57
  %v101 = vpop.f32.mrb[0].mxu0
  %v102 = vadd.f32 %v28, %v101
  %v103 = vpop.f32.mrb[0].mxu0
  %v104 = vpop.f32.mrb[0].mxu0
  %v105 = vadd.f32 %v28, %v104
  %v106 = vpop.f32.mrb[0].mxu0
  %107 = vdwg.mxu0
  %v108 = vpack.c.bf16 %v97, %v94
  %v109 = vpack.c.bf16 %v105, %v102
  %v112 = vunpack.c.l.b16 %v108
  %v113 = vunpack.c.h.b16 %v108
  %v114 = vunpack.c.l.b16 %v109
  %v115 = vunpack.c.h.b16 %v109
  %v116 = vpack.c.b16 %v112, %v112
  %v117 = vpack.c.b16 %v113, %v113
  %v118 = vpack.c.b16 %v114, %v114
  %v119 = vpack.c.b16 %v115, %v115
  %vm124 = vcmask 158720
  %125 = vst.msk [vmem:[%s3] sm:$0xf] %vm124, %v116
  %126 = vst.msk [vmem:[%s3 + $0x4] sm:$0xf] %vm124, %v117
  %127 = vst.msk [vmem:[%s3 + $0x8] sm:$0xf] %vm124, %v118
  %128 = vst.msk [vmem:[%s3 + $0xc] sm:$0xf] %vm124, %v119
  // Predicated region
  $region14: #{fcn_forward.16} parent=0 // pred_check
    _
  $region15: #{fcn_forward.16} parent=0 // pred_check_branch
    %130 = sbr.rel (0) target = $region17
  $region16: #{fcn_forward.16} parent=0 // pred_region
    _
  $region17: #{fcn_forward.16} parent=0 // pred_fallthru
    _
  // Predicated region
  $region18: #{fcn_forward.16} parent=0 // pred_check
    _
  $region19: #{fcn_forward.16} parent=0 // pred_check_branch
    %132 = sbr.rel (0) target = $region21
  $region20: #{fcn_forward.16} parent=0 // pred_region
    _
  $region21: #{fcn_forward.16} parent=0 // pred_fallthru
    _

// kernel: fcn_forward.17
$region0: #{fcn_forward.17}
  #allocation0 [shape = 'u32[]', space=smem, size = 0x4, offset = 0x4, fixed_abs, tag = 'smem constant byte address 0x4 - core index']
  #allocation1 [shape = 'u32[144,128]{1,0:T(1,128)}', space=vmem, size = 0x12000, scoped, tag = 'internal scratch']
  %s0 = inlined_call_operand.vmem [shape: bf16[128,32], index: 0, kind: input, shape index: {}]
  %s1 = inlined_call_operand.vmem [shape: bf16[32,20], index: 1, kind: input, shape index: {}]
  %s2 = inlined_call_operand.vmem [shape: f32[1,20], index: 2, kind: input, shape index: {}]
  %s3 = inlined_call_operand.vmem [shape: bf16[128,20], index: 3, kind: output, shape index: {}]
  %s4 = sld [smem:[#allocation0]]
  $region22: #{fcn_forward.17} parent=0
    _
  %s6 = ssub.s32 1, %s4
  %s7 = scalar_select 0, %s6, %s4
  // Predicated region
  $region2: #{fcn_forward.17} parent=0 // pred_check
    _
  $region3: #{fcn_forward.17} parent=0 // pred_check_branch
    %9 = sbr.rel (0) target = $region5
  $region4: #{fcn_forward.17} parent=0 // pred_region
    _
  $region5: #{fcn_forward.17} parent=0 // pred_fallthru
    _
  // Predicated region
  $region6: #{fcn_forward.17} parent=0 // pred_check
    _
  $region7: #{fcn_forward.17} parent=0 // pred_check_branch
    %11 = sbr.rel (0) target = $region9
  $region8: #{fcn_forward.17} parent=0 // pred_region
    _
  $region9: #{fcn_forward.17} parent=0 // pred_fallthru
    _
  // Predicated region
  $region10: #{fcn_forward.17} parent=0 // pred_check
    _
  $region11: #{fcn_forward.17} parent=0 // pred_check_branch
    %13 = sbr.rel (0) target = $region13
  $region12: #{fcn_forward.17} parent=0 // pred_region
    _
  $region13: #{fcn_forward.17} parent=0 // pred_fallthru
    _
  %v15 = vld [vmem:[%s0] sm:$0xf]
  %v16 = vld [vmem:[%s0 + $0x4] sm:$0xf]
  %v17 = vld [vmem:[%s0 + $0x8] sm:$0xf]
  %v18 = vld [vmem:[%s0 + $0xc] sm:$0xf]
  %v19 = vld [vmem:[%s0 + $0x10] sm:$0xf]
  %v20 = vld [vmem:[%s0 + $0x14] sm:$0xf]
  %v21 = vld [vmem:[%s0 + $0x18] sm:$0xf]
  %v22 = vld [vmem:[%s0 + $0x1c] sm:$0xf]
  %v23 = vld [vmem:[%s0 + $0x20] sm:$0xf]
  %v24 = vld [vmem:[%s0 + $0x24] sm:$0xf]
  %v25 = vld [vmem:[%s0 + $0x28] sm:$0xf]
  %v26 = vld [vmem:[%s0 + $0x2c] sm:$0xf]
  %v27 = vld [vmem:[%s0 + $0x30] sm:$0xf]
  %v28 = vld [vmem:[%s0 + $0x34] sm:$0xf]
  %v29 = vld [vmem:[%s0 + $0x38] sm:$0xf]
  %v30 = vld [vmem:[%s0 + $0x3c] sm:$0xf]
  %v31 = vld [vmem:[%s1] sm:$0xf]
  %v32 = vld [vmem:[%s1 + $0x4] sm:$0xf]
  %v33 = vld [vmem:[%s1 + $0x8] sm:$0xf]
  %v34 = vld [vmem:[%s1 + $0xc] sm:$0xf]
  %v35 = vld [vmem:[%s2] sm:$0x1]
  %v37 = vlaneseq
  %v38 = vshrl.u32 %v37, 7
  %v39 = vsub.s32 0, %v38
  %v40 = vrot.slane %v35, %v39
  %v58 = vunpack.c.l.b16 %v15
  %v59 = vunpack.c.l.b16 %v16
  %v60 = vunpack.c.l.b16 %v17
  %v61 = vunpack.c.l.b16 %v18
  %v62 = vunpack.c.l.b16 %v19
  %v63 = vunpack.c.l.b16 %v20
  %v64 = vunpack.c.l.b16 %v21
  %v65 = vunpack.c.l.b16 %v22
  %v66 = vunpack.c.l.b16 %v23
  %v67 = vunpack.c.l.b16 %v24
  %v68 = vunpack.c.l.b16 %v25
  %v69 = vunpack.c.l.b16 %v26
  %v70 = vunpack.c.l.b16 %v27
  %v71 = vunpack.c.l.b16 %v28
  %v72 = vunpack.c.l.b16 %v29
  %v73 = vunpack.c.l.b16 %v30
  %v74 = vpack.c.b16 %v59, %v58
  %v75 = vpack.c.b16 %v61, %v60
  %v76 = vpack.c.b16 %v63, %v62
  %v77 = vpack.c.b16 %v65, %v64
  %v78 = vpack.c.b16 %v67, %v66
  %v79 = vpack.c.b16 %v69, %v68
  %v80 = vpack.c.b16 %v71, %v70
  %v81 = vpack.c.b16 %v73, %v72
  %v86 = vunpack.c.l.b16 %v31
  %v87 = vunpack.c.l.b16 %v32
  %v88 = vunpack.c.l.b16 %v33
  %v89 = vunpack.c.l.b16 %v34
  %v90 = vpack.c.b16 %v87, %v86
  %v91 = vpack.c.b16 %v89, %v88
  %vm94 = vcmask 261120
  %v96 = vsel %vm94, %v74, 0
  %v99 = vsel %vm94, %v75, 0
  %v102 = vsel %vm94, %v76, 0
  %v105 = vsel %vm94, %v77, 0
  %v108 = vsel %vm94, %v78, 0
  %v111 = vsel %vm94, %v79, 0
  %v114 = vsel %vm94, %v80, 0
  %v117 = vsel %vm94, %v81, 0
  %119 = vmatprep.subr.bf16.mxu0 0
  %120 = vmatpush1.bf16.msra.mxu0 %v90
  %121 = vmatprep.subr.bf16.mxu0 0
  %122 = vmatpush1.bf16.msra.mxu0 %v91
  %123 = vmatprep.subr.bf16.mxu0 0
  %124 = vmatpush1.bf16.msra.mxu0 0
  %125 = vmatprep.subr.bf16.mxu0 0
  %126 = vmatpush1.bf16.msra.mxu0 0
  %127 = vmatprep.subr.bf16.mxu0 0
  %128 = vmatpush1.bf16.msra.mxu0 0
  %129 = vmatprep.subr.bf16.mxu0 0
  %130 = vmatpush1.bf16.msra.mxu0 0
  %131 = vmatprep.subr.bf16.mxu0 0
  %132 = vmatpush1.bf16.msra.mxu0 0
  %133 = vmatprep.subr.bf16.mxu0 0
  %134 = vmatpush1.bf16.msra.mxu0 0
  %135 = vmatprep.subr.bf16.mxu0 0
  %136 = vmatpush1.bf16.msra.mxu0 0
  %137 = vmatprep.subr.bf16.mxu0 0
  %138 = vmatpush1.bf16.msra.mxu0 0
  %139 = vmatprep.subr.bf16.mxu0 0
  %140 = vmatpush1.bf16.msra.mxu0 0
  %141 = vmatprep.subr.bf16.mxu0 0
  %142 = vmatpush1.bf16.msra.mxu0 0
  %143 = vmatprep.subr.bf16.mxu0 0
  %144 = vmatpush1.bf16.msra.mxu0 0
  %145 = vmatprep.subr.bf16.mxu0 0
  %146 = vmatpush1.bf16.msra.mxu0 0
  %147 = vmatprep.subr.bf16.mxu0 0
  %148 = vmatpush1.bf16.msra.mxu0 0
  %149 = vmatprep.subr.bf16.mxu0 0
  %150 = vmatpush1.bf16.msra.mxu0 0
  %151 = vmatprep.mubr.bf16.mxu0 0
  %152 = vmatmul.mubr.bf16.gmra.mrb[0].mxu0 %v96
  %v153 = vpop.f32.mrb[0].mxu0
  %v154 = vadd.f32 %v40, %v153
  %v155 = vpop.f32.mrb[0].mxu0
  %v156 = vpop.f32.mrb[0].mxu0
  %v157 = vadd.f32 %v40, %v156
  %v158 = vpop.f32.mrb[0].mxu0
  %159 = vmatprep.mubr.bf16.mxu0 0
  %160 = vmatmul.mubr.bf16.gmra.mrb[0].mxu0 %v99
  %v161 = vpop.f32.mrb[0].mxu0
  %v162 = vadd.f32 %v40, %v161
  %v163 = vpop.f32.mrb[0].mxu0
  %v164 = vpop.f32.mrb[0].mxu0
  %v165 = vadd.f32 %v40, %v164
  %v166 = vpop.f32.mrb[0].mxu0
  %167 = vmatprep.mubr.bf16.mxu0 0
  %168 = vmatmul.mubr.bf16.gmra.mrb[0].mxu0 %v102
  %v169 = vpop.f32.mrb[0].mxu0
  %v170 = vadd.f32 %v40, %v169
  %v171 = vpop.f32.mrb[0].mxu0
  %v172 = vpop.f32.mrb[0].mxu0
  %v173 = vadd.f32 %v40, %v172
  %v174 = vpop.f32.mrb[0].mxu0
  %175 = vmatprep.mubr.bf16.mxu0 0
  %176 = vmatmul.mubr.bf16.gmra.mrb[0].mxu0 %v105
  %v177 = vpop.f32.mrb[0].mxu0
  %v178 = vadd.f32 %v40, %v177
  %v179 = vpop.f32.mrb[0].mxu0
  %v180 = vpop.f32.mrb[0].mxu0
  %v181 = vadd.f32 %v40, %v180
  %v182 = vpop.f32.mrb[0].mxu0
  %183 = vmatprep.mubr.bf16.mxu0 0
  %184 = vmatmul.mubr.bf16.gmra.mrb[0].mxu0 %v108
  %v185 = vpop.f32.mrb[0].mxu0
  %v186 = vadd.f32 %v40, %v185
  %v187 = vpop.f32.mrb[0].mxu0
  %v188 = vpop.f32.mrb[0].mxu0
  %v189 = vadd.f32 %v40, %v188
  %v190 = vpop.f32.mrb[0].mxu0
  %191 = vmatprep.mubr.bf16.mxu0 0
  %192 = vmatmul.mubr.bf16.gmra.mrb[0].mxu0 %v111
  %v193 = vpop.f32.mrb[0].mxu0
  %v194 = vadd.f32 %v40, %v193
  %v195 = vpop.f32.mrb[0].mxu0
  %v196 = vpop.f32.mrb[0].mxu0
  %v197 = vadd.f32 %v40, %v196
  %v198 = vpop.f32.mrb[0].mxu0
  %199 = vmatprep.mubr.bf16.mxu0 0
  %200 = vmatmul.mubr.bf16.gmra.mrb[0].mxu0 %v114
  %v201 = vpop.f32.mrb[0].mxu0
  %v202 = vadd.f32 %v40, %v201
  %v203 = vpop.f32.mrb[0].mxu0
  %v204 = vpop.f32.mrb[0].mxu0
  %v205 = vadd.f32 %v40, %v204
  %v206 = vpop.f32.mrb[0].mxu0
  %207 = vmatprep.mubr.bf16.mxu0 0
  %208 = vmatmul.mubr.bf16.gmra.mrb[0].mxu0 %v117
  %v209 = vpop.f32.mrb[0].mxu0
  %v210 = vadd.f32 %v40, %v209
  %v211 = vpop.f32.mrb[0].mxu0
  %v212 = vpop.f32.mrb[0].mxu0
  %v213 = vadd.f32 %v40, %v212
  %v214 = vpop.f32.mrb[0].mxu0
  %215 = vdwg.mxu0
  %v216 = vpack.c.bf16 %v157, %v154
  %v217 = vpack.c.bf16 %v165, %v162
  %v218 = vpack.c.bf16 %v173, %v170
  %v219 = vpack.c.bf16 %v181, %v178
  %v220 = vpack.c.bf16 %v189, %v186
  %v221 = vpack.c.bf16 %v197, %v194
  %v222 = vpack.c.bf16 %v205, %v202
  %v223 = vpack.c.bf16 %v213, %v210
  %v232 = vunpack.c.l.b16 %v216
  %v233 = vunpack.c.h.b16 %v216
  %v234 = vunpack.c.l.b16 %v217
  %v235 = vunpack.c.h.b16 %v217
  %v236 = vunpack.c.l.b16 %v218
  %v237 = vunpack.c.h.b16 %v218
  %v238 = vunpack.c.l.b16 %v219
  %v239 = vunpack.c.h.b16 %v219
  %v240 = vunpack.c.l.b16 %v220
  %v241 = vunpack.c.h.b16 %v220
  %v242 = vunpack.c.l.b16 %v221
  %v243 = vunpack.c.h.b16 %v221
  %v244 = vunpack.c.l.b16 %v222
  %v245 = vunpack.c.h.b16 %v222
  %v246 = vunpack.c.l.b16 %v223
  %v247 = vunpack.c.h.b16 %v223
  %v248 = vpack.c.b16 %v232, %v232
  %v249 = vpack.c.b16 %v233, %v233
  %v250 = vpack.c.b16 %v234, %v234
  %v251 = vpack.c.b16 %v235, %v235
  %v252 = vpack.c.b16 %v236, %v236
  %v253 = vpack.c.b16 %v237, %v237
  %v254 = vpack.c.b16 %v238, %v238
  %v255 = vpack.c.b16 %v239, %v239
  %v256 = vpack.c.b16 %v240, %v240
  %v257 = vpack.c.b16 %v241, %v241
  %v258 = vpack.c.b16 %v242, %v242
  %v259 = vpack.c.b16 %v243, %v243
  %v260 = vpack.c.b16 %v244, %v244
  %v261 = vpack.c.b16 %v245, %v245
  %v262 = vpack.c.b16 %v246, %v246
  %v263 = vpack.c.b16 %v247, %v247
  %vm280 = vcmask 158720
  %281 = vst.msk [vmem:[%s3] sm:$0xf] %vm280, %v248
  %282 = vst.msk [vmem:[%s3 + $0x4] sm:$0xf] %vm280, %v249
  %283 = vst.msk [vmem:[%s3 + $0x8] sm:$0xf] %vm280, %v250
  %284 = vst.msk [vmem:[%s3 + $0xc] sm:$0xf] %vm280, %v251
  %285 = vst.msk [vmem:[%s3 + $0x10] sm:$0xf] %vm280, %v252
  %286 = vst.msk [vmem:[%s3 + $0x14] sm:$0xf] %vm280, %v253
  %287 = vst.msk [vmem:[%s3 + $0x18] sm:$0xf] %vm280, %v254
  %288 = vst.msk [vmem:[%s3 + $0x1c] sm:$0xf] %vm280, %v255
  %289 = vst.msk [vmem:[%s3 + $0x20] sm:$0xf] %vm280, %v256
  %290 = vst.msk [vmem:[%s3 + $0x24] sm:$0xf] %vm280, %v257
  %291 = vst.msk [vmem:[%s3 + $0x28] sm:$0xf] %vm280, %v258
  %292 = vst.msk [vmem:[%s3 + $0x2c] sm:$0xf] %vm280, %v259
  %293 = vst.msk [vmem:[%s3 + $0x30] sm:$0xf] %vm280, %v260
  %294 = vst.msk [vmem:[%s3 + $0x34] sm:$0xf] %vm280, %v261
  %295 = vst.msk [vmem:[%s3 + $0x38] sm:$0xf] %vm280, %v262
  %296 = vst.msk [vmem:[%s3 + $0x3c] sm:$0xf] %vm280, %v263
  // Predicated region
  $region14: #{fcn_forward.17} parent=0 // pred_check
    _
  $region15: #{fcn_forward.17} parent=0 // pred_check_branch
    %298 = sbr.rel (0) target = $region17
  $region16: #{fcn_forward.17} parent=0 // pred_region
    _
  $region17: #{fcn_forward.17} parent=0 // pred_fallthru
    _
  // Predicated region
  $region18: #{fcn_forward.17} parent=0 // pred_check
    _
  $region19: #{fcn_forward.17} parent=0 // pred_check_branch
    %300 = sbr.rel (0) target = $region21
  $region20: #{fcn_forward.17} parent=0 // pred_region
    _
  $region21: #{fcn_forward.17} parent=0 // pred_fallthru
    _

</llo_original>
